<compile_context>
chip_gen: v7x
topology: tpu7x:2x2x1
jax: 0.10.0
libtpu: 0.0.40
codegen_flags: <defaults>
</compile_context>

<pallas_src>
import functools

import jax
import jax.numpy as jnp
from jax.experimental import pallas as pl
from jax.experimental.pallas import tpu as pltpu

EPS = 1e-5          # nn.BatchNorm2d default eps
NEG_SLOPE = 0.2     # leaky_relu slope used in forward()
LANE = 128
SUBLANE = 8

_PARALLEL = pltpu.CompilerParams(dimension_semantics=("parallel",))


def _round_up(x, m):
    return (x + m - 1) // m * m


# ----------------------------------------------------------------------------
# Pallas kernels
# ----------------------------------------------------------------------------
def _conv_lrelu_kernel(p_ref, w_ref, o_ref):
    """im2col-GEMM tile + LeakyReLU (layer without BatchNorm), M-tiled."""
    y = jnp.dot(p_ref[...], w_ref[...], preferred_element_type=jnp.float32)
    o_ref[...] = jnp.where(y >= 0.0, y, NEG_SLOPE * y).astype(o_ref.dtype)


def _conv_bn_lrelu_kernel(p_ref, w_ref, g_ref, b_ref, o_ref, *, m_true):
    """Fused im2col-GEMM + training-mode BatchNorm + LeakyReLU.

    The whole M x C block is VMEM resident (grid=(1,)), so batch statistics are
    computed in-kernel with a mean-subtracted (two-pass) variance.
    """
    y = jnp.dot(p_ref[...], w_ref[...], preferred_element_type=jnp.float32)
    row = jax.lax.broadcasted_iota(jnp.int32, y.shape, 0)
    valid = row < m_true                       # mask padded M rows out of stats
    inv_m = 1.0 / m_true
    mean = jnp.sum(jnp.where(valid, y, 0.0), axis=0, keepdims=True) * inv_m
    yc = jnp.where(valid, y - mean, 0.0)
    var = jnp.sum(yc * yc, axis=0, keepdims=True) * inv_m      # biased variance
    scale = g_ref[...] * jax.lax.rsqrt(var + EPS)
    yn = (y - mean) * scale + b_ref[...]
    o_ref[...] = jnp.where(yn >= 0.0, yn, NEG_SLOPE * yn).astype(o_ref.dtype)


def _conv_bn_lrelu_fc_kernel(p_ref, w_ref, g_ref, b_ref, fcw_ref, grp_ref,
                             fcb_ref, o_ref, *, m_true):
    """conv4 (GEMM + BN + LeakyReLU) fused with the PyTorch NCHW-order flatten
    (`view(-1, conv_dim*4*4*4*4)`, merging 2 samples per flat row) and the
    final Linear.  fcw_ref holds the FC weight pre-rearranged to the
    (n,h,w) x c activation layout; grp_ref maps activation rows to flat rows.
    """
    y = jnp.dot(p_ref[...], w_ref[...], preferred_element_type=jnp.float32)
    row = jax.lax.broadcasted_iota(jnp.int32, y.shape, 0)
    valid = row < m_true
    inv_m = 1.0 / m_true
    mean = jnp.sum(jnp.where(valid, y, 0.0), axis=0, keepdims=True) * inv_m
    yc = jnp.where(valid, y - mean, 0.0)
    var = jnp.sum(yc * yc, axis=0, keepdims=True) * inv_m
    scale = g_ref[...] * jax.lax.rsqrt(var + EPS)
    yn = (y - mean) * scale + b_ref[...]
    a = jnp.where(yn >= 0.0, yn, NEG_SLOPE * yn)             # (M_pad, C_pad) f32
    prod = a * fcw_ref[...]                                  # FC contributions
    grouped = jnp.dot(grp_ref[...], prod,                    # (R_pad, C_pad)
                      preferred_element_type=jnp.float32)
    logit = jnp.sum(grouped, axis=1, keepdims=True) + fcb_ref[0]   # (R_pad, 1)
    col = jax.lax.broadcasted_iota(jnp.int32, o_ref.shape, 1)
    o_ref[...] = jnp.where(col == 0, logit, 0.0)


# ----------------------------------------------------------------------------
# Wrapper glue: im2col (XLA side, bf16) + fused pallas_call per layer
# ----------------------------------------------------------------------------
def _im2col(x_nhwc, kh=4, kw=4, stride=2, pad=1):
    """Patch extraction (XLA glue, bf16).  Column order: (kh, kw, cin)."""
    n, h, w, c = x_nhwc.shape
    ho = (h + 2 * pad - kh) // stride + 1
    wo = (w + 2 * pad - kw) // stride + 1
    xp = jnp.pad(x_nhwc, ((0, 0), (pad, pad), (pad, pad), (0, 0)))
    views = []
    for ih in range(kh):
        for iw in range(kw):
            views.append(
                xp[:, ih: ih + stride * ho: stride, iw: iw + stride * wo: stride, :])
    p = jnp.stack(views, axis=3).reshape(n * ho * wo, kh * kw * c)
    return p, (n, ho, wo)


def _conv_layer(x_nhwc, wm, gamma, beta, cout, *, has_bn):
    """One discriminator conv layer as a single fused pallas_call."""
    p, (n, ho, wo) = _im2col(x_nhwc)
    m, k = p.shape
    k_pad, c_pad = wm.shape
    m8 = _round_up(m, SUBLANE)

    if has_bn:
        tm = m8                               # whole layer VMEM resident
    elif m8 >= 2048 and m8 % 1024 == 0:
        tm = 1024                             # >=2 parallel steps (v7x megacore)
    else:
        tm = m8
    m_pad = _round_up(m8, tm)

    p_pad = jnp.pad(p, ((0, m_pad - m), (0, k_pad - k)))      # stays bf16

    if has_bn:
        out = pl.pallas_call(
            functools.partial(_conv_bn_lrelu_kernel, m_true=m),
            out_shape=jax.ShapeDtypeStruct((m_pad, c_pad), jnp.bfloat16),
            grid=(1,),
            in_specs=[
                pl.BlockSpec((m_pad, k_pad), lambda i: (0, 0)),
                pl.BlockSpec((k_pad, c_pad), lambda i: (0, 0)),
                pl.BlockSpec((1, c_pad), lambda i: (0, 0)),
                pl.BlockSpec((1, c_pad), lambda i: (0, 0)),
            ],
            out_specs=pl.BlockSpec((m_pad, c_pad), lambda i: (0, 0)),
            compiler_params=_PARALLEL,
        )(p_pad, wm, gamma, beta)
    else:
        out = pl.pallas_call(
            _conv_lrelu_kernel,
            out_shape=jax.ShapeDtypeStruct((m_pad, c_pad), jnp.bfloat16),
            grid=(m_pad // tm,),
            in_specs=[
                pl.BlockSpec((tm, k_pad), lambda i: (i, 0)),
                pl.BlockSpec((k_pad, c_pad), lambda i: (0, 0)),
            ],
            out_specs=pl.BlockSpec((tm, c_pad), lambda i: (i, 0)),
            compiler_params=_PARALLEL,
        )(p_pad, wm)

    return out[:m, :cout].reshape(n, ho, wo, cout)


def _conv4_fc(x_nhwc, wm, gamma, beta, fc_wm_base, fc_b):
    """conv4 + BatchNorm + LeakyReLU + NCHW flatten (view bug) + Linear."""
    p, (n, ho, wo) = _im2col(x_nhwc)
    m, k = p.shape                                           # m = n * 16
    k_pad, c_pad = wm.shape
    m_pad = _round_up(m, SUBLANE)
    r = n // 2                                               # flat rows
    r_pad = _round_up(max(r, SUBLANE), SUBLANE)

    p_pad = jnp.pad(p, ((0, m_pad - m), (0, k_pad - k)))
    fc_wm = jnp.tile(fc_wm_base, (r, 1))                     # (m, c_pad)
    fc_wm = jnp.pad(fc_wm, ((0, m_pad - m), (0, 0)))
    rows = jnp.arange(m_pad)
    grp = ((rows[None, :] // 32 == jnp.arange(r_pad)[:, None])
           & (rows[None, :] < m)).astype(jnp.float32)        # (r_pad, m_pad)

    out = pl.pallas_call(
        functools.partial(_conv_bn_lrelu_fc_kernel, m_true=m),
        out_shape=jax.ShapeDtypeStruct((r_pad, LANE), jnp.float32),
        grid=(1,),
        in_specs=[
            pl.BlockSpec((m_pad, k_pad), lambda i: (0, 0)),
            pl.BlockSpec((k_pad, c_pad), lambda i: (0, 0)),
            pl.BlockSpec((1, c_pad), lambda i: (0, 0)),
            pl.BlockSpec((1, c_pad), lambda i: (0, 0)),
            pl.BlockSpec((m_pad, c_pad), lambda i: (0, 0)),
            pl.BlockSpec((r_pad, m_pad), lambda i: (0, 0)),
            pl.BlockSpec(memory_space=pltpu.MemorySpace.SMEM),   # FC bias scalar
        ],
        out_specs=pl.BlockSpec((r_pad, LANE), lambda i: (0, 0)),
        compiler_params=_PARALLEL,
    )(p_pad, wm, gamma, beta, fc_wm, grp, fc_b)
    return out[:r, :1]                                        # logits


# ----------------------------------------------------------------------------
# Parameters (PyTorch layouts) + one-time kernel-ready preparation
# ----------------------------------------------------------------------------
def init_discriminator_params(key, conv_dim):
    ks = jax.random.split(key, 5)

    def w(k, shape):
        return (0.02 * jax.random.normal(k, shape)).astype(jnp.float32)

    return {
        "w1": w(ks[0], (conv_dim, 3, 4, 4)),
        "w2": w(ks[1], (conv_dim * 2, conv_dim, 4, 4)),
        "g2": jnp.ones((conv_dim * 2,), jnp.float32),
        "b2": jnp.zeros((conv_dim * 2,), jnp.float32),
        "w3": w(ks[2], (conv_dim * 4, conv_dim * 2, 4, 4)),
        "g3": jnp.ones((conv_dim * 4,), jnp.float32),
        "b3": jnp.zeros((conv_dim * 4,), jnp.float32),
        "w4": w(ks[3], (conv_dim * 8, conv_dim * 4, 4, 4)),
        "g4": jnp.ones((conv_dim * 8,), jnp.float32),
        "b4": jnp.zeros((conv_dim * 8,), jnp.float32),
        "fc_w": w(ks[4], (1, conv_dim * 4 * 4 * 4 * 4)),
        "fc_b": jnp.zeros((1,), jnp.float32),
    }


def _prep_conv_weight(w_oihw):
    cout, cin, kh, kw = w_oihw.shape
    k = kh * kw * cin
    k_pad = _round_up(k, LANE)
    c_pad = _round_up(cout, LANE)
    wm = jnp.transpose(w_oihw, (2, 3, 1, 0)).reshape(k, cout)   # (kh,kw,cin) order
    return jnp.pad(wm, ((0, k_pad - k), (0, c_pad - cout))).astype(jnp.bfloat16)


def _prep_affine(v, cout):
    c_pad = _round_up(cout, LANE)
    return jnp.pad(v, (0, c_pad - cout)).reshape(1, c_pad).astype(jnp.float32)


def _prep_fc_weight(fc_w, cout4):
    # fc_w: (1, 2 * cout4 * 16) -> (32, C_pad) in the (s,h,w) x c layout, where
    # s in {0,1} indexes the two samples merged per flat row by the view bug.
    c_pad = _round_up(cout4, LANE)
    wb = fc_w.reshape(2, cout4, 4, 4)            # (s, c, h, w): NCHW flat order
    wb = jnp.transpose(wb, (0, 2, 3, 1)).reshape(32, cout4)
    return jnp.pad(wb, ((0, 0), (0, c_pad - cout4))).astype(jnp.float32)


def prepare_discriminator_params(params, conv_dim):
    """One-time conversion to kernel-ready (padded / transposed / bf16) layouts."""
    return {
        "w1": _prep_conv_weight(params["w1"]),
        "w2": _prep_conv_weight(params["w2"]),
        "g2": _prep_affine(params["g2"], conv_dim * 2),
        "b2": _prep_affine(params["b2"], conv_dim * 2),
        "w3": _prep_conv_weight(params["w3"]),
        "g3": _prep_affine(params["g3"], conv_dim * 4),
        "b3": _prep_affine(params["b3"], conv_dim * 4),
        "w4": _prep_conv_weight(params["w4"]),
        "g4": _prep_affine(params["g4"], conv_dim * 8),
        "b4": _prep_affine(params["b4"], conv_dim * 8),
        "fc_wm": _prep_fc_weight(params["fc_w"], conv_dim * 8),
        "fc_b": params["fc_b"].astype(jnp.float32),
    }


# ----------------------------------------------------------------------------
# Discriminator forward
# ----------------------------------------------------------------------------
def discriminator_forward(x_nchw, prep, conv_dim):
    n = x_nchw.shape[0]
    assert n % 2 == 0, "view(-1, conv_dim*4*4*4*4) merges 2 samples per row"
    # NCHW (PyTorch) -> NHWC, bf16 so the im2col/pad glue moves half the bytes.
    x = jnp.transpose(x_nchw, (0, 2, 3, 1)).astype(jnp.bfloat16)

    x = _conv_layer(x, prep["w1"], None, None, conv_dim, has_bn=False)
    x = _conv_layer(x, prep["w2"], prep["g2"], prep["b2"], conv_dim * 2, has_bn=True)
    x = _conv_layer(x, prep["w3"], prep["g3"], prep["b3"], conv_dim * 4, has_bn=True)
    return _conv4_fc(x, prep["w4"], prep["g4"], prep["b4"],
                     prep["fc_wm"], prep["fc_b"])


# ----------------------------------------------------------------------------
if __name__ == "__main__":
    conv_dim = 8
    key = jax.random.PRNGKey(0)
    k_x, k_p = jax.random.split(key)

    # Input: batch=2, 3-channel 64x64 images (NCHW) -- the FC feature count
    # conv_dim*4*4*4*4 implies a 64x64 input (64 -> 32 -> 16 -> 8 -> 4).
    x = jax.random.normal(k_x, (2, 3, 64, 64), dtype=jnp.float32)
    params = init_discriminator_params(k_p, conv_dim)
    prep = prepare_discriminator_params(params, conv_dim)   # one-time, outside jit

    fwd = jax.jit(functools.partial(discriminator_forward, conv_dim=conv_dim))
    logits = jax.block_until_ready(fwd(x, prep))

    assert logits.shape == (1, 1), logits.shape   # 2*64*4*4 elems -> view(-1, 2048)
    assert bool(jnp.all(jnp.isfinite(logits)))
    print("KERNEL_OK")
</pallas_src>

<mosaic_0001>
module attributes {stable_mosaic.version = 11 : i64} {
  func.func @_conv_lrelu_kernel(%arg0: i32, %arg1: memref<1024x128xbf16, #tpu.memory_space<vmem>>, %arg2: memref<128x128xbf16, #tpu.memory_space<vmem>>, %arg3: memref<1024x128xbf16, #tpu.memory_space<vmem>>) attributes {dimension_semantics = [#tpu.dimension_semantics<parallel>], iteration_bounds = array<i64: 2>, scalar_prefetch = 0 : i64, scratch_operands = 0 : i64, tpu.core_type = #tpu.core_type<tc>, window_params = [{transform_indices = @transform_0, window_bounds = array<i64: 1024, 128>}, {pipeline_mode = #tpu.pipeline_mode<synchronous>, transform_indices = @transform_1, window_bounds = array<i64: 128, 128>}, {transform_indices = @transform_2, window_bounds = array<i64: 1024, 128>}]} {
    %c0 = arith.constant 0 : index
    %c0_0 = arith.constant 0 : index
    %0 = vector.load %arg1[%c0, %c0_0] : memref<1024x128xbf16, #tpu.memory_space<vmem>>, vector<1024x128xbf16>
    %c0_1 = arith.constant 0 : index
    %c0_2 = arith.constant 0 : index
    %1 = vector.load %arg2[%c0_1, %c0_2] : memref<128x128xbf16, #tpu.memory_space<vmem>>, vector<128x128xbf16>
    %cst = arith.constant dense<0.000000e+00> : vector<1024x128xf32>
    %2 = tpu.matmul %0, %1, %cst {dimension_numbers = #tpu.dot_dimension_numbers<[1], [0], [0], [1], [0, 0, 1, 1], [], []>} : vector<1024x128xbf16>, vector<128x128xbf16>, vector<1024x128xf32> -> vector<1024x128xf32>
    %cst_3 = arith.constant 0.000000e+00 : f32
    %3 = vector.broadcast %cst_3 : f32 to vector<1024x128xf32>
    %4 = arith.cmpf oge, %2, %3 : vector<1024x128xf32>
    %cst_4 = arith.constant 2.000000e-01 : f32
    %5 = vector.broadcast %cst_4 : f32 to vector<1024x128xf32>
    %6 = arith.mulf %5, %2 : vector<1024x128xf32>
    %7 = arith.select %4, %2, %6 : vector<1024x128xi1>, vector<1024x128xf32>
    %8 = arith.truncf %7 : vector<1024x128xf32> to vector<1024x128xbf16>
    %c0_5 = arith.constant 0 : index
    %c0_6 = arith.constant 0 : index
    %9 = vector.load %arg3[%c0_5, %c0_6] : memref<1024x128xbf16, #tpu.memory_space<vmem>>, vector<1024x128xbf16>
    tpu.vector_store %arg3[%c0_5, %c0_6], %8 {strides = array<i32>} : memref<1024x128xbf16, #tpu.memory_space<vmem>>, vector<1024x128xbf16>,
    return
  }
  func.func @transform_0(%arg0: i32) -> (i32, i32) {
    %c0_i32 = arith.constant 0 : i32
    %c0_i32_0 = arith.constant 0 : i32
    return %arg0, %c0_i32 : i32, i32
  }
  func.func @transform_1(%arg0: i32) -> (i32, i32) {
    %c0_i32 = arith.constant 0 : i32
    %c0_i32_0 = arith.constant 0 : i32
    %c0_i32_1 = arith.constant 0 : i32
    return %c0_i32, %c0_i32_0 : i32, i32
  }
  func.func @transform_2(%arg0: i32) -> (i32, i32) {
    %c0_i32 = arith.constant 0 : i32
    %c0_i32_0 = arith.constant 0 : i32
    return %arg0, %c0_i32 : i32, i32
  }
}

module attributes {stable_mosaic.version = 11 : i64} {
  func.func @_conv_bn_lrelu_kernel(%arg0: i32, %arg1: memref<512x128xbf16, #tpu.memory_space<vmem>>, %arg2: memref<128x128xbf16, #tpu.memory_space<vmem>>, %arg3: memref<1x128xf32, #tpu.memory_space<vmem>>, %arg4: memref<1x128xf32, #tpu.memory_space<vmem>>, %arg5: memref<512x128xbf16, #tpu.memory_space<vmem>>) attributes {dimension_semantics = [#tpu.dimension_semantics<parallel>], iteration_bounds = array<i64: 1>, scalar_prefetch = 0 : i64, scratch_operands = 0 : i64, tpu.core_type = #tpu.core_type<tc>, window_params = [{pipeline_mode = #tpu.pipeline_mode<synchronous>, transform_indices = @transform_0, window_bounds = array<i64: 512, 128>}, {pipeline_mode = #tpu.pipeline_mode<synchronous>, transform_indices = @transform_1, window_bounds = array<i64: 128, 128>}, {pipeline_mode = #tpu.pipeline_mode<synchronous>, transform_indices = @transform_2, window_bounds = array<i64: 1, 128>}, {pipeline_mode = #tpu.pipeline_mode<synchronous>, transform_indices = @transform_3, window_bounds = array<i64: 1, 128>}, {pipeline_mode = #tpu.pipeline_mode<synchronous>, transform_indices = @transform_4, window_bounds = array<i64: 512, 128>}]} {
    %c0 = arith.constant 0 : index
    %c0_0 = arith.constant 0 : index
    %0 = vector.load %arg1[%c0, %c0_0] : memref<512x128xbf16, #tpu.memory_space<vmem>>, vector<512x128xbf16>
    %c0_1 = arith.constant 0 : index
    %c0_2 = arith.constant 0 : index
    %1 = vector.load %arg2[%c0_1, %c0_2] : memref<128x128xbf16, #tpu.memory_space<vmem>>, vector<128x128xbf16>
    %cst = arith.constant dense<0.000000e+00> : vector<512x128xf32>
    %2 = tpu.matmul %0, %1, %cst {dimension_numbers = #tpu.dot_dimension_numbers<[1], [0], [0], [1], [0, 0, 1, 1], [], []>} : vector<512x128xbf16>, vector<128x128xbf16>, vector<512x128xf32> -> vector<512x128xf32>
    %3 = tpu.iota {dimensions = array<i32: 0>} : vector<512x128xi32>
    %c512_i32 = arith.constant 512 : i32
    %4 = vector.broadcast %c512_i32 : i32 to vector<512x128xi32>
    %5 = arith.cmpi slt, %3, %4 : vector<512x128xi32>
    %cst_3 = arith.constant 0.000000e+00 : f32
    %6 = vector.broadcast %cst_3 : f32 to vector<512x128xf32>
    %7 = arith.select %5, %2, %6 : vector<512x128xi1>, vector<512x128xf32>
    %cst_4 = arith.constant dense<0.000000e+00> : vector<128xf32>
    %8 = vector.multi_reduction <add>, %7, %cst_4 [0] : vector<512x128xf32> to vector<128xf32>
    %9 = vector.shape_cast %8 : vector<128xf32> to vector<1x128xf32>
    %cst_5 = arith.constant 0.001953125 : f32
    %10 = vector.broadcast %cst_5 : f32 to vector<1x128xf32>
    %11 = arith.mulf %9, %10 : vector<1x128xf32>
    %12 = vector.broadcast %11 : vector<1x128xf32> to vector<512x128xf32>
    %13 = arith.subf %2, %12 : vector<512x128xf32>
    %cst_6 = arith.constant 0.000000e+00 : f32
    %14 = vector.broadcast %cst_6 : f32 to vector<512x128xf32>
    %15 = arith.select %5, %13, %14 : vector<512x128xi1>, vector<512x128xf32>
    %16 = arith.mulf %15, %15 : vector<512x128xf32>
    %cst_7 = arith.constant dense<0.000000e+00> : vector<128xf32>
    %17 = vector.multi_reduction <add>, %16, %cst_7 [0] : vector<512x128xf32> to vector<128xf32>
    %18 = vector.shape_cast %17 : vector<128xf32> to vector<1x128xf32>
    %cst_8 = arith.constant 0.001953125 : f32
    %19 = vector.broadcast %cst_8 : f32 to vector<1x128xf32>
    %20 = arith.mulf %18, %19 : vector<1x128xf32>
    %c0_9 = arith.constant 0 : index
    %c0_10 = arith.constant 0 : index
    %21 = vector.load %arg3[%c0_9, %c0_10] : memref<1x128xf32, #tpu.memory_space<vmem>>, vector<1x128xf32>
    %cst_11 = arith.constant 9.99999974E-6 : f32
    %22 = vector.broadcast %cst_11 : f32 to vector<1x128xf32>
    %23 = arith.addf %20, %22 : vector<1x128xf32>
    %24 = math.rsqrt %23 : vector<1x128xf32>
    %25 = arith.mulf %21, %24 : vector<1x128xf32>
    %26 = vector.broadcast %11 : vector<1x128xf32> to vector<512x128xf32>
    %27 = arith.subf %2, %26 : vector<512x128xf32>
    %28 = vector.broadcast %25 : vector<1x128xf32> to vector<512x128xf32>
    %29 = arith.mulf %27, %28 : vector<512x128xf32>
    %c0_12 = arith.constant 0 : index
    %c0_13 = arith.constant 0 : index
    %30 = vector.load %arg4[%c0_12, %c0_13] : memref<1x128xf32, #tpu.memory_space<vmem>>, vector<1x128xf32>
    %31 = vector.broadcast %30 : vector<1x128xf32> to vector<512x128xf32>
    %32 = arith.addf %29, %31 : vector<512x128xf32>
    %cst_14 = arith.constant 0.000000e+00 : f32
    %33 = vector.broadcast %cst_14 : f32 to vector<512x128xf32>
    %34 = arith.cmpf oge, %32, %33 : vector<512x128xf32>
    %cst_15 = arith.constant 2.000000e-01 : f32
    %35 = vector.broadcast %cst_15 : f32 to vector<512x128xf32>
    %36 = arith.mulf %35, %32 : vector<512x128xf32>
    %37 = arith.select %34, %32, %36 : vector<512x128xi1>, vector<512x128xf32>
    %38 = arith.truncf %37 : vector<512x128xf32> to vector<512x128xbf16>
    %c0_16 = arith.constant 0 : index
    %c0_17 = arith.constant 0 : index
    %39 = vector.load %arg5[%c0_16, %c0_17] : memref<512x128xbf16, #tpu.memory_space<vmem>>, vector<512x128xbf16>
    tpu.vector_store %arg5[%c0_16, %c0_17], %38 {strides = array<i32>} : memref<512x128xbf16, #tpu.memory_space<vmem>>, vector<512x128xbf16>,
    return
  }
  func.func @transform_0(%arg0: i32) -> (i32, i32) {
    %c0_i32 = arith.constant 0 : i32
    %c0_i32_0 = arith.constant 0 : i32
    %c0_i32_1 = arith.constant 0 : i32
    return %c0_i32, %c0_i32_0 : i32, i32
  }
  func.func @transform_1(%arg0: i32) -> (i32, i32) {
    %c0_i32 = arith.constant 0 : i32
    %c0_i32_0 = arith.constant 0 : i32
    %c0_i32_1 = arith.constant 0 : i32
    return %c0_i32, %c0_i32_0 : i32, i32
  }
  func.func @transform_2(%arg0: i32) -> (i32, i32) {
    %c0_i32 = arith.constant 0 : i32
    %c0_i32_0 = arith.constant 0 : i32
    %c0_i32_1 = arith.constant 0 : i32
    return %c0_i32, %c0_i32_0 : i32, i32
  }
  func.func @transform_3(%arg0: i32) -> (i32, i32) {
    %c0_i32 = arith.constant 0 : i32
    %c0_i32_0 = arith.constant 0 : i32
    %c0_i32_1 = arith.constant 0 : i32
    return %c0_i32, %c0_i32_0 : i32, i32
  }
  func.func @transform_4(%arg0: i32) -> (i32, i32) {
    %c0_i32 = arith.constant 0 : i32
    %c0_i32_0 = arith.constant 0 : i32
    %c0_i32_1 = arith.constant 0 : i32
    return %c0_i32, %c0_i32_0 : i32, i32
  }
}

module attributes {stable_mosaic.version = 11 : i64} {
  func.func @_conv_bn_lrelu_kernel(%arg0: i32, %arg1: memref<128x256xbf16, #tpu.memory_space<vmem>>, %arg2: memref<256x128xbf16, #tpu.memory_space<vmem>>, %arg3: memref<1x128xf32, #tpu.memory_space<vmem>>, %arg4: memref<1x128xf32, #tpu.memory_space<vmem>>, %arg5: memref<128x128xbf16, #tpu.memory_space<vmem>>) attributes {dimension_semantics = [#tpu.dimension_semantics<parallel>], iteration_bounds = array<i64: 1>, scalar_prefetch = 0 : i64, scratch_operands = 0 : i64, tpu.core_type = #tpu.core_type<tc>, window_params = [{pipeline_mode = #tpu.pipeline_mode<synchronous>, transform_indices = @transform_0, window_bounds = array<i64: 128, 256>}, {pipeline_mode = #tpu.pipeline_mode<synchronous>, transform_indices = @transform_1, window_bounds = array<i64: 256, 128>}, {pipeline_mode = #tpu.pipeline_mode<synchronous>, transform_indices = @transform_2, window_bounds = array<i64: 1, 128>}, {pipeline_mode = #tpu.pipeline_mode<synchronous>, transform_indices = @transform_3, window_bounds = array<i64: 1, 128>}, {pipeline_mode = #tpu.pipeline_mode<synchronous>, transform_indices = @transform_4, window_bounds = array<i64: 128, 128>}]} {
    %c0 = arith.constant 0 : index
    %c0_0 = arith.constant 0 : index
    %0 = vector.load %arg1[%c0, %c0_0] : memref<128x256xbf16, #tpu.memory_space<vmem>>, vector<128x256xbf16>
    %c0_1 = arith.constant 0 : index
    %c0_2 = arith.constant 0 : index
    %1 = vector.load %arg2[%c0_1, %c0_2] : memref<256x128xbf16, #tpu.memory_space<vmem>>, vector<256x128xbf16>
    %cst = arith.constant dense<0.000000e+00> : vector<128x128xf32>
    %2 = tpu.matmul %0, %1, %cst {dimension_numbers = #tpu.dot_dimension_numbers<[1], [0], [0], [1], [0, 0, 1, 1], [], []>} : vector<128x256xbf16>, vector<256x128xbf16>, vector<128x128xf32> -> vector<128x128xf32>
    %3 = tpu.iota {dimensions = array<i32: 0>} : vector<128x128xi32>
    %c128_i32 = arith.constant 128 : i32
    %4 = vector.broadcast %c128_i32 : i32 to vector<128x128xi32>
    %5 = arith.cmpi slt, %3, %4 : vector<128x128xi32>
    %cst_3 = arith.constant 0.000000e+00 : f32
    %6 = vector.broadcast %cst_3 : f32 to vector<128x128xf32>
    %7 = arith.select %5, %2, %6 : vector<128x128xi1>, vector<128x128xf32>
    %cst_4 = arith.constant dense<0.000000e+00> : vector<128xf32>
    %8 = vector.multi_reduction <add>, %7, %cst_4 [0] : vector<128x128xf32> to vector<128xf32>
    %9 = vector.shape_cast %8 : vector<128xf32> to vector<1x128xf32>
    %cst_5 = arith.constant 7.812500e-03 : f32
    %10 = vector.broadcast %cst_5 : f32 to vector<1x128xf32>
    %11 = arith.mulf %9, %10 : vector<1x128xf32>
    %12 = vector.broadcast %11 : vector<1x128xf32> to vector<128x128xf32>
    %13 = arith.subf %2, %12 : vector<128x128xf32>
    %cst_6 = arith.constant 0.000000e+00 : f32
    %14 = vector.broadcast %cst_6 : f32 to vector<128x128xf32>
    %15 = arith.select %5, %13, %14 : vector<128x128xi1>, vector<128x128xf32>
    %16 = arith.mulf %15, %15 : vector<128x128xf32>
    %cst_7 = arith.constant dense<0.000000e+00> : vector<128xf32>
    %17 = vector.multi_reduction <add>, %16, %cst_7 [0] : vector<128x128xf32> to vector<128xf32>
    %18 = vector.shape_cast %17 : vector<128xf32> to vector<1x128xf32>
    %cst_8 = arith.constant 7.812500e-03 : f32
    %19 = vector.broadcast %cst_8 : f32 to vector<1x128xf32>
    %20 = arith.mulf %18, %19 : vector<1x128xf32>
    %c0_9 = arith.constant 0 : index
    %c0_10 = arith.constant 0 : index
    %21 = vector.load %arg3[%c0_9, %c0_10] : memref<1x128xf32, #tpu.memory_space<vmem>>, vector<1x128xf32>
    %cst_11 = arith.constant 9.99999974E-6 : f32
    %22 = vector.broadcast %cst_11 : f32 to vector<1x128xf32>
    %23 = arith.addf %20, %22 : vector<1x128xf32>
    %24 = math.rsqrt %23 : vector<1x128xf32>
    %25 = arith.mulf %21, %24 : vector<1x128xf32>
    %26 = vector.broadcast %11 : vector<1x128xf32> to vector<128x128xf32>
    %27 = arith.subf %2, %26 : vector<128x128xf32>
    %28 = vector.broadcast %25 : vector<1x128xf32> to vector<128x128xf32>
    %29 = arith.mulf %27, %28 : vector<128x128xf32>
    %c0_12 = arith.constant 0 : index
    %c0_13 = arith.constant 0 : index
    %30 = vector.load %arg4[%c0_12, %c0_13] : memref<1x128xf32, #tpu.memory_space<vmem>>, vector<1x128xf32>
    %31 = vector.broadcast %30 : vector<1x128xf32> to vector<128x128xf32>
    %32 = arith.addf %29, %31 : vector<128x128xf32>
    %cst_14 = arith.constant 0.000000e+00 : f32
    %33 = vector.broadcast %cst_14 : f32 to vector<128x128xf32>
    %34 = arith.cmpf oge, %32, %33 : vector<128x128xf32>
    %cst_15 = arith.constant 2.000000e-01 : f32
    %35 = vector.broadcast %cst_15 : f32 to vector<128x128xf32>
    %36 = arith.mulf %35, %32 : vector<128x128xf32>
    %37 = arith.select %34, %32, %36 : vector<128x128xi1>, vector<128x128xf32>
    %38 = arith.truncf %37 : vector<128x128xf32> to vector<128x128xbf16>
    %c0_16 = arith.constant 0 : index
    %c0_17 = arith.constant 0 : index
    %39 = vector.load %arg5[%c0_16, %c0_17] : memref<128x128xbf16, #tpu.memory_space<vmem>>, vector<128x128xbf16>
    tpu.vector_store %arg5[%c0_16, %c0_17], %38 {strides = array<i32>} : memref<128x128xbf16, #tpu.memory_space<vmem>>, vector<128x128xbf16>,
    return
  }
  func.func @transform_0(%arg0: i32) -> (i32, i32) {
    %c0_i32 = arith.constant 0 : i32
    %c0_i32_0 = arith.constant 0 : i32
    %c0_i32_1 = arith.constant 0 : i32
    return %c0_i32, %c0_i32_0 : i32, i32
  }
  func.func @transform_1(%arg0: i32) -> (i32, i32) {
    %c0_i32 = arith.constant 0 : i32
    %c0_i32_0 = arith.constant 0 : i32
    %c0_i32_1 = arith.constant 0 : i32
    return %c0_i32, %c0_i32_0 : i32, i32
  }
  func.func @transform_2(%arg0: i32) -> (i32, i32) {
    %c0_i32 = arith.constant 0 : i32
    %c0_i32_0 = arith.constant 0 : i32
    %c0_i32_1 = arith.constant 0 : i32
    return %c0_i32, %c0_i32_0 : i32, i32
  }
  func.func @transform_3(%arg0: i32) -> (i32, i32) {
    %c0_i32 = arith.constant 0 : i32
    %c0_i32_0 = arith.constant 0 : i32
    %c0_i32_1 = arith.constant 0 : i32
    return %c0_i32, %c0_i32_0 : i32, i32
  }
  func.func @transform_4(%arg0: i32) -> (i32, i32) {
    %c0_i32 = arith.constant 0 : i32
    %c0_i32_0 = arith.constant 0 : i32
    %c0_i32_1 = arith.constant 0 : i32
    return %c0_i32, %c0_i32_0 : i32, i32
  }
}

module attributes {stable_mosaic.version = 11 : i64} {
  func.func @_conv_bn_lrelu_fc_kernel(%arg0: i32, %arg1: memref<32x512xbf16, #tpu.memory_space<vmem>>, %arg2: memref<512x128xbf16, #tpu.memory_space<vmem>>, %arg3: memref<1x128xf32, #tpu.memory_space<vmem>>, %arg4: memref<1x128xf32, #tpu.memory_space<vmem>>, %arg5: memref<32x128xf32, #tpu.memory_space<vmem>>, %arg6: memref<8x32xf32, #tpu.memory_space<vmem>>, %arg7: memref<1xf32, #tpu.memory_space<smem>>, %arg8: memref<8x128xf32, #tpu.memory_space<vmem>>) attributes {dimension_semantics = [#tpu.dimension_semantics<parallel>], iteration_bounds = array<i64: 1>, scalar_prefetch = 0 : i64, scratch_operands = 0 : i64, tpu.core_type = #tpu.core_type<tc>, window_params = [{pipeline_mode = #tpu.pipeline_mode<synchronous>, transform_indices = @transform_0, window_bounds = array<i64: 32, 512>}, {pipeline_mode = #tpu.pipeline_mode<synchronous>, transform_indices = @transform_1, window_bounds = array<i64: 512, 128>}, {pipeline_mode = #tpu.pipeline_mode<synchronous>, transform_indices = @transform_2, window_bounds = array<i64: 1, 128>}, {pipeline_mode = #tpu.pipeline_mode<synchronous>, transform_indices = @transform_3, window_bounds = array<i64: 1, 128>}, {pipeline_mode = #tpu.pipeline_mode<synchronous>, transform_indices = @transform_4, window_bounds = array<i64: 32, 128>}, {pipeline_mode = #tpu.pipeline_mode<synchronous>, transform_indices = @transform_5, window_bounds = array<i64: 8, 32>}, {transform_indices = @transform_6, window_bounds = array<i64: 1>}, {pipeline_mode = #tpu.pipeline_mode<synchronous>, transform_indices = @transform_7, window_bounds = array<i64: 8, 128>}]} {
    %c0 = arith.constant 0 : index
    %c0_0 = arith.constant 0 : index
    %0 = vector.load %arg1[%c0, %c0_0] : memref<32x512xbf16, #tpu.memory_space<vmem>>, vector<32x512xbf16>
    %c0_1 = arith.constant 0 : index
    %c0_2 = arith.constant 0 : index
    %1 = vector.load %arg2[%c0_1, %c0_2] : memref<512x128xbf16, #tpu.memory_space<vmem>>, vector<512x128xbf16>
    %cst = arith.constant dense<0.000000e+00> : vector<32x128xf32>
    %2 = tpu.matmul %0, %1, %cst {dimension_numbers = #tpu.dot_dimension_numbers<[1], [0], [0], [1], [0, 0, 1, 1], [], []>} : vector<32x512xbf16>, vector<512x128xbf16>, vector<32x128xf32> -> vector<32x128xf32>
    %3 = tpu.iota {dimensions = array<i32: 0>} : vector<32x128xi32>
    %c32_i32 = arith.constant 32 : i32
    %4 = vector.broadcast %c32_i32 : i32 to vector<32x128xi32>
    %5 = arith.cmpi slt, %3, %4 : vector<32x128xi32>
    %cst_3 = arith.constant 0.000000e+00 : f32
    %6 = vector.broadcast %cst_3 : f32 to vector<32x128xf32>
    %7 = arith.select %5, %2, %6 : vector<32x128xi1>, vector<32x128xf32>
    %cst_4 = arith.constant dense<0.000000e+00> : vector<128xf32>
    %8 = vector.multi_reduction <add>, %7, %cst_4 [0] : vector<32x128xf32> to vector<128xf32>
    %9 = vector.shape_cast %8 : vector<128xf32> to vector<1x128xf32>
    %cst_5 = arith.constant 3.125000e-02 : f32
    %10 = vector.broadcast %cst_5 : f32 to vector<1x128xf32>
    %11 = arith.mulf %9, %10 : vector<1x128xf32>
    %12 = vector.broadcast %11 : vector<1x128xf32> to vector<32x128xf32>
    %13 = arith.subf %2, %12 : vector<32x128xf32>
    %cst_6 = arith.constant 0.000000e+00 : f32
    %14 = vector.broadcast %cst_6 : f32 to vector<32x128xf32>
    %15 = arith.select %5, %13, %14 : vector<32x128xi1>, vector<32x128xf32>
    %16 = arith.mulf %15, %15 : vector<32x128xf32>
    %cst_7 = arith.constant dense<0.000000e+00> : vector<128xf32>
    %17 = vector.multi_reduction <add>, %16, %cst_7 [0] : vector<32x128xf32> to vector<128xf32>
    %18 = vector.shape_cast %17 : vector<128xf32> to vector<1x128xf32>
    %cst_8 = arith.constant 3.125000e-02 : f32
    %19 = vector.broadcast %cst_8 : f32 to vector<1x128xf32>
    %20 = arith.mulf %18, %19 : vector<1x128xf32>
    %c0_9 = arith.constant 0 : index
    %c0_10 = arith.constant 0 : index
    %21 = vector.load %arg3[%c0_9, %c0_10] : memref<1x128xf32, #tpu.memory_space<vmem>>, vector<1x128xf32>
    %cst_11 = arith.constant 9.99999974E-6 : f32
    %22 = vector.broadcast %cst_11 : f32 to vector<1x128xf32>
    %23 = arith.addf %20, %22 : vector<1x128xf32>
    %24 = math.rsqrt %23 : vector<1x128xf32>
    %25 = arith.mulf %21, %24 : vector<1x128xf32>
    %26 = vector.broadcast %11 : vector<1x128xf32> to vector<32x128xf32>
    %27 = arith.subf %2, %26 : vector<32x128xf32>
    %28 = vector.broadcast %25 : vector<1x128xf32> to vector<32x128xf32>
    %29 = arith.mulf %27, %28 : vector<32x128xf32>
    %c0_12 = arith.constant 0 : index
    %c0_13 = arith.constant 0 : index
    %30 = vector.load %arg4[%c0_12, %c0_13] : memref<1x128xf32, #tpu.memory_space<vmem>>, vector<1x128xf32>
    %31 = vector.broadcast %30 : vector<1x128xf32> to vector<32x128xf32>
    %32 = arith.addf %29, %31 : vector<32x128xf32>
    %cst_14 = arith.constant 0.000000e+00 : f32
    %33 = vector.broadcast %cst_14 : f32 to vector<32x128xf32>
    %34 = arith.cmpf oge, %32, %33 : vector<32x128xf32>
    %cst_15 = arith.constant 2.000000e-01 : f32
    %35 = vector.broadcast %cst_15 : f32 to vector<32x128xf32>
    %36 = arith.mulf %35, %32 : vector<32x128xf32>
    %37 = arith.select %34, %32, %36 : vector<32x128xi1>, vector<32x128xf32>
    %c0_16 = arith.constant 0 : index
    %c0_17 = arith.constant 0 : index
    %38 = vector.load %arg5[%c0_16, %c0_17] : memref<32x128xf32, #tpu.memory_space<vmem>>, vector<32x128xf32>
    %39 = arith.mulf %37, %38 : vector<32x128xf32>
    %c0_18 = arith.constant 0 : index
    %c0_19 = arith.constant 0 : index
    %40 = vector.load %arg6[%c0_18, %c0_19] : memref<8x32xf32, #tpu.memory_space<vmem>>, vector<8x32xf32>
    %cst_20 = arith.constant dense<0.000000e+00> : vector<8x128xf32>
    %41 = tpu.matmul %40, %39, %cst_20 {dimension_numbers = #tpu.dot_dimension_numbers<[1], [0], [0], [1], [0, 0, 1, 1], [], []>} : vector<8x32xf32>, vector<32x128xf32>, vector<8x128xf32> -> vector<8x128xf32>
    %cst_21 = arith.constant dense<0.000000e+00> : vector<8xf32>
    %42 = vector.multi_reduction <add>, %41, %cst_21 [1] : vector<8x128xf32> to vector<8xf32>
    %43 = vector.shape_cast %42 : vector<8xf32> to vector<8x1xf32>
    %c0_22 = arith.constant 0 : index
    %44 = memref.load %arg7[%c0_22] : memref<1xf32, #tpu.memory_space<smem>>
    %45 = vector.broadcast %44 : f32 to vector<8x1xf32>
    %46 = arith.addf %43, %45 : vector<8x1xf32>
    %47 = tpu.iota {dimensions = array<i32: 1>} : vector<8x128xi32>
    %c0_i32 = arith.constant 0 : i32
    %48 = vector.broadcast %c0_i32 : i32 to vector<8x128xi32>
    %49 = arith.cmpi eq, %47, %48 : vector<8x128xi32>
    %cst_23 = arith.constant 0.000000e+00 : f32
    %50 = vector.shape_cast %46 : vector<8x1xf32> to vector<8x1xf32>
    %51 = vector.broadcast %50 : vector<8x1xf32> to vector<8x128xf32>
    %52 = vector.broadcast %cst_23 : f32 to vector<8x128xf32>
    %53 = arith.select %49, %51, %52 : vector<8x128xi1>, vector<8x128xf32>
    %c0_24 = arith.constant 0 : index
    %c0_25 = arith.constant 0 : index
    %54 = vector.load %arg8[%c0_24, %c0_25] : memref<8x128xf32, #tpu.memory_space<vmem>>, vector<8x128xf32>
    tpu.vector_store %arg8[%c0_24, %c0_25], %53 {strides = array<i32>} : memref<8x128xf32, #tpu.memory_space<vmem>>, vector<8x128xf32>,
    return
  }
  func.func @transform_0(%arg0: i32) -> (i32, i32) {
    %c0_i32 = arith.constant 0 : i32
    %c0_i32_0 = arith.constant 0 : i32
    %c0_i32_1 = arith.constant 0 : i32
    return %c0_i32, %c0_i32_0 : i32, i32
  }
  func.func @transform_1(%arg0: i32) -> (i32, i32) {
    %c0_i32 = arith.constant 0 : i32
    %c0_i32_0 = arith.constant 0 : i32
    %c0_i32_1 = arith.constant 0 : i32
    return %c0_i32, %c0_i32_0 : i32, i32
  }
  func.func @transform_2(%arg0: i32) -> (i32, i32) {
    %c0_i32 = arith.constant 0 : i32
    %c0_i32_0 = arith.constant 0 : i32
    %c0_i32_1 = arith.constant 0 : i32
    return %c0_i32, %c0_i32_0 : i32, i32
  }
  func.func @transform_3(%arg0: i32) -> (i32, i32) {
    %c0_i32 = arith.constant 0 : i32
    %c0_i32_0 = arith.constant 0 : i32
    %c0_i32_1 = arith.constant 0 : i32
    return %c0_i32, %c0_i32_0 : i32, i32
  }
  func.func @transform_4(%arg0: i32) -> (i32, i32) {
    %c0_i32 = arith.constant 0 : i32
    %c0_i32_0 = arith.constant 0 : i32
    %c0_i32_1 = arith.constant 0 : i32
    return %c0_i32, %c0_i32_0 : i32, i32
  }
  func.func @transform_5(%arg0: i32) -> (i32, i32) {
    %c0_i32 = arith.constant 0 : i32
    %c0_i32_0 = arith.constant 0 : i32
    %c0_i32_1 = arith.constant 0 : i32
    return %c0_i32, %c0_i32_0 : i32, i32
  }
  func.func @transform_6(%arg0: i32) -> i32 {
    %c0_i32 = arith.constant 0 : i32
    %c0_i32_0 = arith.constant 0 : i32
    return %c0_i32 : i32
  }
  func.func @transform_7(%arg0: i32) -> (i32, i32) {
    %c0_i32 = arith.constant 0 : i32
    %c0_i32_0 = arith.constant 0 : i32
    %c0_i32_1 = arith.constant 0 : i32
    return %c0_i32, %c0_i32_0 : i32, i32
  }
}

</mosaic_0001>

<llo_original>
// kernel: discriminator_forward.4
$region0: #{discriminator_forward.4}
  #allocation0 [shape = 'u32[]', space=smem, size = 0x4, offset = 0x4, fixed_abs, tag = 'smem constant byte address 0x4 - core index']
  #allocation1 [shape = 'u32[144,128]{1,0:T(1,128)}', space=vmem, size = 0x12000, scoped, tag = 'internal scratch']
  %s0 = inlined_call_operand.vmem [shape: bf16[2048,128], index: 0, kind: input, shape index: {}]
  %s1 = inlined_call_operand.vmem [shape: bf16[128,128], index: 1, kind: input, shape index: {}]
  %s2 = inlined_call_operand.vmem [shape: bf16[2048,128], index: 2, kind: output, shape index: {}]
  %s3 = sld [smem:[#allocation0]]
  $region41: #{discriminator_forward.4} parent=0
    _
  %s5 = ssub.s32 1, %s3
  %s6 = scalar_select 0, %s5, %s3
  loop: start=0, step=1, limit=4
  $region2: #{discriminator_forward.4} parent=0 // loop_pre_header
    _
  $region3: #{discriminator_forward.4} parent=0 // loop_header
    %s8 = sphi 0, %s12
    %p9 = scmp.ge.s32.totalorder %s8, 4
    %s18 = sphi 0, %s20
    %s21 = sphi 0, %s18
    %s22 = sphi 0, %s21
    %s38 = sphi 0, %s22
    %s42 = sphi 0, %s42
    %s44 = sphi 0, %s42
    %s45 = sphi 0, %s44
    %s59 = sphi 0, %s45
    %s65 = sphi 0, %s67
    %s68 = sphi 0, %s65
    %s69 = sphi 0, %s68
    %s85 = sphi 0, %s69
  $region4: #{discriminator_forward.4} parent=0 // loop_header_branch
    %11 = sbr.rel (%p9) target = $region8
  $region5: #{discriminator_forward.4} parent=0 // loop_body
    %s13 = ssub.s32 %s8, 1
    %s14 = ssub.s32 %s8, 2
    %s15 = sadd.s32 %s8, 1
    %s16 = ssub.s32 %s8, %s15
    %p17 = scmp.eq.s32.totalorder %s16, 0
    %s19 = sadd.s32 %s18, 1
    %s20 = scalar_select %p17, %s18, %s19
    %p23 = pneg %p17
    %p24 = scmp.eq.s32.totalorder %s8, 1
    %p25 = por %p23, %p24
    %p26 = scmp.ne.s32.totalorder %s18, %s21
    %p27 = scmp.eq.s32.totalorder %s8, 0
    %p28 = por %p26, %p27
    %p29 = scmp.ne.s32.totalorder %s18, %s21
    %p30 = scmp.eq.s32.totalorder %s13, 1
    %p31 = por %p29, %p30
    %p32 = scmp.ne.s32.totalorder %s21, %s22
    %p33 = scmp.eq.s32.totalorder %s13, 0
    %p34 = por %p32, %p33
    %p35 = scmp.ne.s32.totalorder %s21, %s22
    %p36 = scmp.eq.s32.totalorder %s14, 1
    %p37 = por %p35, %p36
    %p39 = scmp.ne.s32.totalorder %s22, %s38
    %p40 = scmp.eq.s32.totalorder %s14, 0
    %p41 = por %p39, %p40
    %s43 = sadd.s32 %s42, 1
    %p46 = scmp.eq.s32.totalorder %s8, 1
    %p47 = scmp.ne.s32.totalorder %s42, %s44
    %p48 = scmp.eq.s32.totalorder %s8, 0
    %p49 = por %p47, %p48
    %p50 = scmp.ne.s32.totalorder %s42, %s44
    %p51 = scmp.eq.s32.totalorder %s13, 1
    %p52 = por %p50, %p51
    %p53 = scmp.ne.s32.totalorder %s44, %s45
    %p54 = scmp.eq.s32.totalorder %s13, 0
    %p55 = por %p53, %p54
    %p56 = scmp.ne.s32.totalorder %s44, %s45
    %p57 = scmp.eq.s32.totalorder %s14, 1
    %p58 = por %p56, %p57
    %p60 = scmp.ne.s32.totalorder %s45, %s59
    %p61 = scmp.eq.s32.totalorder %s14, 0
    %p62 = por %p60, %p61
    %s63 = ssub.s32 %s8, %s15
    %p64 = scmp.eq.s32.totalorder %s63, 0
    %s66 = sadd.s32 %s65, 1
    %s67 = scalar_select %p64, %s65, %s66
    %p70 = pneg %p64
    %p71 = scmp.eq.s32.totalorder %s8, 1
    %p72 = por %p70, %p71
    %p73 = scmp.ne.s32.totalorder %s65, %s68
    %p74 = scmp.eq.s32.totalorder %s8, 0
    %p75 = por %p73, %p74
    %p76 = scmp.ne.s32.totalorder %s65, %s68
    %p77 = scmp.eq.s32.totalorder %s13, 1
    %p78 = por %p76, %p77
    %p79 = scmp.ne.s32.totalorder %s68, %s69
    %p80 = scmp.eq.s32.totalorder %s13, 0
    %p81 = por %p79, %p80
    %p82 = scmp.ne.s32.totalorder %s68, %s69
    %p83 = scmp.eq.s32.totalorder %s14, 1
    %p84 = por %p82, %p83
    %p86 = scmp.ne.s32.totalorder %s69, %s85
    %p87 = scmp.eq.s32.totalorder %s14, 0
    %p88 = por %p86, %p87
    %p89 = scmp.le.s32.totalorder 1, %s8
    %p90 = scmp.lt.s32.totalorder %s8, 3
    %p91 = pnand %p89, %p90
    %p92 = pneg %p91
    // Predicated region
    $region9: #{discriminator_forward.4} parent=5 // pred_check
      _
    $region10: #{discriminator_forward.4} parent=5 // pred_check_branch
      %94 = sbr.rel (%p91) target = $region12
    $region11: #{discriminator_forward.4} parent=5 // pred_region
      %s95 = ssub.s32 %s8, 1
      // Predicated region
      $region13: #{discriminator_forward.4} parent=11 // pred_check
        %p96 = pneg %p55
      $region14: #{discriminator_forward.4} parent=11 // pred_check_branch
        %98 = sbr.rel (%p96) target = $region16
      $region15: #{discriminator_forward.4} parent=11 // pred_region
        _
      $region16: #{discriminator_forward.4} parent=11 // pred_fallthru
        _
    $region12: #{discriminator_forward.4} parent=5 // pred_fallthru
      _
    %p99 = scmp.lt.s32.totalorder %s8, 2
    // Predicated region
    $region17: #{discriminator_forward.4} parent=5 // pred_check
      %p100 = pneg %p99
    $region18: #{discriminator_forward.4} parent=5 // pred_check_branch
      %102 = sbr.rel (%p100) target = $region20
    $region19: #{discriminator_forward.4} parent=5 // pred_region
      // Predicated region
      $region21: #{discriminator_forward.4} parent=19 // pred_check
        %p103 = pneg %p28
      $region22: #{discriminator_forward.4} parent=19 // pred_check_branch
        %105 = sbr.rel (%p103) target = $region24
      $region23: #{discriminator_forward.4} parent=19 // pred_region
        %s106 = smul.u32 128, %s8
        %p107 = scmp.lt.s32.totalorder %s106, 255
        %s108 = scalar_select %p107, %s106, 255
        %s109 = smul.addr %s108, 4
        %s110 = scalar_lea.vmem %s0, %s109
        %s111 = smul.u32 128, %s8
      $region24: #{discriminator_forward.4} parent=19 // pred_fallthru
        _
    $region20: #{discriminator_forward.4} parent=5 // pred_fallthru
      _
    %p112 = scmp.le.s32.totalorder 1, %s8
    %p113 = scmp.lt.s32.totalorder %s8, 3
    %p114 = pnand %p112, %p113
    %p115 = pneg %p114
    // Predicated region
    $region25: #{discriminator_forward.4} parent=5 // pred_check
      _
    $region26: #{discriminator_forward.4} parent=5 // pred_check_branch
      %117 = sbr.rel (%p114) target = $region28
    $region27: #{discriminator_forward.4} parent=5 // pred_region
      %s118 = ssub.s32 %s8, 1
      %s119 = smul.u32 128, %s13
      %p120 = scmp.lt.s32.totalorder %s119, 255
      %s121 = scalar_select %p120, %s119, 255
      %s122 = smul.addr %s121, 4
      %s123 = scalar_lea.vmem %s0, %s122
      %p124 = pneg %p34
      %p125 = pneg %p31
      %p126 = pneg %p55
      %p127 = pneg %p52
      %p128 = pneg %p81
      %p129 = pneg %p78
      %s130 = smul.u32 128, %s13
      %p131 = scmp.lt.s32.totalorder %s130, 255
      %s132 = scalar_select %p131, %s130, 255
      %s133 = smul.addr %s132, 4
      %s134 = scalar_lea.vmem %s2, %s133
      %s135 = smul.u32 128, %s13
      %p136 = scmp.lt.s32.totalorder %s135, 255
      %s137 = scalar_select %p136, %s135, 255
      %s138 = smul.addr %s137, 4
      %s139 = scalar_lea.vmem %s0, %s138
      %s140 = smul.u32 128, %s13
      %s141 = smul.u32 128, %s13
      %p142 = scmp.lt.s32.totalorder %s141, 255
      %s143 = scalar_select %p142, %s141, 255
      %s144 = smul.addr %s143, 4
      %s145 = scalar_lea.vmem %s2, %s144
      %s146 = smul.u32 128, %s13
      %v148 = vld [vmem:[%s139] sm:$0xf]
      %v149 = vld [vmem:[%s139 + $0x4] sm:$0xf]
      %v150 = vld [vmem:[%s139 + $0x8] sm:$0xf]
      %v151 = vld [vmem:[%s139 + $0xc] sm:$0xf]
      %v152 = vld [vmem:[%s139 + $0x10] sm:$0xf]
      %v153 = vld [vmem:[%s139 + $0x14] sm:$0xf]
      %v154 = vld [vmem:[%s139 + $0x18] sm:$0xf]
      %v155 = vld [vmem:[%s139 + $0x1c] sm:$0xf]
      %v156 = vld [vmem:[%s139 + $0x20] sm:$0xf]
      %v157 = vld [vmem:[%s139 + $0x24] sm:$0xf]
      %v158 = vld [vmem:[%s139 + $0x28] sm:$0xf]
      %v159 = vld [vmem:[%s139 + $0x2c] sm:$0xf]
      %v160 = vld [vmem:[%s139 + $0x30] sm:$0xf]
      %v161 = vld [vmem:[%s139 + $0x34] sm:$0xf]
      %v162 = vld [vmem:[%s139 + $0x38] sm:$0xf]
      %v163 = vld [vmem:[%s139 + $0x3c] sm:$0xf]
      %v164 = vld [vmem:[%s139 + $0x40] sm:$0xf]
      %v165 = vld [vmem:[%s139 + $0x44] sm:$0xf]
      %v166 = vld [vmem:[%s139 + $0x48] sm:$0xf]
      %v167 = vld [vmem:[%s139 + $0x4c] sm:$0xf]
      %v168 = vld [vmem:[%s139 + $0x50] sm:$0xf]
      %v169 = vld [vmem:[%s139 + $0x54] sm:$0xf]
      %v170 = vld [vmem:[%s139 + $0x58] sm:$0xf]
      %v171 = vld [vmem:[%s139 + $0x5c] sm:$0xf]
      %v172 = vld [vmem:[%s139 + $0x60] sm:$0xf]
      %v173 = vld [vmem:[%s139 + $0x64] sm:$0xf]
      %v174 = vld [vmem:[%s139 + $0x68] sm:$0xf]
      %v175 = vld [vmem:[%s139 + $0x6c] sm:$0xf]
      %v176 = vld [vmem:[%s139 + $0x70] sm:$0xf]
      %v177 = vld [vmem:[%s139 + $0x74] sm:$0xf]
      %v178 = vld [vmem:[%s139 + $0x78] sm:$0xf]
      %v179 = vld [vmem:[%s139 + $0x7c] sm:$0xf]
      %v180 = vld [vmem:[%s139 + $0x80] sm:$0xf]
      %v181 = vld [vmem:[%s139 + $0x84] sm:$0xf]
      %v182 = vld [vmem:[%s139 + $0x88] sm:$0xf]
      %v183 = vld [vmem:[%s139 + $0x8c] sm:$0xf]
      %v184 = vld [vmem:[%s139 + $0x90] sm:$0xf]
      %v185 = vld [vmem:[%s139 + $0x94] sm:$0xf]
      %v186 = vld [vmem:[%s139 + $0x98] sm:$0xf]
      %v187 = vld [vmem:[%s139 + $0x9c] sm:$0xf]
      %v188 = vld [vmem:[%s139 + $0xa0] sm:$0xf]
      %v189 = vld [vmem:[%s139 + $0xa4] sm:$0xf]
      %v190 = vld [vmem:[%s139 + $0xa8] sm:$0xf]
      %v191 = vld [vmem:[%s139 + $0xac] sm:$0xf]
      %v192 = vld [vmem:[%s139 + $0xb0] sm:$0xf]
      %v193 = vld [vmem:[%s139 + $0xb4] sm:$0xf]
      %v194 = vld [vmem:[%s139 + $0xb8] sm:$0xf]
      %v195 = vld [vmem:[%s139 + $0xbc] sm:$0xf]
      %v196 = vld [vmem:[%s139 + $0xc0] sm:$0xf]
      %v197 = vld [vmem:[%s139 + $0xc4] sm:$0xf]
      %v198 = vld [vmem:[%s139 + $0xc8] sm:$0xf]
      %v199 = vld [vmem:[%s139 + $0xcc] sm:$0xf]
      %v200 = vld [vmem:[%s139 + $0xd0] sm:$0xf]
      %v201 = vld [vmem:[%s139 + $0xd4] sm:$0xf]
      %v202 = vld [vmem:[%s139 + $0xd8] sm:$0xf]
      %v203 = vld [vmem:[%s139 + $0xdc] sm:$0xf]
      %v204 = vld [vmem:[%s139 + $0xe0] sm:$0xf]
      %v205 = vld [vmem:[%s139 + $0xe4] sm:$0xf]
      %v206 = vld [vmem:[%s139 + $0xe8] sm:$0xf]
      %v207 = vld [vmem:[%s139 + $0xec] sm:$0xf]
      %v208 = vld [vmem:[%s139 + $0xf0] sm:$0xf]
      %v209 = vld [vmem:[%s139 + $0xf4] sm:$0xf]
      %v210 = vld [vmem:[%s139 + $0xf8] sm:$0xf]
      %v211 = vld [vmem:[%s139 + $0xfc] sm:$0xf]
      %v212 = vld [vmem:[%s139 + $0x100] sm:$0xf]
      %v213 = vld [vmem:[%s139 + $0x104] sm:$0xf]
      %v214 = vld [vmem:[%s139 + $0x108] sm:$0xf]
      %v215 = vld [vmem:[%s139 + $0x10c] sm:$0xf]
      %v216 = vld [vmem:[%s139 + $0x110] sm:$0xf]
      %v217 = vld [vmem:[%s139 + $0x114] sm:$0xf]
      %v218 = vld [vmem:[%s139 + $0x118] sm:$0xf]
      %v219 = vld [vmem:[%s139 + $0x11c] sm:$0xf]
      %v220 = vld [vmem:[%s139 + $0x120] sm:$0xf]
      %v221 = vld [vmem:[%s139 + $0x124] sm:$0xf]
      %v222 = vld [vmem:[%s139 + $0x128] sm:$0xf]
      %v223 = vld [vmem:[%s139 + $0x12c] sm:$0xf]
      %v224 = vld [vmem:[%s139 + $0x130] sm:$0xf]
      %v225 = vld [vmem:[%s139 + $0x134] sm:$0xf]
      %v226 = vld [vmem:[%s139 + $0x138] sm:$0xf]
      %v227 = vld [vmem:[%s139 + $0x13c] sm:$0xf]
      %v228 = vld [vmem:[%s139 + $0x140] sm:$0xf]
      %v229 = vld [vmem:[%s139 + $0x144] sm:$0xf]
      %v230 = vld [vmem:[%s139 + $0x148] sm:$0xf]
      %v231 = vld [vmem:[%s139 + $0x14c] sm:$0xf]
      %v232 = vld [vmem:[%s139 + $0x150] sm:$0xf]
      %v233 = vld [vmem:[%s139 + $0x154] sm:$0xf]
      %v234 = vld [vmem:[%s139 + $0x158] sm:$0xf]
      %v235 = vld [vmem:[%s139 + $0x15c] sm:$0xf]
      %v236 = vld [vmem:[%s139 + $0x160] sm:$0xf]
      %v237 = vld [vmem:[%s139 + $0x164] sm:$0xf]
      %v238 = vld [vmem:[%s139 + $0x168] sm:$0xf]
      %v239 = vld [vmem:[%s139 + $0x16c] sm:$0xf]
      %v240 = vld [vmem:[%s139 + $0x170] sm:$0xf]
      %v241 = vld [vmem:[%s139 + $0x174] sm:$0xf]
      %v242 = vld [vmem:[%s139 + $0x178] sm:$0xf]
      %v243 = vld [vmem:[%s139 + $0x17c] sm:$0xf]
      %v244 = vld [vmem:[%s139 + $0x180] sm:$0xf]
      %v245 = vld [vmem:[%s139 + $0x184] sm:$0xf]
      %v246 = vld [vmem:[%s139 + $0x188] sm:$0xf]
      %v247 = vld [vmem:[%s139 + $0x18c] sm:$0xf]
      %v248 = vld [vmem:[%s139 + $0x190] sm:$0xf]
      %v249 = vld [vmem:[%s139 + $0x194] sm:$0xf]
      %v250 = vld [vmem:[%s139 + $0x198] sm:$0xf]
      %v251 = vld [vmem:[%s139 + $0x19c] sm:$0xf]
      %v252 = vld [vmem:[%s139 + $0x1a0] sm:$0xf]
      %v253 = vld [vmem:[%s139 + $0x1a4] sm:$0xf]
      %v254 = vld [vmem:[%s139 + $0x1a8] sm:$0xf]
      %v255 = vld [vmem:[%s139 + $0x1ac] sm:$0xf]
      %v256 = vld [vmem:[%s139 + $0x1b0] sm:$0xf]
      %v257 = vld [vmem:[%s139 + $0x1b4] sm:$0xf]
      %v258 = vld [vmem:[%s139 + $0x1b8] sm:$0xf]
      %v259 = vld [vmem:[%s139 + $0x1bc] sm:$0xf]
      %v260 = vld [vmem:[%s139 + $0x1c0] sm:$0xf]
      %v261 = vld [vmem:[%s139 + $0x1c4] sm:$0xf]
      %v262 = vld [vmem:[%s139 + $0x1c8] sm:$0xf]
      %v263 = vld [vmem:[%s139 + $0x1cc] sm:$0xf]
      %v264 = vld [vmem:[%s139 + $0x1d0] sm:$0xf]
      %v265 = vld [vmem:[%s139 + $0x1d4] sm:$0xf]
      %v266 = vld [vmem:[%s139 + $0x1d8] sm:$0xf]
      %v267 = vld [vmem:[%s139 + $0x1dc] sm:$0xf]
      %v268 = vld [vmem:[%s139 + $0x1e0] sm:$0xf]
      %v269 = vld [vmem:[%s139 + $0x1e4] sm:$0xf]
      %v270 = vld [vmem:[%s139 + $0x1e8] sm:$0xf]
      %v271 = vld [vmem:[%s139 + $0x1ec] sm:$0xf]
      %v272 = vld [vmem:[%s139 + $0x1f0] sm:$0xf]
      %v273 = vld [vmem:[%s139 + $0x1f4] sm:$0xf]
      %v274 = vld [vmem:[%s139 + $0x1f8] sm:$0xf]
      %v275 = vld [vmem:[%s139 + $0x1fc] sm:$0xf]
      %v276 = vld [vmem:[%s1] sm:$0xf]
      %v277 = vld [vmem:[%s1 + $0x4] sm:$0xf]
      %v278 = vld [vmem:[%s1 + $0x8] sm:$0xf]
      %v279 = vld [vmem:[%s1 + $0xc] sm:$0xf]
      %v280 = vld [vmem:[%s1 + $0x10] sm:$0xf]
      %v281 = vld [vmem:[%s1 + $0x14] sm:$0xf]
      %v282 = vld [vmem:[%s1 + $0x18] sm:$0xf]
      %v283 = vld [vmem:[%s1 + $0x1c] sm:$0xf]
      %v284 = vld [vmem:[%s1 + $0x20] sm:$0xf]
      %v285 = vld [vmem:[%s1 + $0x24] sm:$0xf]
      %v286 = vld [vmem:[%s1 + $0x28] sm:$0xf]
      %v287 = vld [vmem:[%s1 + $0x2c] sm:$0xf]
      %v288 = vld [vmem:[%s1 + $0x30] sm:$0xf]
      %v289 = vld [vmem:[%s1 + $0x34] sm:$0xf]
      %v290 = vld [vmem:[%s1 + $0x38] sm:$0xf]
      %v291 = vld [vmem:[%s1 + $0x3c] sm:$0xf]
      %v420 = vunpack.c.l.b16 %v148
      %v421 = vunpack.c.l.b16 %v149
      %v422 = vunpack.c.l.b16 %v150
      %v423 = vunpack.c.l.b16 %v151
      %v424 = vunpack.c.l.b16 %v152
      %v425 = vunpack.c.l.b16 %v153
      %v426 = vunpack.c.l.b16 %v154
      %v427 = vunpack.c.l.b16 %v155
      %v428 = vunpack.c.l.b16 %v156
      %v429 = vunpack.c.l.b16 %v157
      %v430 = vunpack.c.l.b16 %v158
      %v431 = vunpack.c.l.b16 %v159
      %v432 = vunpack.c.l.b16 %v160
      %v433 = vunpack.c.l.b16 %v161
      %v434 = vunpack.c.l.b16 %v162
      %v435 = vunpack.c.l.b16 %v163
      %v436 = vunpack.c.l.b16 %v164
      %v437 = vunpack.c.l.b16 %v165
      %v438 = vunpack.c.l.b16 %v166
      %v439 = vunpack.c.l.b16 %v167
      %v440 = vunpack.c.l.b16 %v168
      %v441 = vunpack.c.l.b16 %v169
      %v442 = vunpack.c.l.b16 %v170
      %v443 = vunpack.c.l.b16 %v171
      %v444 = vunpack.c.l.b16 %v172
      %v445 = vunpack.c.l.b16 %v173
      %v446 = vunpack.c.l.b16 %v174
      %v447 = vunpack.c.l.b16 %v175
      %v448 = vunpack.c.l.b16 %v176
      %v449 = vunpack.c.l.b16 %v177
      %v450 = vunpack.c.l.b16 %v178
      %v451 = vunpack.c.l.b16 %v179
      %v452 = vunpack.c.l.b16 %v180
      %v453 = vunpack.c.l.b16 %v181
      %v454 = vunpack.c.l.b16 %v182
      %v455 = vunpack.c.l.b16 %v183
      %v456 = vunpack.c.l.b16 %v184
      %v457 = vunpack.c.l.b16 %v185
      %v458 = vunpack.c.l.b16 %v186
      %v459 = vunpack.c.l.b16 %v187
      %v460 = vunpack.c.l.b16 %v188
      %v461 = vunpack.c.l.b16 %v189
      %v462 = vunpack.c.l.b16 %v190
      %v463 = vunpack.c.l.b16 %v191
      %v464 = vunpack.c.l.b16 %v192
      %v465 = vunpack.c.l.b16 %v193
      %v466 = vunpack.c.l.b16 %v194
      %v467 = vunpack.c.l.b16 %v195
      %v468 = vunpack.c.l.b16 %v196
      %v469 = vunpack.c.l.b16 %v197
      %v470 = vunpack.c.l.b16 %v198
      %v471 = vunpack.c.l.b16 %v199
      %v472 = vunpack.c.l.b16 %v200
      %v473 = vunpack.c.l.b16 %v201
      %v474 = vunpack.c.l.b16 %v202
      %v475 = vunpack.c.l.b16 %v203
      %v476 = vunpack.c.l.b16 %v204
      %v477 = vunpack.c.l.b16 %v205
      %v478 = vunpack.c.l.b16 %v206
      %v479 = vunpack.c.l.b16 %v207
      %v480 = vunpack.c.l.b16 %v208
      %v481 = vunpack.c.l.b16 %v209
      %v482 = vunpack.c.l.b16 %v210
      %v483 = vunpack.c.l.b16 %v211
      %v484 = vunpack.c.l.b16 %v212
      %v485 = vunpack.c.l.b16 %v213
      %v486 = vunpack.c.l.b16 %v214
      %v487 = vunpack.c.l.b16 %v215
      %v488 = vunpack.c.l.b16 %v216
      %v489 = vunpack.c.l.b16 %v217
      %v490 = vunpack.c.l.b16 %v218
      %v491 = vunpack.c.l.b16 %v219
      %v492 = vunpack.c.l.b16 %v220
      %v493 = vunpack.c.l.b16 %v221
      %v494 = vunpack.c.l.b16 %v222
      %v495 = vunpack.c.l.b16 %v223
      %v496 = vunpack.c.l.b16 %v224
      %v497 = vunpack.c.l.b16 %v225
      %v498 = vunpack.c.l.b16 %v226
      %v499 = vunpack.c.l.b16 %v227
      %v500 = vunpack.c.l.b16 %v228
      %v501 = vunpack.c.l.b16 %v229
      %v502 = vunpack.c.l.b16 %v230
      %v503 = vunpack.c.l.b16 %v231
      %v504 = vunpack.c.l.b16 %v232
      %v505 = vunpack.c.l.b16 %v233
      %v506 = vunpack.c.l.b16 %v234
      %v507 = vunpack.c.l.b16 %v235
      %v508 = vunpack.c.l.b16 %v236
      %v509 = vunpack.c.l.b16 %v237
      %v510 = vunpack.c.l.b16 %v238
      %v511 = vunpack.c.l.b16 %v239
      %v512 = vunpack.c.l.b16 %v240
      %v513 = vunpack.c.l.b16 %v241
      %v514 = vunpack.c.l.b16 %v242
      %v515 = vunpack.c.l.b16 %v243
      %v516 = vunpack.c.l.b16 %v244
      %v517 = vunpack.c.l.b16 %v245
      %v518 = vunpack.c.l.b16 %v246
      %v519 = vunpack.c.l.b16 %v247
      %v520 = vunpack.c.l.b16 %v248
      %v521 = vunpack.c.l.b16 %v249
      %v522 = vunpack.c.l.b16 %v250
      %v523 = vunpack.c.l.b16 %v251
      %v524 = vunpack.c.l.b16 %v252
      %v525 = vunpack.c.l.b16 %v253
      %v526 = vunpack.c.l.b16 %v254
      %v527 = vunpack.c.l.b16 %v255
      %v528 = vunpack.c.l.b16 %v256
      %v529 = vunpack.c.l.b16 %v257
      %v530 = vunpack.c.l.b16 %v258
      %v531 = vunpack.c.l.b16 %v259
      %v532 = vunpack.c.l.b16 %v260
      %v533 = vunpack.c.l.b16 %v261
      %v534 = vunpack.c.l.b16 %v262
      %v535 = vunpack.c.l.b16 %v263
      %v536 = vunpack.c.l.b16 %v264
      %v537 = vunpack.c.l.b16 %v265
      %v538 = vunpack.c.l.b16 %v266
      %v539 = vunpack.c.l.b16 %v267
      %v540 = vunpack.c.l.b16 %v268
      %v541 = vunpack.c.l.b16 %v269
      %v542 = vunpack.c.l.b16 %v270
      %v543 = vunpack.c.l.b16 %v271
      %v544 = vunpack.c.l.b16 %v272
      %v545 = vunpack.c.l.b16 %v273
      %v546 = vunpack.c.l.b16 %v274
      %v547 = vunpack.c.l.b16 %v275
      %v548 = vpack.c.b16 %v421, %v420
      %v549 = vpack.c.b16 %v423, %v422
      %v550 = vpack.c.b16 %v425, %v424
      %v551 = vpack.c.b16 %v427, %v426
      %v552 = vpack.c.b16 %v429, %v428
      %v553 = vpack.c.b16 %v431, %v430
      %v554 = vpack.c.b16 %v433, %v432
      %v555 = vpack.c.b16 %v435, %v434
      %v556 = vpack.c.b16 %v437, %v436
      %v557 = vpack.c.b16 %v439, %v438
      %v558 = vpack.c.b16 %v441, %v440
      %v559 = vpack.c.b16 %v443, %v442
      %v560 = vpack.c.b16 %v445, %v444
      %v561 = vpack.c.b16 %v447, %v446
      %v562 = vpack.c.b16 %v449, %v448
      %v563 = vpack.c.b16 %v451, %v450
      %v564 = vpack.c.b16 %v453, %v452
      %v565 = vpack.c.b16 %v455, %v454
      %v566 = vpack.c.b16 %v457, %v456
      %v567 = vpack.c.b16 %v459, %v458
      %v568 = vpack.c.b16 %v461, %v460
      %v569 = vpack.c.b16 %v463, %v462
      %v570 = vpack.c.b16 %v465, %v464
      %v571 = vpack.c.b16 %v467, %v466
      %v572 = vpack.c.b16 %v469, %v468
      %v573 = vpack.c.b16 %v471, %v470
      %v574 = vpack.c.b16 %v473, %v472
      %v575 = vpack.c.b16 %v475, %v474
      %v576 = vpack.c.b16 %v477, %v476
      %v577 = vpack.c.b16 %v479, %v478
      %v578 = vpack.c.b16 %v481, %v480
      %v579 = vpack.c.b16 %v483, %v482
      %v580 = vpack.c.b16 %v485, %v484
      %v581 = vpack.c.b16 %v487, %v486
      %v582 = vpack.c.b16 %v489, %v488
      %v583 = vpack.c.b16 %v491, %v490
      %v584 = vpack.c.b16 %v493, %v492
      %v585 = vpack.c.b16 %v495, %v494
      %v586 = vpack.c.b16 %v497, %v496
      %v587 = vpack.c.b16 %v499, %v498
      %v588 = vpack.c.b16 %v501, %v500
      %v589 = vpack.c.b16 %v503, %v502
      %v590 = vpack.c.b16 %v505, %v504
      %v591 = vpack.c.b16 %v507, %v506
      %v592 = vpack.c.b16 %v509, %v508
      %v593 = vpack.c.b16 %v511, %v510
      %v594 = vpack.c.b16 %v513, %v512
      %v595 = vpack.c.b16 %v515, %v514
      %v596 = vpack.c.b16 %v517, %v516
      %v597 = vpack.c.b16 %v519, %v518
      %v598 = vpack.c.b16 %v521, %v520
      %v599 = vpack.c.b16 %v523, %v522
      %v600 = vpack.c.b16 %v525, %v524
      %v601 = vpack.c.b16 %v527, %v526
      %v602 = vpack.c.b16 %v529, %v528
      %v603 = vpack.c.b16 %v531, %v530
      %v604 = vpack.c.b16 %v533, %v532
      %v605 = vpack.c.b16 %v535, %v534
      %v606 = vpack.c.b16 %v537, %v536
      %v607 = vpack.c.b16 %v539, %v538
      %v608 = vpack.c.b16 %v541, %v540
      %v609 = vpack.c.b16 %v543, %v542
      %v610 = vpack.c.b16 %v545, %v544
      %v611 = vpack.c.b16 %v547, %v546
      %v692 = vunpack.c.l.b16 %v276
      %v693 = vunpack.c.l.b16 %v277
      %v694 = vunpack.c.l.b16 %v278
      %v695 = vunpack.c.l.b16 %v279
      %v696 = vunpack.c.l.b16 %v280
      %v697 = vunpack.c.l.b16 %v281
      %v698 = vunpack.c.l.b16 %v282
      %v699 = vunpack.c.l.b16 %v283
      %v700 = vunpack.c.l.b16 %v284
      %v701 = vunpack.c.l.b16 %v285
      %v702 = vunpack.c.l.b16 %v286
      %v703 = vunpack.c.l.b16 %v287
      %v704 = vunpack.c.l.b16 %v288
      %v705 = vunpack.c.l.b16 %v289
      %v706 = vunpack.c.l.b16 %v290
      %v707 = vunpack.c.l.b16 %v291
      %v708 = vpack.c.b16 %v693, %v692
      %v709 = vpack.c.b16 %v695, %v694
      %v710 = vpack.c.b16 %v697, %v696
      %v711 = vpack.c.b16 %v699, %v698
      %v712 = vpack.c.b16 %v701, %v700
      %v713 = vpack.c.b16 %v703, %v702
      %v714 = vpack.c.b16 %v705, %v704
      %v715 = vpack.c.b16 %v707, %v706
      %724 = vmatprep.subr.bf16.mxu0 0
      %725 = vmatpush1.bf16.msra.mxu0 %v708
      %726 = vmatprep.subr.bf16.mxu0 0
      %727 = vmatpush1.bf16.msra.mxu0 %v709
      %728 = vmatprep.subr.bf16.mxu0 0
      %729 = vmatpush1.bf16.msra.mxu0 %v710
      %730 = vmatprep.subr.bf16.mxu0 0
      %731 = vmatpush1.bf16.msra.mxu0 %v711
      %732 = vmatprep.subr.bf16.mxu0 0
      %733 = vmatpush1.bf16.msra.mxu0 %v712
      %734 = vmatprep.subr.bf16.mxu0 0
      %735 = vmatpush1.bf16.msra.mxu0 %v713
      %736 = vmatprep.subr.bf16.mxu0 0
      %737 = vmatpush1.bf16.msra.mxu0 %v714
      %738 = vmatprep.subr.bf16.mxu0 0
      %739 = vmatpush1.bf16.msra.mxu0 %v715
      %740 = vmatprep.subr.bf16.mxu0 0
      %741 = vmatpush1.bf16.msra.mxu0 0
      %742 = vmatprep.subr.bf16.mxu0 0
      %743 = vmatpush1.bf16.msra.mxu0 0
      %744 = vmatprep.subr.bf16.mxu0 0
      %745 = vmatpush1.bf16.msra.mxu0 0
      %746 = vmatprep.subr.bf16.mxu0 0
      %747 = vmatpush1.bf16.msra.mxu0 0
      %748 = vmatprep.subr.bf16.mxu0 0
      %749 = vmatpush1.bf16.msra.mxu0 0
      %750 = vmatprep.subr.bf16.mxu0 0
      %751 = vmatpush1.bf16.msra.mxu0 0
      %752 = vmatprep.subr.bf16.mxu0 0
      %753 = vmatpush1.bf16.msra.mxu0 0
      %754 = vmatprep.subr.bf16.mxu0 0
      %755 = vmatpush1.bf16.msra.mxu0 0
      %756 = vmatprep.mubr.bf16.mxu0 0
      %757 = vmatmul.mubr.bf16.gmra.mrb[0].mxu0 %v548
      %v758 = vpop.f32.mrb[0].mxu0
      %v759 = vadd.f32 0.0, %v758
      %v760 = vpop.f32.mrb[0].mxu0
      %v761 = vpop.f32.mrb[0].mxu0
      %v762 = vadd.f32 0.0, %v761
      %v763 = vpop.f32.mrb[0].mxu0
      %764 = vmatprep.mubr.bf16.mxu0 0
      %765 = vmatmul.mubr.bf16.gmra.mrb[0].mxu0 %v549
      %v766 = vpop.f32.mrb[0].mxu0
      %v767 = vadd.f32 0.0, %v766
      %v768 = vpop.f32.mrb[0].mxu0
      %v769 = vpop.f32.mrb[0].mxu0
      %v770 = vadd.f32 0.0, %v769
      %v771 = vpop.f32.mrb[0].mxu0
      %772 = vmatprep.mubr.bf16.mxu0 0
      %773 = vmatmul.mubr.bf16.gmra.mrb[0].mxu0 %v550
      %v774 = vpop.f32.mrb[0].mxu0
      %v775 = vadd.f32 0.0, %v774
      %v776 = vpop.f32.mrb[0].mxu0
      %v777 = vpop.f32.mrb[0].mxu0
      %v778 = vadd.f32 0.0, %v777
      %v779 = vpop.f32.mrb[0].mxu0
      %780 = vmatprep.mubr.bf16.mxu0 0
      %781 = vmatmul.mubr.bf16.gmra.mrb[0].mxu0 %v551
      %v782 = vpop.f32.mrb[0].mxu0
      %v783 = vadd.f32 0.0, %v782
      %v784 = vpop.f32.mrb[0].mxu0
      %v785 = vpop.f32.mrb[0].mxu0
      %v786 = vadd.f32 0.0, %v785
      %v787 = vpop.f32.mrb[0].mxu0
      %788 = vmatprep.mubr.bf16.mxu0 0
      %789 = vmatmul.mubr.bf16.gmra.mrb[0].mxu0 %v552
      %v790 = vpop.f32.mrb[0].mxu0
      %v791 = vadd.f32 0.0, %v790
      %v792 = vpop.f32.mrb[0].mxu0
      %v793 = vpop.f32.mrb[0].mxu0
      %v794 = vadd.f32 0.0, %v793
      %v795 = vpop.f32.mrb[0].mxu0
      %796 = vmatprep.mubr.bf16.mxu0 0
      %797 = vmatmul.mubr.bf16.gmra.mrb[0].mxu0 %v553
      %v798 = vpop.f32.mrb[0].mxu0
      %v799 = vadd.f32 0.0, %v798
      %v800 = vpop.f32.mrb[0].mxu0
      %v801 = vpop.f32.mrb[0].mxu0
      %v802 = vadd.f32 0.0, %v801
      %v803 = vpop.f32.mrb[0].mxu0
      %804 = vmatprep.mubr.bf16.mxu0 0
      %805 = vmatmul.mubr.bf16.gmra.mrb[0].mxu0 %v554
      %v806 = vpop.f32.mrb[0].mxu0
      %v807 = vadd.f32 0.0, %v806
      %v808 = vpop.f32.mrb[0].mxu0
      %v809 = vpop.f32.mrb[0].mxu0
      %v810 = vadd.f32 0.0, %v809
      %v811 = vpop.f32.mrb[0].mxu0
      %812 = vmatprep.mubr.bf16.mxu0 0
      %813 = vmatmul.mubr.bf16.gmra.mrb[0].mxu0 %v555
      %v814 = vpop.f32.mrb[0].mxu0
      %v815 = vadd.f32 0.0, %v814
      %v816 = vpop.f32.mrb[0].mxu0
      %v817 = vpop.f32.mrb[0].mxu0
      %v818 = vadd.f32 0.0, %v817
      %v819 = vpop.f32.mrb[0].mxu0
      %820 = vmatprep.mubr.bf16.mxu0 0
      %821 = vmatmul.mubr.bf16.gmra.mrb[0].mxu0 %v556
      %v822 = vpop.f32.mrb[0].mxu0
      %v823 = vadd.f32 0.0, %v822
      %v824 = vpop.f32.mrb[0].mxu0
      %v825 = vpop.f32.mrb[0].mxu0
      %v826 = vadd.f32 0.0, %v825
      %v827 = vpop.f32.mrb[0].mxu0
      %828 = vmatprep.mubr.bf16.mxu0 0
      %829 = vmatmul.mubr.bf16.gmra.mrb[0].mxu0 %v557
      %v830 = vpop.f32.mrb[0].mxu0
      %v831 = vadd.f32 0.0, %v830
      %v832 = vpop.f32.mrb[0].mxu0
      %v833 = vpop.f32.mrb[0].mxu0
      %v834 = vadd.f32 0.0, %v833
      %v835 = vpop.f32.mrb[0].mxu0
      %836 = vmatprep.mubr.bf16.mxu0 0
      %837 = vmatmul.mubr.bf16.gmra.mrb[0].mxu0 %v558
      %v838 = vpop.f32.mrb[0].mxu0
      %v839 = vadd.f32 0.0, %v838
      %v840 = vpop.f32.mrb[0].mxu0
      %v841 = vpop.f32.mrb[0].mxu0
      %v842 = vadd.f32 0.0, %v841
      %v843 = vpop.f32.mrb[0].mxu0
      %844 = vmatprep.mubr.bf16.mxu0 0
      %845 = vmatmul.mubr.bf16.gmra.mrb[0].mxu0 %v559
      %v846 = vpop.f32.mrb[0].mxu0
      %v847 = vadd.f32 0.0, %v846
      %v848 = vpop.f32.mrb[0].mxu0
      %v849 = vpop.f32.mrb[0].mxu0
      %v850 = vadd.f32 0.0, %v849
      %v851 = vpop.f32.mrb[0].mxu0
      %852 = vmatprep.mubr.bf16.mxu0 0
      %853 = vmatmul.mubr.bf16.gmra.mrb[0].mxu0 %v560
      %v854 = vpop.f32.mrb[0].mxu0
      %v855 = vadd.f32 0.0, %v854
      %v856 = vpop.f32.mrb[0].mxu0
      %v857 = vpop.f32.mrb[0].mxu0
      %v858 = vadd.f32 0.0, %v857
      %v859 = vpop.f32.mrb[0].mxu0
      %860 = vmatprep.mubr.bf16.mxu0 0
      %861 = vmatmul.mubr.bf16.gmra.mrb[0].mxu0 %v561
      %v862 = vpop.f32.mrb[0].mxu0
      %v863 = vadd.f32 0.0, %v862
      %v864 = vpop.f32.mrb[0].mxu0
      %v865 = vpop.f32.mrb[0].mxu0
      %v866 = vadd.f32 0.0, %v865
      %v867 = vpop.f32.mrb[0].mxu0
      %868 = vmatprep.mubr.bf16.mxu0 0
      %869 = vmatmul.mubr.bf16.gmra.mrb[0].mxu0 %v562
      %v870 = vpop.f32.mrb[0].mxu0
      %v871 = vadd.f32 0.0, %v870
      %v872 = vpop.f32.mrb[0].mxu0
      %v873 = vpop.f32.mrb[0].mxu0
      %v874 = vadd.f32 0.0, %v873
      %v875 = vpop.f32.mrb[0].mxu0
      %876 = vmatprep.mubr.bf16.mxu0 0
      %877 = vmatmul.mubr.bf16.gmra.mrb[0].mxu0 %v563
      %v878 = vpop.f32.mrb[0].mxu0
      %v879 = vadd.f32 0.0, %v878
      %v880 = vpop.f32.mrb[0].mxu0
      %v881 = vpop.f32.mrb[0].mxu0
      %v882 = vadd.f32 0.0, %v881
      %v883 = vpop.f32.mrb[0].mxu0
      %884 = vmatprep.mubr.bf16.mxu0 0
      %885 = vmatmul.mubr.bf16.gmra.mrb[0].mxu0 %v564
      %v886 = vpop.f32.mrb[0].mxu0
      %v887 = vadd.f32 0.0, %v886
      %v888 = vpop.f32.mrb[0].mxu0
      %v889 = vpop.f32.mrb[0].mxu0
      %v890 = vadd.f32 0.0, %v889
      %v891 = vpop.f32.mrb[0].mxu0
      %892 = vmatprep.mubr.bf16.mxu0 0
      %893 = vmatmul.mubr.bf16.gmra.mrb[0].mxu0 %v565
      %v894 = vpop.f32.mrb[0].mxu0
      %v895 = vadd.f32 0.0, %v894
      %v896 = vpop.f32.mrb[0].mxu0
      %v897 = vpop.f32.mrb[0].mxu0
      %v898 = vadd.f32 0.0, %v897
      %v899 = vpop.f32.mrb[0].mxu0
      %900 = vmatprep.mubr.bf16.mxu0 0
      %901 = vmatmul.mubr.bf16.gmra.mrb[0].mxu0 %v566
      %v902 = vpop.f32.mrb[0].mxu0
      %v903 = vadd.f32 0.0, %v902
      %v904 = vpop.f32.mrb[0].mxu0
      %v905 = vpop.f32.mrb[0].mxu0
      %v906 = vadd.f32 0.0, %v905
      %v907 = vpop.f32.mrb[0].mxu0
      %908 = vmatprep.mubr.bf16.mxu0 0
      %909 = vmatmul.mubr.bf16.gmra.mrb[0].mxu0 %v567
      %v910 = vpop.f32.mrb[0].mxu0
      %v911 = vadd.f32 0.0, %v910
      %v912 = vpop.f32.mrb[0].mxu0
      %v913 = vpop.f32.mrb[0].mxu0
      %v914 = vadd.f32 0.0, %v913
      %v915 = vpop.f32.mrb[0].mxu0
      %916 = vmatprep.mubr.bf16.mxu0 0
      %917 = vmatmul.mubr.bf16.gmra.mrb[0].mxu0 %v568
      %v918 = vpop.f32.mrb[0].mxu0
      %v919 = vadd.f32 0.0, %v918
      %v920 = vpop.f32.mrb[0].mxu0
      %v921 = vpop.f32.mrb[0].mxu0
      %v922 = vadd.f32 0.0, %v921
      %v923 = vpop.f32.mrb[0].mxu0
      %924 = vmatprep.mubr.bf16.mxu0 0
      %925 = vmatmul.mubr.bf16.gmra.mrb[0].mxu0 %v569
      %v926 = vpop.f32.mrb[0].mxu0
      %v927 = vadd.f32 0.0, %v926
      %v928 = vpop.f32.mrb[0].mxu0
      %v929 = vpop.f32.mrb[0].mxu0
      %v930 = vadd.f32 0.0, %v929
      %v931 = vpop.f32.mrb[0].mxu0
      %932 = vmatprep.mubr.bf16.mxu0 0
      %933 = vmatmul.mubr.bf16.gmra.mrb[0].mxu0 %v570
      %v934 = vpop.f32.mrb[0].mxu0
      %v935 = vadd.f32 0.0, %v934
      %v936 = vpop.f32.mrb[0].mxu0
      %v937 = vpop.f32.mrb[0].mxu0
      %v938 = vadd.f32 0.0, %v937
      %v939 = vpop.f32.mrb[0].mxu0
      %940 = vmatprep.mubr.bf16.mxu0 0
      %941 = vmatmul.mubr.bf16.gmra.mrb[0].mxu0 %v571
      %v942 = vpop.f32.mrb[0].mxu0
      %v943 = vadd.f32 0.0, %v942
      %v944 = vpop.f32.mrb[0].mxu0
      %v945 = vpop.f32.mrb[0].mxu0
      %v946 = vadd.f32 0.0, %v945
      %v947 = vpop.f32.mrb[0].mxu0
      %948 = vmatprep.mubr.bf16.mxu0 0
      %949 = vmatmul.mubr.bf16.gmra.mrb[0].mxu0 %v572
      %v950 = vpop.f32.mrb[0].mxu0
      %v951 = vadd.f32 0.0, %v950
      %v952 = vpop.f32.mrb[0].mxu0
      %v953 = vpop.f32.mrb[0].mxu0
      %v954 = vadd.f32 0.0, %v953
      %v955 = vpop.f32.mrb[0].mxu0
      %956 = vmatprep.mubr.bf16.mxu0 0
      %957 = vmatmul.mubr.bf16.gmra.mrb[0].mxu0 %v573
      %v958 = vpop.f32.mrb[0].mxu0
      %v959 = vadd.f32 0.0, %v958
      %v960 = vpop.f32.mrb[0].mxu0
      %v961 = vpop.f32.mrb[0].mxu0
      %v962 = vadd.f32 0.0, %v961
      %v963 = vpop.f32.mrb[0].mxu0
      %964 = vmatprep.mubr.bf16.mxu0 0
      %965 = vmatmul.mubr.bf16.gmra.mrb[0].mxu0 %v574
      %v966 = vpop.f32.mrb[0].mxu0
      %v967 = vadd.f32 0.0, %v966
      %v968 = vpop.f32.mrb[0].mxu0
      %v969 = vpop.f32.mrb[0].mxu0
      %v970 = vadd.f32 0.0, %v969
      %v971 = vpop.f32.mrb[0].mxu0
      %972 = vmatprep.mubr.bf16.mxu0 0
      %973 = vmatmul.mubr.bf16.gmra.mrb[0].mxu0 %v575
      %v974 = vpop.f32.mrb[0].mxu0
      %v975 = vadd.f32 0.0, %v974
      %v976 = vpop.f32.mrb[0].mxu0
      %v977 = vpop.f32.mrb[0].mxu0
      %v978 = vadd.f32 0.0, %v977
      %v979 = vpop.f32.mrb[0].mxu0
      %980 = vmatprep.mubr.bf16.mxu0 0
      %981 = vmatmul.mubr.bf16.gmra.mrb[0].mxu0 %v576
      %v982 = vpop.f32.mrb[0].mxu0
      %v983 = vadd.f32 0.0, %v982
      %v984 = vpop.f32.mrb[0].mxu0
      %v985 = vpop.f32.mrb[0].mxu0
      %v986 = vadd.f32 0.0, %v985
      %v987 = vpop.f32.mrb[0].mxu0
      %988 = vmatprep.mubr.bf16.mxu0 0
      %989 = vmatmul.mubr.bf16.gmra.mrb[0].mxu0 %v577
      %v990 = vpop.f32.mrb[0].mxu0
      %v991 = vadd.f32 0.0, %v990
      %v992 = vpop.f32.mrb[0].mxu0
      %v993 = vpop.f32.mrb[0].mxu0
      %v994 = vadd.f32 0.0, %v993
      %v995 = vpop.f32.mrb[0].mxu0
      %996 = vmatprep.mubr.bf16.mxu0 0
      %997 = vmatmul.mubr.bf16.gmra.mrb[0].mxu0 %v578
      %v998 = vpop.f32.mrb[0].mxu0
      %v999 = vadd.f32 0.0, %v998
      %v1000 = vpop.f32.mrb[0].mxu0
      %v1001 = vpop.f32.mrb[0].mxu0
      %v1002 = vadd.f32 0.0, %v1001
      %v1003 = vpop.f32.mrb[0].mxu0
      %1004 = vmatprep.mubr.bf16.mxu0 0
      %1005 = vmatmul.mubr.bf16.gmra.mrb[0].mxu0 %v579
      %v1006 = vpop.f32.mrb[0].mxu0
      %v1007 = vadd.f32 0.0, %v1006
      %v1008 = vpop.f32.mrb[0].mxu0
      %v1009 = vpop.f32.mrb[0].mxu0
      %v1010 = vadd.f32 0.0, %v1009
      %v1011 = vpop.f32.mrb[0].mxu0
      %1012 = vmatprep.mubr.bf16.mxu0 0
      %1013 = vmatmul.mubr.bf16.gmra.mrb[0].mxu0 %v580
      %v1014 = vpop.f32.mrb[0].mxu0
      %v1015 = vadd.f32 0.0, %v1014
      %v1016 = vpop.f32.mrb[0].mxu0
      %v1017 = vpop.f32.mrb[0].mxu0
      %v1018 = vadd.f32 0.0, %v1017
      %v1019 = vpop.f32.mrb[0].mxu0
      %1020 = vmatprep.mubr.bf16.mxu0 0
      %1021 = vmatmul.mubr.bf16.gmra.mrb[0].mxu0 %v581
      %v1022 = vpop.f32.mrb[0].mxu0
      %v1023 = vadd.f32 0.0, %v1022
      %v1024 = vpop.f32.mrb[0].mxu0
      %v1025 = vpop.f32.mrb[0].mxu0
      %v1026 = vadd.f32 0.0, %v1025
      %v1027 = vpop.f32.mrb[0].mxu0
      %1028 = vmatprep.mubr.bf16.mxu0 0
      %1029 = vmatmul.mubr.bf16.gmra.mrb[0].mxu0 %v582
      %v1030 = vpop.f32.mrb[0].mxu0
      %v1031 = vadd.f32 0.0, %v1030
      %v1032 = vpop.f32.mrb[0].mxu0
      %v1033 = vpop.f32.mrb[0].mxu0
      %v1034 = vadd.f32 0.0, %v1033
      %v1035 = vpop.f32.mrb[0].mxu0
      %1036 = vmatprep.mubr.bf16.mxu0 0
      %1037 = vmatmul.mubr.bf16.gmra.mrb[0].mxu0 %v583
      %v1038 = vpop.f32.mrb[0].mxu0
      %v1039 = vadd.f32 0.0, %v1038
      %v1040 = vpop.f32.mrb[0].mxu0
      %v1041 = vpop.f32.mrb[0].mxu0
      %v1042 = vadd.f32 0.0, %v1041
      %v1043 = vpop.f32.mrb[0].mxu0
      %1044 = vmatprep.mubr.bf16.mxu0 0
      %1045 = vmatmul.mubr.bf16.gmra.mrb[0].mxu0 %v584
      %v1046 = vpop.f32.mrb[0].mxu0
      %v1047 = vadd.f32 0.0, %v1046
      %v1048 = vpop.f32.mrb[0].mxu0
      %v1049 = vpop.f32.mrb[0].mxu0
      %v1050 = vadd.f32 0.0, %v1049
      %v1051 = vpop.f32.mrb[0].mxu0
      %1052 = vmatprep.mubr.bf16.mxu0 0
      %1053 = vmatmul.mubr.bf16.gmra.mrb[0].mxu0 %v585
      %v1054 = vpop.f32.mrb[0].mxu0
      %v1055 = vadd.f32 0.0, %v1054
      %v1056 = vpop.f32.mrb[0].mxu0
      %v1057 = vpop.f32.mrb[0].mxu0
      %v1058 = vadd.f32 0.0, %v1057
      %v1059 = vpop.f32.mrb[0].mxu0
      %1060 = vmatprep.mubr.bf16.mxu0 0
      %1061 = vmatmul.mubr.bf16.gmra.mrb[0].mxu0 %v586
      %v1062 = vpop.f32.mrb[0].mxu0
      %v1063 = vadd.f32 0.0, %v1062
      %v1064 = vpop.f32.mrb[0].mxu0
      %v1065 = vpop.f32.mrb[0].mxu0
      %v1066 = vadd.f32 0.0, %v1065
      %v1067 = vpop.f32.mrb[0].mxu0
      %1068 = vmatprep.mubr.bf16.mxu0 0
      %1069 = vmatmul.mubr.bf16.gmra.mrb[0].mxu0 %v587
      %v1070 = vpop.f32.mrb[0].mxu0
      %v1071 = vadd.f32 0.0, %v1070
      %v1072 = vpop.f32.mrb[0].mxu0
      %v1073 = vpop.f32.mrb[0].mxu0
      %v1074 = vadd.f32 0.0, %v1073
      %v1075 = vpop.f32.mrb[0].mxu0
      %1076 = vmatprep.mubr.bf16.mxu0 0
      %1077 = vmatmul.mubr.bf16.gmra.mrb[0].mxu0 %v588
      %v1078 = vpop.f32.mrb[0].mxu0
      %v1079 = vadd.f32 0.0, %v1078
      %v1080 = vpop.f32.mrb[0].mxu0
      %v1081 = vpop.f32.mrb[0].mxu0
      %v1082 = vadd.f32 0.0, %v1081
      %v1083 = vpop.f32.mrb[0].mxu0
      %1084 = vmatprep.mubr.bf16.mxu0 0
      %1085 = vmatmul.mubr.bf16.gmra.mrb[0].mxu0 %v589
      %v1086 = vpop.f32.mrb[0].mxu0
      %v1087 = vadd.f32 0.0, %v1086
      %v1088 = vpop.f32.mrb[0].mxu0
      %v1089 = vpop.f32.mrb[0].mxu0
      %v1090 = vadd.f32 0.0, %v1089
      %v1091 = vpop.f32.mrb[0].mxu0
      %1092 = vmatprep.mubr.bf16.mxu0 0
      %1093 = vmatmul.mubr.bf16.gmra.mrb[0].mxu0 %v590
      %v1094 = vpop.f32.mrb[0].mxu0
      %v1095 = vadd.f32 0.0, %v1094
      %v1096 = vpop.f32.mrb[0].mxu0
      %v1097 = vpop.f32.mrb[0].mxu0
      %v1098 = vadd.f32 0.0, %v1097
      %v1099 = vpop.f32.mrb[0].mxu0
      %1100 = vmatprep.mubr.bf16.mxu0 0
      %1101 = vmatmul.mubr.bf16.gmra.mrb[0].mxu0 %v591
      %v1102 = vpop.f32.mrb[0].mxu0
      %v1103 = vadd.f32 0.0, %v1102
      %v1104 = vpop.f32.mrb[0].mxu0
      %v1105 = vpop.f32.mrb[0].mxu0
      %v1106 = vadd.f32 0.0, %v1105
      %v1107 = vpop.f32.mrb[0].mxu0
      %1108 = vmatprep.mubr.bf16.mxu0 0
      %1109 = vmatmul.mubr.bf16.gmra.mrb[0].mxu0 %v592
      %v1110 = vpop.f32.mrb[0].mxu0
      %v1111 = vadd.f32 0.0, %v1110
      %v1112 = vpop.f32.mrb[0].mxu0
      %v1113 = vpop.f32.mrb[0].mxu0
      %v1114 = vadd.f32 0.0, %v1113
      %v1115 = vpop.f32.mrb[0].mxu0
      %1116 = vmatprep.mubr.bf16.mxu0 0
      %1117 = vmatmul.mubr.bf16.gmra.mrb[0].mxu0 %v593
      %v1118 = vpop.f32.mrb[0].mxu0
      %v1119 = vadd.f32 0.0, %v1118
      %v1120 = vpop.f32.mrb[0].mxu0
      %v1121 = vpop.f32.mrb[0].mxu0
      %v1122 = vadd.f32 0.0, %v1121
      %v1123 = vpop.f32.mrb[0].mxu0
      %1124 = vmatprep.mubr.bf16.mxu0 0
      %1125 = vmatmul.mubr.bf16.gmra.mrb[0].mxu0 %v594
      %v1126 = vpop.f32.mrb[0].mxu0
      %v1127 = vadd.f32 0.0, %v1126
      %v1128 = vpop.f32.mrb[0].mxu0
      %v1129 = vpop.f32.mrb[0].mxu0
      %v1130 = vadd.f32 0.0, %v1129
      %v1131 = vpop.f32.mrb[0].mxu0
      %1132 = vmatprep.mubr.bf16.mxu0 0
      %1133 = vmatmul.mubr.bf16.gmra.mrb[0].mxu0 %v595
      %v1134 = vpop.f32.mrb[0].mxu0
      %v1135 = vadd.f32 0.0, %v1134
      %v1136 = vpop.f32.mrb[0].mxu0
      %v1137 = vpop.f32.mrb[0].mxu0
      %v1138 = vadd.f32 0.0, %v1137
      %v1139 = vpop.f32.mrb[0].mxu0
      %1140 = vmatprep.mubr.bf16.mxu0 0
      %1141 = vmatmul.mubr.bf16.gmra.mrb[0].mxu0 %v596
      %v1142 = vpop.f32.mrb[0].mxu0
      %v1143 = vadd.f32 0.0, %v1142
      %v1144 = vpop.f32.mrb[0].mxu0
      %v1145 = vpop.f32.mrb[0].mxu0
      %v1146 = vadd.f32 0.0, %v1145
      %v1147 = vpop.f32.mrb[0].mxu0
      %1148 = vmatprep.mubr.bf16.mxu0 0
      %1149 = vmatmul.mubr.bf16.gmra.mrb[0].mxu0 %v597
      %v1150 = vpop.f32.mrb[0].mxu0
      %v1151 = vadd.f32 0.0, %v1150
      %v1152 = vpop.f32.mrb[0].mxu0
      %v1153 = vpop.f32.mrb[0].mxu0
      %v1154 = vadd.f32 0.0, %v1153
      %v1155 = vpop.f32.mrb[0].mxu0
      %1156 = vmatprep.mubr.bf16.mxu0 0
      %1157 = vmatmul.mubr.bf16.gmra.mrb[0].mxu0 %v598
      %v1158 = vpop.f32.mrb[0].mxu0
      %v1159 = vadd.f32 0.0, %v1158
      %v1160 = vpop.f32.mrb[0].mxu0
      %v1161 = vpop.f32.mrb[0].mxu0
      %v1162 = vadd.f32 0.0, %v1161
      %v1163 = vpop.f32.mrb[0].mxu0
      %1164 = vmatprep.mubr.bf16.mxu0 0
      %1165 = vmatmul.mubr.bf16.gmra.mrb[0].mxu0 %v599
      %v1166 = vpop.f32.mrb[0].mxu0
      %v1167 = vadd.f32 0.0, %v1166
      %v1168 = vpop.f32.mrb[0].mxu0
      %v1169 = vpop.f32.mrb[0].mxu0
      %v1170 = vadd.f32 0.0, %v1169
      %v1171 = vpop.f32.mrb[0].mxu0
      %1172 = vmatprep.mubr.bf16.mxu0 0
      %1173 = vmatmul.mubr.bf16.gmra.mrb[0].mxu0 %v600
      %v1174 = vpop.f32.mrb[0].mxu0
      %v1175 = vadd.f32 0.0, %v1174
      %v1176 = vpop.f32.mrb[0].mxu0
      %v1177 = vpop.f32.mrb[0].mxu0
      %v1178 = vadd.f32 0.0, %v1177
      %v1179 = vpop.f32.mrb[0].mxu0
      %1180 = vmatprep.mubr.bf16.mxu0 0
      %1181 = vmatmul.mubr.bf16.gmra.mrb[0].mxu0 %v601
      %v1182 = vpop.f32.mrb[0].mxu0
      %v1183 = vadd.f32 0.0, %v1182
      %v1184 = vpop.f32.mrb[0].mxu0
      %v1185 = vpop.f32.mrb[0].mxu0
      %v1186 = vadd.f32 0.0, %v1185
      %v1187 = vpop.f32.mrb[0].mxu0
      %1188 = vmatprep.mubr.bf16.mxu0 0
      %1189 = vmatmul.mubr.bf16.gmra.mrb[0].mxu0 %v602
      %v1190 = vpop.f32.mrb[0].mxu0
      %v1191 = vadd.f32 0.0, %v1190
      %v1192 = vpop.f32.mrb[0].mxu0
      %v1193 = vpop.f32.mrb[0].mxu0
      %v1194 = vadd.f32 0.0, %v1193
      %v1195 = vpop.f32.mrb[0].mxu0
      %1196 = vmatprep.mubr.bf16.mxu0 0
      %1197 = vmatmul.mubr.bf16.gmra.mrb[0].mxu0 %v603
      %v1198 = vpop.f32.mrb[0].mxu0
      %v1199 = vadd.f32 0.0, %v1198
      %v1200 = vpop.f32.mrb[0].mxu0
      %v1201 = vpop.f32.mrb[0].mxu0
      %v1202 = vadd.f32 0.0, %v1201
      %v1203 = vpop.f32.mrb[0].mxu0
      %1204 = vmatprep.mubr.bf16.mxu0 0
      %1205 = vmatmul.mubr.bf16.gmra.mrb[0].mxu0 %v604
      %v1206 = vpop.f32.mrb[0].mxu0
      %v1207 = vadd.f32 0.0, %v1206
      %v1208 = vpop.f32.mrb[0].mxu0
      %v1209 = vpop.f32.mrb[0].mxu0
      %v1210 = vadd.f32 0.0, %v1209
      %v1211 = vpop.f32.mrb[0].mxu0
      %1212 = vmatprep.mubr.bf16.mxu0 0
      %1213 = vmatmul.mubr.bf16.gmra.mrb[0].mxu0 %v605
      %v1214 = vpop.f32.mrb[0].mxu0
      %v1215 = vadd.f32 0.0, %v1214
      %v1216 = vpop.f32.mrb[0].mxu0
      %v1217 = vpop.f32.mrb[0].mxu0
      %v1218 = vadd.f32 0.0, %v1217
      %v1219 = vpop.f32.mrb[0].mxu0
      %1220 = vmatprep.mubr.bf16.mxu0 0
      %1221 = vmatmul.mubr.bf16.gmra.mrb[0].mxu0 %v606
      %v1222 = vpop.f32.mrb[0].mxu0
      %v1223 = vadd.f32 0.0, %v1222
      %v1224 = vpop.f32.mrb[0].mxu0
      %v1225 = vpop.f32.mrb[0].mxu0
      %v1226 = vadd.f32 0.0, %v1225
      %v1227 = vpop.f32.mrb[0].mxu0
      %1228 = vmatprep.mubr.bf16.mxu0 0
      %1229 = vmatmul.mubr.bf16.gmra.mrb[0].mxu0 %v607
      %v1230 = vpop.f32.mrb[0].mxu0
      %v1231 = vadd.f32 0.0, %v1230
      %v1232 = vpop.f32.mrb[0].mxu0
      %v1233 = vpop.f32.mrb[0].mxu0
      %v1234 = vadd.f32 0.0, %v1233
      %v1235 = vpop.f32.mrb[0].mxu0
      %1236 = vmatprep.mubr.bf16.mxu0 0
      %1237 = vmatmul.mubr.bf16.gmra.mrb[0].mxu0 %v608
      %v1238 = vpop.f32.mrb[0].mxu0
      %v1239 = vadd.f32 0.0, %v1238
      %v1240 = vpop.f32.mrb[0].mxu0
      %v1241 = vpop.f32.mrb[0].mxu0
      %v1242 = vadd.f32 0.0, %v1241
      %v1243 = vpop.f32.mrb[0].mxu0
      %1244 = vmatprep.mubr.bf16.mxu0 0
      %1245 = vmatmul.mubr.bf16.gmra.mrb[0].mxu0 %v609
      %v1246 = vpop.f32.mrb[0].mxu0
      %v1247 = vadd.f32 0.0, %v1246
      %v1248 = vpop.f32.mrb[0].mxu0
      %v1249 = vpop.f32.mrb[0].mxu0
      %v1250 = vadd.f32 0.0, %v1249
      %v1251 = vpop.f32.mrb[0].mxu0
      %1252 = vmatprep.mubr.bf16.mxu0 0
      %1253 = vmatmul.mubr.bf16.gmra.mrb[0].mxu0 %v610
      %v1254 = vpop.f32.mrb[0].mxu0
      %v1255 = vadd.f32 0.0, %v1254
      %v1256 = vpop.f32.mrb[0].mxu0
      %v1257 = vpop.f32.mrb[0].mxu0
      %v1258 = vadd.f32 0.0, %v1257
      %v1259 = vpop.f32.mrb[0].mxu0
      %1260 = vmatprep.mubr.bf16.mxu0 0
      %1261 = vmatmul.mubr.bf16.gmra.mrb[0].mxu0 %v611
      %v1262 = vpop.f32.mrb[0].mxu0
      %v1263 = vadd.f32 0.0, %v1262
      %v1264 = vpop.f32.mrb[0].mxu0
      %v1265 = vpop.f32.mrb[0].mxu0
      %v1266 = vadd.f32 0.0, %v1265
      %v1267 = vpop.f32.mrb[0].mxu0
      %1268 = vdwg.mxu0
      %vm1269 = vcmp.ge.f32.partialorder %v759, 0.0
      %vm1270 = vcmp.ge.f32.partialorder %v762, 0.0
      %vm1271 = vcmp.ge.f32.partialorder %v767, 0.0
      %vm1272 = vcmp.ge.f32.partialorder %v770, 0.0
      %vm1273 = vcmp.ge.f32.partialorder %v775, 0.0
      %vm1274 = vcmp.ge.f32.partialorder %v778, 0.0
      %vm1275 = vcmp.ge.f32.partialorder %v783, 0.0
      %vm1276 = vcmp.ge.f32.partialorder %v786, 0.0
      %vm1277 = vcmp.ge.f32.partialorder %v791, 0.0
      %vm1278 = vcmp.ge.f32.partialorder %v794, 0.0
      %vm1279 = vcmp.ge.f32.partialorder %v799, 0.0
      %vm1280 = vcmp.ge.f32.partialorder %v802, 0.0
      %vm1281 = vcmp.ge.f32.partialorder %v807, 0.0
      %vm1282 = vcmp.ge.f32.partialorder %v810, 0.0
      %vm1283 = vcmp.ge.f32.partialorder %v815, 0.0
      %vm1284 = vcmp.ge.f32.partialorder %v818, 0.0
      %vm1285 = vcmp.ge.f32.partialorder %v823, 0.0
      %vm1286 = vcmp.ge.f32.partialorder %v826, 0.0
      %vm1287 = vcmp.ge.f32.partialorder %v831, 0.0
      %vm1288 = vcmp.ge.f32.partialorder %v834, 0.0
      %vm1289 = vcmp.ge.f32.partialorder %v839, 0.0
      %vm1290 = vcmp.ge.f32.partialorder %v842, 0.0
      %vm1291 = vcmp.ge.f32.partialorder %v847, 0.0
      %vm1292 = vcmp.ge.f32.partialorder %v850, 0.0
      %vm1293 = vcmp.ge.f32.partialorder %v855, 0.0
      %vm1294 = vcmp.ge.f32.partialorder %v858, 0.0
      %vm1295 = vcmp.ge.f32.partialorder %v863, 0.0
      %vm1296 = vcmp.ge.f32.partialorder %v866, 0.0
      %vm1297 = vcmp.ge.f32.partialorder %v871, 0.0
      %vm1298 = vcmp.ge.f32.partialorder %v874, 0.0
      %vm1299 = vcmp.ge.f32.partialorder %v879, 0.0
      %vm1300 = vcmp.ge.f32.partialorder %v882, 0.0
      %vm1301 = vcmp.ge.f32.partialorder %v887, 0.0
      %vm1302 = vcmp.ge.f32.partialorder %v890, 0.0
      %vm1303 = vcmp.ge.f32.partialorder %v895, 0.0
      %vm1304 = vcmp.ge.f32.partialorder %v898, 0.0
      %vm1305 = vcmp.ge.f32.partialorder %v903, 0.0
      %vm1306 = vcmp.ge.f32.partialorder %v906, 0.0
      %vm1307 = vcmp.ge.f32.partialorder %v911, 0.0
      %vm1308 = vcmp.ge.f32.partialorder %v914, 0.0
      %vm1309 = vcmp.ge.f32.partialorder %v919, 0.0
      %vm1310 = vcmp.ge.f32.partialorder %v922, 0.0
      %vm1311 = vcmp.ge.f32.partialorder %v927, 0.0
      %vm1312 = vcmp.ge.f32.partialorder %v930, 0.0
      %vm1313 = vcmp.ge.f32.partialorder %v935, 0.0
      %vm1314 = vcmp.ge.f32.partialorder %v938, 0.0
      %vm1315 = vcmp.ge.f32.partialorder %v943, 0.0
      %vm1316 = vcmp.ge.f32.partialorder %v946, 0.0
      %vm1317 = vcmp.ge.f32.partialorder %v951, 0.0
      %vm1318 = vcmp.ge.f32.partialorder %v954, 0.0
      %vm1319 = vcmp.ge.f32.partialorder %v959, 0.0
      %vm1320 = vcmp.ge.f32.partialorder %v962, 0.0
      %vm1321 = vcmp.ge.f32.partialorder %v967, 0.0
      %vm1322 = vcmp.ge.f32.partialorder %v970, 0.0
      %vm1323 = vcmp.ge.f32.partialorder %v975, 0.0
      %vm1324 = vcmp.ge.f32.partialorder %v978, 0.0
      %vm1325 = vcmp.ge.f32.partialorder %v983, 0.0
      %vm1326 = vcmp.ge.f32.partialorder %v986, 0.0
      %vm1327 = vcmp.ge.f32.partialorder %v991, 0.0
      %vm1328 = vcmp.ge.f32.partialorder %v994, 0.0
      %vm1329 = vcmp.ge.f32.partialorder %v999, 0.0
      %vm1330 = vcmp.ge.f32.partialorder %v1002, 0.0
      %vm1331 = vcmp.ge.f32.partialorder %v1007, 0.0
      %vm1332 = vcmp.ge.f32.partialorder %v1010, 0.0
      %vm1333 = vcmp.ge.f32.partialorder %v1015, 0.0
      %vm1334 = vcmp.ge.f32.partialorder %v1018, 0.0
      %vm1335 = vcmp.ge.f32.partialorder %v1023, 0.0
      %vm1336 = vcmp.ge.f32.partialorder %v1026, 0.0
      %vm1337 = vcmp.ge.f32.partialorder %v1031, 0.0
      %vm1338 = vcmp.ge.f32.partialorder %v1034, 0.0
      %vm1339 = vcmp.ge.f32.partialorder %v1039, 0.0
      %vm1340 = vcmp.ge.f32.partialorder %v1042, 0.0
      %vm1341 = vcmp.ge.f32.partialorder %v1047, 0.0
      %vm1342 = vcmp.ge.f32.partialorder %v1050, 0.0
      %vm1343 = vcmp.ge.f32.partialorder %v1055, 0.0
      %vm1344 = vcmp.ge.f32.partialorder %v1058, 0.0
      %vm1345 = vcmp.ge.f32.partialorder %v1063, 0.0
      %vm1346 = vcmp.ge.f32.partialorder %v1066, 0.0
      %vm1347 = vcmp.ge.f32.partialorder %v1071, 0.0
      %vm1348 = vcmp.ge.f32.partialorder %v1074, 0.0
      %vm1349 = vcmp.ge.f32.partialorder %v1079, 0.0
      %vm1350 = vcmp.ge.f32.partialorder %v1082, 0.0
      %vm1351 = vcmp.ge.f32.partialorder %v1087, 0.0
      %vm1352 = vcmp.ge.f32.partialorder %v1090, 0.0
      %vm1353 = vcmp.ge.f32.partialorder %v1095, 0.0
      %vm1354 = vcmp.ge.f32.partialorder %v1098, 0.0
      %vm1355 = vcmp.ge.f32.partialorder %v1103, 0.0
      %vm1356 = vcmp.ge.f32.partialorder %v1106, 0.0
      %vm1357 = vcmp.ge.f32.partialorder %v1111, 0.0
      %vm1358 = vcmp.ge.f32.partialorder %v1114, 0.0
      %vm1359 = vcmp.ge.f32.partialorder %v1119, 0.0
      %vm1360 = vcmp.ge.f32.partialorder %v1122, 0.0
      %vm1361 = vcmp.ge.f32.partialorder %v1127, 0.0
      %vm1362 = vcmp.ge.f32.partialorder %v1130, 0.0
      %vm1363 = vcmp.ge.f32.partialorder %v1135, 0.0
      %vm1364 = vcmp.ge.f32.partialorder %v1138, 0.0
      %vm1365 = vcmp.ge.f32.partialorder %v1143, 0.0
      %vm1366 = vcmp.ge.f32.partialorder %v1146, 0.0
      %vm1367 = vcmp.ge.f32.partialorder %v1151, 0.0
      %vm1368 = vcmp.ge.f32.partialorder %v1154, 0.0
      %vm1369 = vcmp.ge.f32.partialorder %v1159, 0.0
      %vm1370 = vcmp.ge.f32.partialorder %v1162, 0.0
      %vm1371 = vcmp.ge.f32.partialorder %v1167, 0.0
      %vm1372 = vcmp.ge.f32.partialorder %v1170, 0.0
      %vm1373 = vcmp.ge.f32.partialorder %v1175, 0.0
      %vm1374 = vcmp.ge.f32.partialorder %v1178, 0.0
      %vm1375 = vcmp.ge.f32.partialorder %v1183, 0.0
      %vm1376 = vcmp.ge.f32.partialorder %v1186, 0.0
      %vm1377 = vcmp.ge.f32.partialorder %v1191, 0.0
      %vm1378 = vcmp.ge.f32.partialorder %v1194, 0.0
      %vm1379 = vcmp.ge.f32.partialorder %v1199, 0.0
      %vm1380 = vcmp.ge.f32.partialorder %v1202, 0.0
      %vm1381 = vcmp.ge.f32.partialorder %v1207, 0.0
      %vm1382 = vcmp.ge.f32.partialorder %v1210, 0.0
      %vm1383 = vcmp.ge.f32.partialorder %v1215, 0.0
      %vm1384 = vcmp.ge.f32.partialorder %v1218, 0.0
      %vm1385 = vcmp.ge.f32.partialorder %v1223, 0.0
      %vm1386 = vcmp.ge.f32.partialorder %v1226, 0.0
      %vm1387 = vcmp.ge.f32.partialorder %v1231, 0.0
      %vm1388 = vcmp.ge.f32.partialorder %v1234, 0.0
      %vm1389 = vcmp.ge.f32.partialorder %v1239, 0.0
      %vm1390 = vcmp.ge.f32.partialorder %v1242, 0.0
      %vm1391 = vcmp.ge.f32.partialorder %v1247, 0.0
      %vm1392 = vcmp.ge.f32.partialorder %v1250, 0.0
      %vm1393 = vcmp.ge.f32.partialorder %v1255, 0.0
      %vm1394 = vcmp.ge.f32.partialorder %v1258, 0.0
      %vm1395 = vcmp.ge.f32.partialorder %v1263, 0.0
      %vm1396 = vcmp.ge.f32.partialorder %v1266, 0.0
      %v1397 = vmul.f32 %v759, 0.2
      %v1398 = vmul.f32 %v762, 0.2
      %v1399 = vmul.f32 %v767, 0.2
      %v1400 = vmul.f32 %v770, 0.2
      %v1401 = vmul.f32 %v775, 0.2
      %v1402 = vmul.f32 %v778, 0.2
      %v1403 = vmul.f32 %v783, 0.2
      %v1404 = vmul.f32 %v786, 0.2
      %v1405 = vmul.f32 %v791, 0.2
      %v1406 = vmul.f32 %v794, 0.2
      %v1407 = vmul.f32 %v799, 0.2
      %v1408 = vmul.f32 %v802, 0.2
      %v1409 = vmul.f32 %v807, 0.2
      %v1410 = vmul.f32 %v810, 0.2
      %v1411 = vmul.f32 %v815, 0.2
      %v1412 = vmul.f32 %v818, 0.2
      %v1413 = vmul.f32 %v823, 0.2
      %v1414 = vmul.f32 %v826, 0.2
      %v1415 = vmul.f32 %v831, 0.2
      %v1416 = vmul.f32 %v834, 0.2
      %v1417 = vmul.f32 %v839, 0.2
      %v1418 = vmul.f32 %v842, 0.2
      %v1419 = vmul.f32 %v847, 0.2
      %v1420 = vmul.f32 %v850, 0.2
      %v1421 = vmul.f32 %v855, 0.2
      %v1422 = vmul.f32 %v858, 0.2
      %v1423 = vmul.f32 %v863, 0.2
      %v1424 = vmul.f32 %v866, 0.2
      %v1425 = vmul.f32 %v871, 0.2
      %v1426 = vmul.f32 %v874, 0.2
      %v1427 = vmul.f32 %v879, 0.2
      %v1428 = vmul.f32 %v882, 0.2
      %v1429 = vmul.f32 %v887, 0.2
      %v1430 = vmul.f32 %v890, 0.2
      %v1431 = vmul.f32 %v895, 0.2
      %v1432 = vmul.f32 %v898, 0.2
      %v1433 = vmul.f32 %v903, 0.2
      %v1434 = vmul.f32 %v906, 0.2
      %v1435 = vmul.f32 %v911, 0.2
      %v1436 = vmul.f32 %v914, 0.2
      %v1437 = vmul.f32 %v919, 0.2
      %v1438 = vmul.f32 %v922, 0.2
      %v1439 = vmul.f32 %v927, 0.2
      %v1440 = vmul.f32 %v930, 0.2
      %v1441 = vmul.f32 %v935, 0.2
      %v1442 = vmul.f32 %v938, 0.2
      %v1443 = vmul.f32 %v943, 0.2
      %v1444 = vmul.f32 %v946, 0.2
      %v1445 = vmul.f32 %v951, 0.2
      %v1446 = vmul.f32 %v954, 0.2
      %v1447 = vmul.f32 %v959, 0.2
      %v1448 = vmul.f32 %v962, 0.2
      %v1449 = vmul.f32 %v967, 0.2
      %v1450 = vmul.f32 %v970, 0.2
      %v1451 = vmul.f32 %v975, 0.2
      %v1452 = vmul.f32 %v978, 0.2
      %v1453 = vmul.f32 %v983, 0.2
      %v1454 = vmul.f32 %v986, 0.2
      %v1455 = vmul.f32 %v991, 0.2
      %v1456 = vmul.f32 %v994, 0.2
      %v1457 = vmul.f32 %v999, 0.2
      %v1458 = vmul.f32 %v1002, 0.2
      %v1459 = vmul.f32 %v1007, 0.2
      %v1460 = vmul.f32 %v1010, 0.2
      %v1461 = vmul.f32 %v1015, 0.2
      %v1462 = vmul.f32 %v1018, 0.2
      %v1463 = vmul.f32 %v1023, 0.2
      %v1464 = vmul.f32 %v1026, 0.2
      %v1465 = vmul.f32 %v1031, 0.2
      %v1466 = vmul.f32 %v1034, 0.2
      %v1467 = vmul.f32 %v1039, 0.2
      %v1468 = vmul.f32 %v1042, 0.2
      %v1469 = vmul.f32 %v1047, 0.2
      %v1470 = vmul.f32 %v1050, 0.2
      %v1471 = vmul.f32 %v1055, 0.2
      %v1472 = vmul.f32 %v1058, 0.2
      %v1473 = vmul.f32 %v1063, 0.2
      %v1474 = vmul.f32 %v1066, 0.2
      %v1475 = vmul.f32 %v1071, 0.2
      %v1476 = vmul.f32 %v1074, 0.2
      %v1477 = vmul.f32 %v1079, 0.2
      %v1478 = vmul.f32 %v1082, 0.2
      %v1479 = vmul.f32 %v1087, 0.2
      %v1480 = vmul.f32 %v1090, 0.2
      %v1481 = vmul.f32 %v1095, 0.2
      %v1482 = vmul.f32 %v1098, 0.2
      %v1483 = vmul.f32 %v1103, 0.2
      %v1484 = vmul.f32 %v1106, 0.2
      %v1485 = vmul.f32 %v1111, 0.2
      %v1486 = vmul.f32 %v1114, 0.2
      %v1487 = vmul.f32 %v1119, 0.2
      %v1488 = vmul.f32 %v1122, 0.2
      %v1489 = vmul.f32 %v1127, 0.2
      %v1490 = vmul.f32 %v1130, 0.2
      %v1491 = vmul.f32 %v1135, 0.2
      %v1492 = vmul.f32 %v1138, 0.2
      %v1493 = vmul.f32 %v1143, 0.2
      %v1494 = vmul.f32 %v1146, 0.2
      %v1495 = vmul.f32 %v1151, 0.2
      %v1496 = vmul.f32 %v1154, 0.2
      %v1497 = vmul.f32 %v1159, 0.2
      %v1498 = vmul.f32 %v1162, 0.2
      %v1499 = vmul.f32 %v1167, 0.2
      %v1500 = vmul.f32 %v1170, 0.2
      %v1501 = vmul.f32 %v1175, 0.2
      %v1502 = vmul.f32 %v1178, 0.2
      %v1503 = vmul.f32 %v1183, 0.2
      %v1504 = vmul.f32 %v1186, 0.2
      %v1505 = vmul.f32 %v1191, 0.2
      %v1506 = vmul.f32 %v1194, 0.2
      %v1507 = vmul.f32 %v1199, 0.2
      %v1508 = vmul.f32 %v1202, 0.2
      %v1509 = vmul.f32 %v1207, 0.2
      %v1510 = vmul.f32 %v1210, 0.2
      %v1511 = vmul.f32 %v1215, 0.2
      %v1512 = vmul.f32 %v1218, 0.2
      %v1513 = vmul.f32 %v1223, 0.2
      %v1514 = vmul.f32 %v1226, 0.2
      %v1515 = vmul.f32 %v1231, 0.2
      %v1516 = vmul.f32 %v1234, 0.2
      %v1517 = vmul.f32 %v1239, 0.2
      %v1518 = vmul.f32 %v1242, 0.2
      %v1519 = vmul.f32 %v1247, 0.2
      %v1520 = vmul.f32 %v1250, 0.2
      %v1521 = vmul.f32 %v1255, 0.2
      %v1522 = vmul.f32 %v1258, 0.2
      %v1523 = vmul.f32 %v1263, 0.2
      %v1524 = vmul.f32 %v1266, 0.2
      %v1525 = vsel %vm1269, %v759, %v1397
      %v1526 = vsel %vm1270, %v762, %v1398
      %v1527 = vsel %vm1271, %v767, %v1399
      %v1528 = vsel %vm1272, %v770, %v1400
      %v1529 = vsel %vm1273, %v775, %v1401
      %v1530 = vsel %vm1274, %v778, %v1402
      %v1531 = vsel %vm1275, %v783, %v1403
      %v1532 = vsel %vm1276, %v786, %v1404
      %v1533 = vsel %vm1277, %v791, %v1405
      %v1534 = vsel %vm1278, %v794, %v1406
      %v1535 = vsel %vm1279, %v799, %v1407
      %v1536 = vsel %vm1280, %v802, %v1408
      %v1537 = vsel %vm1281, %v807, %v1409
      %v1538 = vsel %vm1282, %v810, %v1410
      %v1539 = vsel %vm1283, %v815, %v1411
      %v1540 = vsel %vm1284, %v818, %v1412
      %v1541 = vsel %vm1285, %v823, %v1413
      %v1542 = vsel %vm1286, %v826, %v1414
      %v1543 = vsel %vm1287, %v831, %v1415
      %v1544 = vsel %vm1288, %v834, %v1416
      %v1545 = vsel %vm1289, %v839, %v1417
      %v1546 = vsel %vm1290, %v842, %v1418
      %v1547 = vsel %vm1291, %v847, %v1419
      %v1548 = vsel %vm1292, %v850, %v1420
      %v1549 = vsel %vm1293, %v855, %v1421
      %v1550 = vsel %vm1294, %v858, %v1422
      %v1551 = vsel %vm1295, %v863, %v1423
      %v1552 = vsel %vm1296, %v866, %v1424
      %v1553 = vsel %vm1297, %v871, %v1425
      %v1554 = vsel %vm1298, %v874, %v1426
      %v1555 = vsel %vm1299, %v879, %v1427
      %v1556 = vsel %vm1300, %v882, %v1428
      %v1557 = vsel %vm1301, %v887, %v1429
      %v1558 = vsel %vm1302, %v890, %v1430
      %v1559 = vsel %vm1303, %v895, %v1431
      %v1560 = vsel %vm1304, %v898, %v1432
      %v1561 = vsel %vm1305, %v903, %v1433
      %v1562 = vsel %vm1306, %v906, %v1434
      %v1563 = vsel %vm1307, %v911, %v1435
      %v1564 = vsel %vm1308, %v914, %v1436
      %v1565 = vsel %vm1309, %v919, %v1437
      %v1566 = vsel %vm1310, %v922, %v1438
      %v1567 = vsel %vm1311, %v927, %v1439
      %v1568 = vsel %vm1312, %v930, %v1440
      %v1569 = vsel %vm1313, %v935, %v1441
      %v1570 = vsel %vm1314, %v938, %v1442
      %v1571 = vsel %vm1315, %v943, %v1443
      %v1572 = vsel %vm1316, %v946, %v1444
      %v1573 = vsel %vm1317, %v951, %v1445
      %v1574 = vsel %vm1318, %v954, %v1446
      %v1575 = vsel %vm1319, %v959, %v1447
      %v1576 = vsel %vm1320, %v962, %v1448
      %v1577 = vsel %vm1321, %v967, %v1449
      %v1578 = vsel %vm1322, %v970, %v1450
      %v1579 = vsel %vm1323, %v975, %v1451
      %v1580 = vsel %vm1324, %v978, %v1452
      %v1581 = vsel %vm1325, %v983, %v1453
      %v1582 = vsel %vm1326, %v986, %v1454
      %v1583 = vsel %vm1327, %v991, %v1455
      %v1584 = vsel %vm1328, %v994, %v1456
      %v1585 = vsel %vm1329, %v999, %v1457
      %v1586 = vsel %vm1330, %v1002, %v1458
      %v1587 = vsel %vm1331, %v1007, %v1459
      %v1588 = vsel %vm1332, %v1010, %v1460
      %v1589 = vsel %vm1333, %v1015, %v1461
      %v1590 = vsel %vm1334, %v1018, %v1462
      %v1591 = vsel %vm1335, %v1023, %v1463
      %v1592 = vsel %vm1336, %v1026, %v1464
      %v1593 = vsel %vm1337, %v1031, %v1465
      %v1594 = vsel %vm1338, %v1034, %v1466
      %v1595 = vsel %vm1339, %v1039, %v1467
      %v1596 = vsel %vm1340, %v1042, %v1468
      %v1597 = vsel %vm1341, %v1047, %v1469
      %v1598 = vsel %vm1342, %v1050, %v1470
      %v1599 = vsel %vm1343, %v1055, %v1471
      %v1600 = vsel %vm1344, %v1058, %v1472
      %v1601 = vsel %vm1345, %v1063, %v1473
      %v1602 = vsel %vm1346, %v1066, %v1474
      %v1603 = vsel %vm1347, %v1071, %v1475
      %v1604 = vsel %vm1348, %v1074, %v1476
      %v1605 = vsel %vm1349, %v1079, %v1477
      %v1606 = vsel %vm1350, %v1082, %v1478
      %v1607 = vsel %vm1351, %v1087, %v1479
      %v1608 = vsel %vm1352, %v1090, %v1480
      %v1609 = vsel %vm1353, %v1095, %v1481
      %v1610 = vsel %vm1354, %v1098, %v1482
      %v1611 = vsel %vm1355, %v1103, %v1483
      %v1612 = vsel %vm1356, %v1106, %v1484
      %v1613 = vsel %vm1357, %v1111, %v1485
      %v1614 = vsel %vm1358, %v1114, %v1486
      %v1615 = vsel %vm1359, %v1119, %v1487
      %v1616 = vsel %vm1360, %v1122, %v1488
      %v1617 = vsel %vm1361, %v1127, %v1489
      %v1618 = vsel %vm1362, %v1130, %v1490
      %v1619 = vsel %vm1363, %v1135, %v1491
      %v1620 = vsel %vm1364, %v1138, %v1492
      %v1621 = vsel %vm1365, %v1143, %v1493
      %v1622 = vsel %vm1366, %v1146, %v1494
      %v1623 = vsel %vm1367, %v1151, %v1495
      %v1624 = vsel %vm1368, %v1154, %v1496
      %v1625 = vsel %vm1369, %v1159, %v1497
      %v1626 = vsel %vm1370, %v1162, %v1498
      %v1627 = vsel %vm1371, %v1167, %v1499
      %v1628 = vsel %vm1372, %v1170, %v1500
      %v1629 = vsel %vm1373, %v1175, %v1501
      %v1630 = vsel %vm1374, %v1178, %v1502
      %v1631 = vsel %vm1375, %v1183, %v1503
      %v1632 = vsel %vm1376, %v1186, %v1504
      %v1633 = vsel %vm1377, %v1191, %v1505
      %v1634 = vsel %vm1378, %v1194, %v1506
      %v1635 = vsel %vm1379, %v1199, %v1507
      %v1636 = vsel %vm1380, %v1202, %v1508
      %v1637 = vsel %vm1381, %v1207, %v1509
      %v1638 = vsel %vm1382, %v1210, %v1510
      %v1639 = vsel %vm1383, %v1215, %v1511
      %v1640 = vsel %vm1384, %v1218, %v1512
      %v1641 = vsel %vm1385, %v1223, %v1513
      %v1642 = vsel %vm1386, %v1226, %v1514
      %v1643 = vsel %vm1387, %v1231, %v1515
      %v1644 = vsel %vm1388, %v1234, %v1516
      %v1645 = vsel %vm1389, %v1239, %v1517
      %v1646 = vsel %vm1390, %v1242, %v1518
      %v1647 = vsel %vm1391, %v1247, %v1519
      %v1648 = vsel %vm1392, %v1250, %v1520
      %v1649 = vsel %vm1393, %v1255, %v1521
      %v1650 = vsel %vm1394, %v1258, %v1522
      %v1651 = vsel %vm1395, %v1263, %v1523
      %v1652 = vsel %vm1396, %v1266, %v1524
      %v1653 = vpack.c.bf16 %v1526, %v1525
      %v1654 = vpack.c.bf16 %v1528, %v1527
      %v1655 = vpack.c.bf16 %v1530, %v1529
      %v1656 = vpack.c.bf16 %v1532, %v1531
      %v1657 = vpack.c.bf16 %v1534, %v1533
      %v1658 = vpack.c.bf16 %v1536, %v1535
      %v1659 = vpack.c.bf16 %v1538, %v1537
      %v1660 = vpack.c.bf16 %v1540, %v1539
      %v1661 = vpack.c.bf16 %v1542, %v1541
      %v1662 = vpack.c.bf16 %v1544, %v1543
      %v1663 = vpack.c.bf16 %v1546, %v1545
      %v1664 = vpack.c.bf16 %v1548, %v1547
      %v1665 = vpack.c.bf16 %v1550, %v1549
      %v1666 = vpack.c.bf16 %v1552, %v1551
      %v1667 = vpack.c.bf16 %v1554, %v1553
      %v1668 = vpack.c.bf16 %v1556, %v1555
      %v1669 = vpack.c.bf16 %v1558, %v1557
      %v1670 = vpack.c.bf16 %v1560, %v1559
      %v1671 = vpack.c.bf16 %v1562, %v1561
      %v1672 = vpack.c.bf16 %v1564, %v1563
      %v1673 = vpack.c.bf16 %v1566, %v1565
      %v1674 = vpack.c.bf16 %v1568, %v1567
      %v1675 = vpack.c.bf16 %v1570, %v1569
      %v1676 = vpack.c.bf16 %v1572, %v1571
      %v1677 = vpack.c.bf16 %v1574, %v1573
      %v1678 = vpack.c.bf16 %v1576, %v1575
      %v1679 = vpack.c.bf16 %v1578, %v1577
      %v1680 = vpack.c.bf16 %v1580, %v1579
      %v1681 = vpack.c.bf16 %v1582, %v1581
      %v1682 = vpack.c.bf16 %v1584, %v1583
      %v1683 = vpack.c.bf16 %v1586, %v1585
      %v1684 = vpack.c.bf16 %v1588, %v1587
      %v1685 = vpack.c.bf16 %v1590, %v1589
      %v1686 = vpack.c.bf16 %v1592, %v1591
      %v1687 = vpack.c.bf16 %v1594, %v1593
      %v1688 = vpack.c.bf16 %v1596, %v1595
      %v1689 = vpack.c.bf16 %v1598, %v1597
      %v1690 = vpack.c.bf16 %v1600, %v1599
      %v1691 = vpack.c.bf16 %v1602, %v1601
      %v1692 = vpack.c.bf16 %v1604, %v1603
      %v1693 = vpack.c.bf16 %v1606, %v1605
      %v1694 = vpack.c.bf16 %v1608, %v1607
      %v1695 = vpack.c.bf16 %v1610, %v1609
      %v1696 = vpack.c.bf16 %v1612, %v1611
      %v1697 = vpack.c.bf16 %v1614, %v1613
      %v1698 = vpack.c.bf16 %v1616, %v1615
      %v1699 = vpack.c.bf16 %v1618, %v1617
      %v1700 = vpack.c.bf16 %v1620, %v1619
      %v1701 = vpack.c.bf16 %v1622, %v1621
      %v1702 = vpack.c.bf16 %v1624, %v1623
      %v1703 = vpack.c.bf16 %v1626, %v1625
      %v1704 = vpack.c.bf16 %v1628, %v1627
      %v1705 = vpack.c.bf16 %v1630, %v1629
      %v1706 = vpack.c.bf16 %v1632, %v1631
      %v1707 = vpack.c.bf16 %v1634, %v1633
      %v1708 = vpack.c.bf16 %v1636, %v1635
      %v1709 = vpack.c.bf16 %v1638, %v1637
      %v1710 = vpack.c.bf16 %v1640, %v1639
      %v1711 = vpack.c.bf16 %v1642, %v1641
      %v1712 = vpack.c.bf16 %v1644, %v1643
      %v1713 = vpack.c.bf16 %v1646, %v1645
      %v1714 = vpack.c.bf16 %v1648, %v1647
      %v1715 = vpack.c.bf16 %v1650, %v1649
      %v1716 = vpack.c.bf16 %v1652, %v1651
      %v1781 = vunpack.c.l.b16 %v1653
      %v1782 = vunpack.c.h.b16 %v1653
      %v1783 = vunpack.c.l.b16 %v1654
      %v1784 = vunpack.c.h.b16 %v1654
      %v1785 = vunpack.c.l.b16 %v1655
      %v1786 = vunpack.c.h.b16 %v1655
      %v1787 = vunpack.c.l.b16 %v1656
      %v1788 = vunpack.c.h.b16 %v1656
      %v1789 = vunpack.c.l.b16 %v1657
      %v1790 = vunpack.c.h.b16 %v1657
      %v1791 = vunpack.c.l.b16 %v1658
      %v1792 = vunpack.c.h.b16 %v1658
      %v1793 = vunpack.c.l.b16 %v1659
      %v1794 = vunpack.c.h.b16 %v1659
      %v1795 = vunpack.c.l.b16 %v1660
      %v1796 = vunpack.c.h.b16 %v1660
      %v1797 = vunpack.c.l.b16 %v1661
      %v1798 = vunpack.c.h.b16 %v1661
      %v1799 = vunpack.c.l.b16 %v1662
      %v1800 = vunpack.c.h.b16 %v1662
      %v1801 = vunpack.c.l.b16 %v1663
      %v1802 = vunpack.c.h.b16 %v1663
      %v1803 = vunpack.c.l.b16 %v1664
      %v1804 = vunpack.c.h.b16 %v1664
      %v1805 = vunpack.c.l.b16 %v1665
      %v1806 = vunpack.c.h.b16 %v1665
      %v1807 = vunpack.c.l.b16 %v1666
      %v1808 = vunpack.c.h.b16 %v1666
      %v1809 = vunpack.c.l.b16 %v1667
      %v1810 = vunpack.c.h.b16 %v1667
      %v1811 = vunpack.c.l.b16 %v1668
      %v1812 = vunpack.c.h.b16 %v1668
      %v1813 = vunpack.c.l.b16 %v1669
      %v1814 = vunpack.c.h.b16 %v1669
      %v1815 = vunpack.c.l.b16 %v1670
      %v1816 = vunpack.c.h.b16 %v1670
      %v1817 = vunpack.c.l.b16 %v1671
      %v1818 = vunpack.c.h.b16 %v1671
      %v1819 = vunpack.c.l.b16 %v1672
      %v1820 = vunpack.c.h.b16 %v1672
      %v1821 = vunpack.c.l.b16 %v1673
      %v1822 = vunpack.c.h.b16 %v1673
      %v1823 = vunpack.c.l.b16 %v1674
      %v1824 = vunpack.c.h.b16 %v1674
      %v1825 = vunpack.c.l.b16 %v1675
      %v1826 = vunpack.c.h.b16 %v1675
      %v1827 = vunpack.c.l.b16 %v1676
      %v1828 = vunpack.c.h.b16 %v1676
      %v1829 = vunpack.c.l.b16 %v1677
      %v1830 = vunpack.c.h.b16 %v1677
      %v1831 = vunpack.c.l.b16 %v1678
      %v1832 = vunpack.c.h.b16 %v1678
      %v1833 = vunpack.c.l.b16 %v1679
      %v1834 = vunpack.c.h.b16 %v1679
      %v1835 = vunpack.c.l.b16 %v1680
      %v1836 = vunpack.c.h.b16 %v1680
      %v1837 = vunpack.c.l.b16 %v1681
      %v1838 = vunpack.c.h.b16 %v1681
      %v1839 = vunpack.c.l.b16 %v1682
      %v1840 = vunpack.c.h.b16 %v1682
      %v1841 = vunpack.c.l.b16 %v1683
      %v1842 = vunpack.c.h.b16 %v1683
      %v1843 = vunpack.c.l.b16 %v1684
      %v1844 = vunpack.c.h.b16 %v1684
      %v1845 = vunpack.c.l.b16 %v1685
      %v1846 = vunpack.c.h.b16 %v1685
      %v1847 = vunpack.c.l.b16 %v1686
      %v1848 = vunpack.c.h.b16 %v1686
      %v1849 = vunpack.c.l.b16 %v1687
      %v1850 = vunpack.c.h.b16 %v1687
      %v1851 = vunpack.c.l.b16 %v1688
      %v1852 = vunpack.c.h.b16 %v1688
      %v1853 = vunpack.c.l.b16 %v1689
      %v1854 = vunpack.c.h.b16 %v1689
      %v1855 = vunpack.c.l.b16 %v1690
      %v1856 = vunpack.c.h.b16 %v1690
      %v1857 = vunpack.c.l.b16 %v1691
      %v1858 = vunpack.c.h.b16 %v1691
      %v1859 = vunpack.c.l.b16 %v1692
      %v1860 = vunpack.c.h.b16 %v1692
      %v1861 = vunpack.c.l.b16 %v1693
      %v1862 = vunpack.c.h.b16 %v1693
      %v1863 = vunpack.c.l.b16 %v1694
      %v1864 = vunpack.c.h.b16 %v1694
      %v1865 = vunpack.c.l.b16 %v1695
      %v1866 = vunpack.c.h.b16 %v1695
      %v1867 = vunpack.c.l.b16 %v1696
      %v1868 = vunpack.c.h.b16 %v1696
      %v1869 = vunpack.c.l.b16 %v1697
      %v1870 = vunpack.c.h.b16 %v1697
      %v1871 = vunpack.c.l.b16 %v1698
      %v1872 = vunpack.c.h.b16 %v1698
      %v1873 = vunpack.c.l.b16 %v1699
      %v1874 = vunpack.c.h.b16 %v1699
      %v1875 = vunpack.c.l.b16 %v1700
      %v1876 = vunpack.c.h.b16 %v1700
      %v1877 = vunpack.c.l.b16 %v1701
      %v1878 = vunpack.c.h.b16 %v1701
      %v1879 = vunpack.c.l.b16 %v1702
      %v1880 = vunpack.c.h.b16 %v1702
      %v1881 = vunpack.c.l.b16 %v1703
      %v1882 = vunpack.c.h.b16 %v1703
      %v1883 = vunpack.c.l.b16 %v1704
      %v1884 = vunpack.c.h.b16 %v1704
      %v1885 = vunpack.c.l.b16 %v1705
      %v1886 = vunpack.c.h.b16 %v1705
      %v1887 = vunpack.c.l.b16 %v1706
      %v1888 = vunpack.c.h.b16 %v1706
      %v1889 = vunpack.c.l.b16 %v1707
      %v1890 = vunpack.c.h.b16 %v1707
      %v1891 = vunpack.c.l.b16 %v1708
      %v1892 = vunpack.c.h.b16 %v1708
      %v1893 = vunpack.c.l.b16 %v1709
      %v1894 = vunpack.c.h.b16 %v1709
      %v1895 = vunpack.c.l.b16 %v1710
      %v1896 = vunpack.c.h.b16 %v1710
      %v1897 = vunpack.c.l.b16 %v1711
      %v1898 = vunpack.c.h.b16 %v1711
      %v1899 = vunpack.c.l.b16 %v1712
      %v1900 = vunpack.c.h.b16 %v1712
      %v1901 = vunpack.c.l.b16 %v1713
      %v1902 = vunpack.c.h.b16 %v1713
      %v1903 = vunpack.c.l.b16 %v1714
      %v1904 = vunpack.c.h.b16 %v1714
      %v1905 = vunpack.c.l.b16 %v1715
      %v1906 = vunpack.c.h.b16 %v1715
      %v1907 = vunpack.c.l.b16 %v1716
      %v1908 = vunpack.c.h.b16 %v1716
      %v1909 = vpack.c.b16 %v1781, %v1781
      %v1910 = vpack.c.b16 %v1782, %v1782
      %v1911 = vpack.c.b16 %v1783, %v1783
      %v1912 = vpack.c.b16 %v1784, %v1784
      %v1913 = vpack.c.b16 %v1785, %v1785
      %v1914 = vpack.c.b16 %v1786, %v1786
      %v1915 = vpack.c.b16 %v1787, %v1787
      %v1916 = vpack.c.b16 %v1788, %v1788
      %v1917 = vpack.c.b16 %v1789, %v1789
      %v1918 = vpack.c.b16 %v1790, %v1790
      %v1919 = vpack.c.b16 %v1791, %v1791
      %v1920 = vpack.c.b16 %v1792, %v1792
      %v1921 = vpack.c.b16 %v1793, %v1793
      %v1922 = vpack.c.b16 %v1794, %v1794
      %v1923 = vpack.c.b16 %v1795, %v1795
      %v1924 = vpack.c.b16 %v1796, %v1796
      %v1925 = vpack.c.b16 %v1797, %v1797
      %v1926 = vpack.c.b16 %v1798, %v1798
      %v1927 = vpack.c.b16 %v1799, %v1799
      %v1928 = vpack.c.b16 %v1800, %v1800
      %v1929 = vpack.c.b16 %v1801, %v1801
      %v1930 = vpack.c.b16 %v1802, %v1802
      %v1931 = vpack.c.b16 %v1803, %v1803
      %v1932 = vpack.c.b16 %v1804, %v1804
      %v1933 = vpack.c.b16 %v1805, %v1805
      %v1934 = vpack.c.b16 %v1806, %v1806
      %v1935 = vpack.c.b16 %v1807, %v1807
      %v1936 = vpack.c.b16 %v1808, %v1808
      %v1937 = vpack.c.b16 %v1809, %v1809
      %v1938 = vpack.c.b16 %v1810, %v1810
      %v1939 = vpack.c.b16 %v1811, %v1811
      %v1940 = vpack.c.b16 %v1812, %v1812
      %v1941 = vpack.c.b16 %v1813, %v1813
      %v1942 = vpack.c.b16 %v1814, %v1814
      %v1943 = vpack.c.b16 %v1815, %v1815
      %v1944 = vpack.c.b16 %v1816, %v1816
      %v1945 = vpack.c.b16 %v1817, %v1817
      %v1946 = vpack.c.b16 %v1818, %v1818
      %v1947 = vpack.c.b16 %v1819, %v1819
      %v1948 = vpack.c.b16 %v1820, %v1820
      %v1949 = vpack.c.b16 %v1821, %v1821
      %v1950 = vpack.c.b16 %v1822, %v1822
      %v1951 = vpack.c.b16 %v1823, %v1823
      %v1952 = vpack.c.b16 %v1824, %v1824
      %v1953 = vpack.c.b16 %v1825, %v1825
      %v1954 = vpack.c.b16 %v1826, %v1826
      %v1955 = vpack.c.b16 %v1827, %v1827
      %v1956 = vpack.c.b16 %v1828, %v1828
      %v1957 = vpack.c.b16 %v1829, %v1829
      %v1958 = vpack.c.b16 %v1830, %v1830
      %v1959 = vpack.c.b16 %v1831, %v1831
      %v1960 = vpack.c.b16 %v1832, %v1832
      %v1961 = vpack.c.b16 %v1833, %v1833
      %v1962 = vpack.c.b16 %v1834, %v1834
      %v1963 = vpack.c.b16 %v1835, %v1835
      %v1964 = vpack.c.b16 %v1836, %v1836
      %v1965 = vpack.c.b16 %v1837, %v1837
      %v1966 = vpack.c.b16 %v1838, %v1838
      %v1967 = vpack.c.b16 %v1839, %v1839
      %v1968 = vpack.c.b16 %v1840, %v1840
      %v1969 = vpack.c.b16 %v1841, %v1841
      %v1970 = vpack.c.b16 %v1842, %v1842
      %v1971 = vpack.c.b16 %v1843, %v1843
      %v1972 = vpack.c.b16 %v1844, %v1844
      %v1973 = vpack.c.b16 %v1845, %v1845
      %v1974 = vpack.c.b16 %v1846, %v1846
      %v1975 = vpack.c.b16 %v1847, %v1847
      %v1976 = vpack.c.b16 %v1848, %v1848
      %v1977 = vpack.c.b16 %v1849, %v1849
      %v1978 = vpack.c.b16 %v1850, %v1850
      %v1979 = vpack.c.b16 %v1851, %v1851
      %v1980 = vpack.c.b16 %v1852, %v1852
      %v1981 = vpack.c.b16 %v1853, %v1853
      %v1982 = vpack.c.b16 %v1854, %v1854
      %v1983 = vpack.c.b16 %v1855, %v1855
      %v1984 = vpack.c.b16 %v1856, %v1856
      %v1985 = vpack.c.b16 %v1857, %v1857
      %v1986 = vpack.c.b16 %v1858, %v1858
      %v1987 = vpack.c.b16 %v1859, %v1859
      %v1988 = vpack.c.b16 %v1860, %v1860
      %v1989 = vpack.c.b16 %v1861, %v1861
      %v1990 = vpack.c.b16 %v1862, %v1862
      %v1991 = vpack.c.b16 %v1863, %v1863
      %v1992 = vpack.c.b16 %v1864, %v1864
      %v1993 = vpack.c.b16 %v1865, %v1865
      %v1994 = vpack.c.b16 %v1866, %v1866
      %v1995 = vpack.c.b16 %v1867, %v1867
      %v1996 = vpack.c.b16 %v1868, %v1868
      %v1997 = vpack.c.b16 %v1869, %v1869
      %v1998 = vpack.c.b16 %v1870, %v1870
      %v1999 = vpack.c.b16 %v1871, %v1871
      %v2000 = vpack.c.b16 %v1872, %v1872
      %v2001 = vpack.c.b16 %v1873, %v1873
      %v2002 = vpack.c.b16 %v1874, %v1874
      %v2003 = vpack.c.b16 %v1875, %v1875
      %v2004 = vpack.c.b16 %v1876, %v1876
      %v2005 = vpack.c.b16 %v1877, %v1877
      %v2006 = vpack.c.b16 %v1878, %v1878
      %v2007 = vpack.c.b16 %v1879, %v1879
      %v2008 = vpack.c.b16 %v1880, %v1880
      %v2009 = vpack.c.b16 %v1881, %v1881
      %v2010 = vpack.c.b16 %v1882, %v1882
      %v2011 = vpack.c.b16 %v1883, %v1883
      %v2012 = vpack.c.b16 %v1884, %v1884
      %v2013 = vpack.c.b16 %v1885, %v1885
      %v2014 = vpack.c.b16 %v1886, %v1886
      %v2015 = vpack.c.b16 %v1887, %v1887
      %v2016 = vpack.c.b16 %v1888, %v1888
      %v2017 = vpack.c.b16 %v1889, %v1889
      %v2018 = vpack.c.b16 %v1890, %v1890
      %v2019 = vpack.c.b16 %v1891, %v1891
      %v2020 = vpack.c.b16 %v1892, %v1892
      %v2021 = vpack.c.b16 %v1893, %v1893
      %v2022 = vpack.c.b16 %v1894, %v1894
      %v2023 = vpack.c.b16 %v1895, %v1895
      %v2024 = vpack.c.b16 %v1896, %v1896
      %v2025 = vpack.c.b16 %v1897, %v1897
      %v2026 = vpack.c.b16 %v1898, %v1898
      %v2027 = vpack.c.b16 %v1899, %v1899
      %v2028 = vpack.c.b16 %v1900, %v1900
      %v2029 = vpack.c.b16 %v1901, %v1901
      %v2030 = vpack.c.b16 %v1902, %v1902
      %v2031 = vpack.c.b16 %v1903, %v1903
      %v2032 = vpack.c.b16 %v1904, %v1904
      %v2033 = vpack.c.b16 %v1905, %v1905
      %v2034 = vpack.c.b16 %v1906, %v1906
      %v2035 = vpack.c.b16 %v1907, %v1907
      %v2036 = vpack.c.b16 %v1908, %v1908
      %2165 = vst [vmem:[%s145] sm:$0xf] %v1909
      %2166 = vst [vmem:[%s145 + $0x4] sm:$0xf] %v1910
      %2167 = vst [vmem:[%s145 + $0x8] sm:$0xf] %v1911
      %2168 = vst [vmem:[%s145 + $0xc] sm:$0xf] %v1912
      %2169 = vst [vmem:[%s145 + $0x10] sm:$0xf] %v1913
      %2170 = vst [vmem:[%s145 + $0x14] sm:$0xf] %v1914
      %2171 = vst [vmem:[%s145 + $0x18] sm:$0xf] %v1915
      %2172 = vst [vmem:[%s145 + $0x1c] sm:$0xf] %v1916
      %2173 = vst [vmem:[%s145 + $0x20] sm:$0xf] %v1917
      %2174 = vst [vmem:[%s145 + $0x24] sm:$0xf] %v1918
      %2175 = vst [vmem:[%s145 + $0x28] sm:$0xf] %v1919
      %2176 = vst [vmem:[%s145 + $0x2c] sm:$0xf] %v1920
      %2177 = vst [vmem:[%s145 + $0x30] sm:$0xf] %v1921
      %2178 = vst [vmem:[%s145 + $0x34] sm:$0xf] %v1922
      %2179 = vst [vmem:[%s145 + $0x38] sm:$0xf] %v1923
      %2180 = vst [vmem:[%s145 + $0x3c] sm:$0xf] %v1924
      %2181 = vst [vmem:[%s145 + $0x40] sm:$0xf] %v1925
      %2182 = vst [vmem:[%s145 + $0x44] sm:$0xf] %v1926
      %2183 = vst [vmem:[%s145 + $0x48] sm:$0xf] %v1927
      %2184 = vst [vmem:[%s145 + $0x4c] sm:$0xf] %v1928
      %2185 = vst [vmem:[%s145 + $0x50] sm:$0xf] %v1929
      %2186 = vst [vmem:[%s145 + $0x54] sm:$0xf] %v1930
      %2187 = vst [vmem:[%s145 + $0x58] sm:$0xf] %v1931
      %2188 = vst [vmem:[%s145 + $0x5c] sm:$0xf] %v1932
      %2189 = vst [vmem:[%s145 + $0x60] sm:$0xf] %v1933
      %2190 = vst [vmem:[%s145 + $0x64] sm:$0xf] %v1934
      %2191 = vst [vmem:[%s145 + $0x68] sm:$0xf] %v1935
      %2192 = vst [vmem:[%s145 + $0x6c] sm:$0xf] %v1936
      %2193 = vst [vmem:[%s145 + $0x70] sm:$0xf] %v1937
      %2194 = vst [vmem:[%s145 + $0x74] sm:$0xf] %v1938
      %2195 = vst [vmem:[%s145 + $0x78] sm:$0xf] %v1939
      %2196 = vst [vmem:[%s145 + $0x7c] sm:$0xf] %v1940
      %2197 = vst [vmem:[%s145 + $0x80] sm:$0xf] %v1941
      %2198 = vst [vmem:[%s145 + $0x84] sm:$0xf] %v1942
      %2199 = vst [vmem:[%s145 + $0x88] sm:$0xf] %v1943
      %2200 = vst [vmem:[%s145 + $0x8c] sm:$0xf] %v1944
      %2201 = vst [vmem:[%s145 + $0x90] sm:$0xf] %v1945
      %2202 = vst [vmem:[%s145 + $0x94] sm:$0xf] %v1946
      %2203 = vst [vmem:[%s145 + $0x98] sm:$0xf] %v1947
      %2204 = vst [vmem:[%s145 + $0x9c] sm:$0xf] %v1948
      %2205 = vst [vmem:[%s145 + $0xa0] sm:$0xf] %v1949
      %2206 = vst [vmem:[%s145 + $0xa4] sm:$0xf] %v1950
      %2207 = vst [vmem:[%s145 + $0xa8] sm:$0xf] %v1951
      %2208 = vst [vmem:[%s145 + $0xac] sm:$0xf] %v1952
      %2209 = vst [vmem:[%s145 + $0xb0] sm:$0xf] %v1953
      %2210 = vst [vmem:[%s145 + $0xb4] sm:$0xf] %v1954
      %2211 = vst [vmem:[%s145 + $0xb8] sm:$0xf] %v1955
      %2212 = vst [vmem:[%s145 + $0xbc] sm:$0xf] %v1956
      %2213 = vst [vmem:[%s145 + $0xc0] sm:$0xf] %v1957
      %2214 = vst [vmem:[%s145 + $0xc4] sm:$0xf] %v1958
      %2215 = vst [vmem:[%s145 + $0xc8] sm:$0xf] %v1959
      %2216 = vst [vmem:[%s145 + $0xcc] sm:$0xf] %v1960
      %2217 = vst [vmem:[%s145 + $0xd0] sm:$0xf] %v1961
      %2218 = vst [vmem:[%s145 + $0xd4] sm:$0xf] %v1962
      %2219 = vst [vmem:[%s145 + $0xd8] sm:$0xf] %v1963
      %2220 = vst [vmem:[%s145 + $0xdc] sm:$0xf] %v1964
      %2221 = vst [vmem:[%s145 + $0xe0] sm:$0xf] %v1965
      %2222 = vst [vmem:[%s145 + $0xe4] sm:$0xf] %v1966
      %2223 = vst [vmem:[%s145 + $0xe8] sm:$0xf] %v1967
      %2224 = vst [vmem:[%s145 + $0xec] sm:$0xf] %v1968
      %2225 = vst [vmem:[%s145 + $0xf0] sm:$0xf] %v1969
      %2226 = vst [vmem:[%s145 + $0xf4] sm:$0xf] %v1970
      %2227 = vst [vmem:[%s145 + $0xf8] sm:$0xf] %v1971
      %2228 = vst [vmem:[%s145 + $0xfc] sm:$0xf] %v1972
      %2229 = vst [vmem:[%s145 + $0x100] sm:$0xf] %v1973
      %2230 = vst [vmem:[%s145 + $0x104] sm:$0xf] %v1974
      %2231 = vst [vmem:[%s145 + $0x108] sm:$0xf] %v1975
      %2232 = vst [vmem:[%s145 + $0x10c] sm:$0xf] %v1976
      %2233 = vst [vmem:[%s145 + $0x110] sm:$0xf] %v1977
      %2234 = vst [vmem:[%s145 + $0x114] sm:$0xf] %v1978
      %2235 = vst [vmem:[%s145 + $0x118] sm:$0xf] %v1979
      %2236 = vst [vmem:[%s145 + $0x11c] sm:$0xf] %v1980
      %2237 = vst [vmem:[%s145 + $0x120] sm:$0xf] %v1981
      %2238 = vst [vmem:[%s145 + $0x124] sm:$0xf] %v1982
      %2239 = vst [vmem:[%s145 + $0x128] sm:$0xf] %v1983
      %2240 = vst [vmem:[%s145 + $0x12c] sm:$0xf] %v1984
      %2241 = vst [vmem:[%s145 + $0x130] sm:$0xf] %v1985
      %2242 = vst [vmem:[%s145 + $0x134] sm:$0xf] %v1986
      %2243 = vst [vmem:[%s145 + $0x138] sm:$0xf] %v1987
      %2244 = vst [vmem:[%s145 + $0x13c] sm:$0xf] %v1988
      %2245 = vst [vmem:[%s145 + $0x140] sm:$0xf] %v1989
      %2246 = vst [vmem:[%s145 + $0x144] sm:$0xf] %v1990
      %2247 = vst [vmem:[%s145 + $0x148] sm:$0xf] %v1991
      %2248 = vst [vmem:[%s145 + $0x14c] sm:$0xf] %v1992
      %2249 = vst [vmem:[%s145 + $0x150] sm:$0xf] %v1993
      %2250 = vst [vmem:[%s145 + $0x154] sm:$0xf] %v1994
      %2251 = vst [vmem:[%s145 + $0x158] sm:$0xf] %v1995
      %2252 = vst [vmem:[%s145 + $0x15c] sm:$0xf] %v1996
      %2253 = vst [vmem:[%s145 + $0x160] sm:$0xf] %v1997
      %2254 = vst [vmem:[%s145 + $0x164] sm:$0xf] %v1998
      %2255 = vst [vmem:[%s145 + $0x168] sm:$0xf] %v1999
      %2256 = vst [vmem:[%s145 + $0x16c] sm:$0xf] %v2000
      %2257 = vst [vmem:[%s145 + $0x170] sm:$0xf] %v2001
      %2258 = vst [vmem:[%s145 + $0x174] sm:$0xf] %v2002
      %2259 = vst [vmem:[%s145 + $0x178] sm:$0xf] %v2003
      %2260 = vst [vmem:[%s145 + $0x17c] sm:$0xf] %v2004
      %2261 = vst [vmem:[%s145 + $0x180] sm:$0xf] %v2005
      %2262 = vst [vmem:[%s145 + $0x184] sm:$0xf] %v2006
      %2263 = vst [vmem:[%s145 + $0x188] sm:$0xf] %v2007
      %2264 = vst [vmem:[%s145 + $0x18c] sm:$0xf] %v2008
      %2265 = vst [vmem:[%s145 + $0x190] sm:$0xf] %v2009
      %2266 = vst [vmem:[%s145 + $0x194] sm:$0xf] %v2010
      %2267 = vst [vmem:[%s145 + $0x198] sm:$0xf] %v2011
      %2268 = vst [vmem:[%s145 + $0x19c] sm:$0xf] %v2012
      %2269 = vst [vmem:[%s145 + $0x1a0] sm:$0xf] %v2013
      %2270 = vst [vmem:[%s145 + $0x1a4] sm:$0xf] %v2014
      %2271 = vst [vmem:[%s145 + $0x1a8] sm:$0xf] %v2015
      %2272 = vst [vmem:[%s145 + $0x1ac] sm:$0xf] %v2016
      %2273 = vst [vmem:[%s145 + $0x1b0] sm:$0xf] %v2017
      %2274 = vst [vmem:[%s145 + $0x1b4] sm:$0xf] %v2018
      %2275 = vst [vmem:[%s145 + $0x1b8] sm:$0xf] %v2019
      %2276 = vst [vmem:[%s145 + $0x1bc] sm:$0xf] %v2020
      %2277 = vst [vmem:[%s145 + $0x1c0] sm:$0xf] %v2021
      %2278 = vst [vmem:[%s145 + $0x1c4] sm:$0xf] %v2022
      %2279 = vst [vmem:[%s145 + $0x1c8] sm:$0xf] %v2023
      %2280 = vst [vmem:[%s145 + $0x1cc] sm:$0xf] %v2024
      %2281 = vst [vmem:[%s145 + $0x1d0] sm:$0xf] %v2025
      %2282 = vst [vmem:[%s145 + $0x1d4] sm:$0xf] %v2026
      %2283 = vst [vmem:[%s145 + $0x1d8] sm:$0xf] %v2027
      %2284 = vst [vmem:[%s145 + $0x1dc] sm:$0xf] %v2028
      %2285 = vst [vmem:[%s145 + $0x1e0] sm:$0xf] %v2029
      %2286 = vst [vmem:[%s145 + $0x1e4] sm:$0xf] %v2030
      %2287 = vst [vmem:[%s145 + $0x1e8] sm:$0xf] %v2031
      %2288 = vst [vmem:[%s145 + $0x1ec] sm:$0xf] %v2032
      %2289 = vst [vmem:[%s145 + $0x1f0] sm:$0xf] %v2033
      %2290 = vst [vmem:[%s145 + $0x1f4] sm:$0xf] %v2034
      %2291 = vst [vmem:[%s145 + $0x1f8] sm:$0xf] %v2035
      %2292 = vst [vmem:[%s145 + $0x1fc] sm:$0xf] %v2036
      %s2293 = smul.u32 128, %s13
      %p2294 = scmp.lt.s32.totalorder %s2293, 255
      %s2295 = scalar_select %p2294, %s2293, 255
      %s2296 = smul.addr %s2295, 4
      %s2297 = scalar_lea.vmem %s2, %s2296
      // Predicated region
      $region29: #{discriminator_forward.4} parent=27 // pred_check
        %p2298 = pneg %p78
      $region30: #{discriminator_forward.4} parent=27 // pred_check_branch
        %2300 = sbr.rel (%p2298) target = $region32
      $region31: #{discriminator_forward.4} parent=27 // pred_region
        %s2301 = smul.u32 128, %s13
      $region32: #{discriminator_forward.4} parent=27 // pred_fallthru
        _
    $region28: #{discriminator_forward.4} parent=5 // pred_fallthru
      _
    %p2302 = scmp.le.s32.totalorder 2, %s8
    // Predicated region
    $region33: #{discriminator_forward.4} parent=5 // pred_check
      %p2303 = pneg %p2302
    $region34: #{discriminator_forward.4} parent=5 // pred_check_branch
      %2305 = sbr.rel (%p2303) target = $region36
    $region35: #{discriminator_forward.4} parent=5 // pred_region
      %s2306 = ssub.s32 %s8, 2
      // Predicated region
      $region37: #{discriminator_forward.4} parent=35 // pred_check
        %p2307 = pneg %p84
      $region38: #{discriminator_forward.4} parent=35 // pred_check_branch
        %2309 = sbr.rel (%p2307) target = $region40
      $region39: #{discriminator_forward.4} parent=35 // pred_region
        %s2310 = smul.u32 128, %s14
        %p2311 = scmp.lt.s32.totalorder %s2310, 255
        %s2312 = scalar_select %p2311, %s2310, 255
        %s2313 = smul.addr %s2312, 4
        %s2314 = scalar_lea.vmem %s2, %s2313
      $region40: #{discriminator_forward.4} parent=35 // pred_fallthru
        _
    $region36: #{discriminator_forward.4} parent=5 // pred_fallthru
      _
  $region6: #{discriminator_forward.4} parent=0 // loop_footer
    %s12 = sadd.s32 1, %s8
  $region7: #{discriminator_forward.4} parent=0 // loop_footer_branch
    %7 = sbr.rel target = $region3
  $region8: #{discriminator_forward.4} parent=0 // loop_exit
    _

// kernel: discriminator_forward.5
$region0: #{discriminator_forward.5}
  #allocation0 [shape = 'u32[]', space=smem, size = 0x4, offset = 0x4, fixed_abs, tag = 'smem constant byte address 0x4 - core index']
  #allocation1 [shape = 'u32[144,128]{1,0:T(1,128)}', space=vmem, size = 0x12000, scoped, tag = 'internal scratch']
  %s0 = inlined_call_operand.vmem [shape: bf16[512,128], index: 0, kind: input, shape index: {}]
  %s1 = inlined_call_operand.vmem [shape: bf16[128,128], index: 1, kind: input, shape index: {}]
  %s2 = inlined_call_operand.vmem [shape: f32[1,128], index: 2, kind: input, shape index: {}]
  %s3 = inlined_call_operand.vmem [shape: f32[1,128], index: 3, kind: input, shape index: {}]
  %s4 = inlined_call_operand.vmem [shape: bf16[512,128], index: 4, kind: output, shape index: {}]
  %s5 = sld [smem:[#allocation0]]
  $region26: #{discriminator_forward.5} parent=0
    _
  %s7 = ssub.s32 1, %s5
  %s8 = scalar_select 0, %s7, %s5
  // Predicated region
  $region2: #{discriminator_forward.5} parent=0 // pred_check
    _
  $region3: #{discriminator_forward.5} parent=0 // pred_check_branch
    %10 = sbr.rel (0) target = $region5
  $region4: #{discriminator_forward.5} parent=0 // pred_region
    _
  $region5: #{discriminator_forward.5} parent=0 // pred_fallthru
    _
  // Predicated region
  $region6: #{discriminator_forward.5} parent=0 // pred_check
    _
  $region7: #{discriminator_forward.5} parent=0 // pred_check_branch
    %12 = sbr.rel (0) target = $region9
  $region8: #{discriminator_forward.5} parent=0 // pred_region
    _
  $region9: #{discriminator_forward.5} parent=0 // pred_fallthru
    _
  // Predicated region
  $region10: #{discriminator_forward.5} parent=0 // pred_check
    _
  $region11: #{discriminator_forward.5} parent=0 // pred_check_branch
    %14 = sbr.rel (0) target = $region13
  $region12: #{discriminator_forward.5} parent=0 // pred_region
    _
  $region13: #{discriminator_forward.5} parent=0 // pred_fallthru
    _
  // Predicated region
  $region14: #{discriminator_forward.5} parent=0 // pred_check
    _
  $region15: #{discriminator_forward.5} parent=0 // pred_check_branch
    %16 = sbr.rel (0) target = $region17
  $region16: #{discriminator_forward.5} parent=0 // pred_region
    _
  $region17: #{discriminator_forward.5} parent=0 // pred_fallthru
    _
  %v18 = vld [vmem:[%s0] sm:$0xf]
  %v19 = vld [vmem:[%s0 + $0x4] sm:$0xf]
  %v20 = vld [vmem:[%s0 + $0x8] sm:$0xf]
  %v21 = vld [vmem:[%s0 + $0xc] sm:$0xf]
  %v22 = vld [vmem:[%s0 + $0x10] sm:$0xf]
  %v23 = vld [vmem:[%s0 + $0x14] sm:$0xf]
  %v24 = vld [vmem:[%s0 + $0x18] sm:$0xf]
  %v25 = vld [vmem:[%s0 + $0x1c] sm:$0xf]
  %v26 = vld [vmem:[%s0 + $0x20] sm:$0xf]
  %v27 = vld [vmem:[%s0 + $0x24] sm:$0xf]
  %v28 = vld [vmem:[%s0 + $0x28] sm:$0xf]
  %v29 = vld [vmem:[%s0 + $0x2c] sm:$0xf]
  %v30 = vld [vmem:[%s0 + $0x30] sm:$0xf]
  %v31 = vld [vmem:[%s0 + $0x34] sm:$0xf]
  %v32 = vld [vmem:[%s0 + $0x38] sm:$0xf]
  %v33 = vld [vmem:[%s0 + $0x3c] sm:$0xf]
  %v34 = vld [vmem:[%s0 + $0x40] sm:$0xf]
  %v35 = vld [vmem:[%s0 + $0x44] sm:$0xf]
  %v36 = vld [vmem:[%s0 + $0x48] sm:$0xf]
  %v37 = vld [vmem:[%s0 + $0x4c] sm:$0xf]
  %v38 = vld [vmem:[%s0 + $0x50] sm:$0xf]
  %v39 = vld [vmem:[%s0 + $0x54] sm:$0xf]
  %v40 = vld [vmem:[%s0 + $0x58] sm:$0xf]
  %v41 = vld [vmem:[%s0 + $0x5c] sm:$0xf]
  %v42 = vld [vmem:[%s0 + $0x60] sm:$0xf]
  %v43 = vld [vmem:[%s0 + $0x64] sm:$0xf]
  %v44 = vld [vmem:[%s0 + $0x68] sm:$0xf]
  %v45 = vld [vmem:[%s0 + $0x6c] sm:$0xf]
  %v46 = vld [vmem:[%s0 + $0x70] sm:$0xf]
  %v47 = vld [vmem:[%s0 + $0x74] sm:$0xf]
  %v48 = vld [vmem:[%s0 + $0x78] sm:$0xf]
  %v49 = vld [vmem:[%s0 + $0x7c] sm:$0xf]
  %v50 = vld [vmem:[%s0 + $0x80] sm:$0xf]
  %v51 = vld [vmem:[%s0 + $0x84] sm:$0xf]
  %v52 = vld [vmem:[%s0 + $0x88] sm:$0xf]
  %v53 = vld [vmem:[%s0 + $0x8c] sm:$0xf]
  %v54 = vld [vmem:[%s0 + $0x90] sm:$0xf]
  %v55 = vld [vmem:[%s0 + $0x94] sm:$0xf]
  %v56 = vld [vmem:[%s0 + $0x98] sm:$0xf]
  %v57 = vld [vmem:[%s0 + $0x9c] sm:$0xf]
  %v58 = vld [vmem:[%s0 + $0xa0] sm:$0xf]
  %v59 = vld [vmem:[%s0 + $0xa4] sm:$0xf]
  %v60 = vld [vmem:[%s0 + $0xa8] sm:$0xf]
  %v61 = vld [vmem:[%s0 + $0xac] sm:$0xf]
  %v62 = vld [vmem:[%s0 + $0xb0] sm:$0xf]
  %v63 = vld [vmem:[%s0 + $0xb4] sm:$0xf]
  %v64 = vld [vmem:[%s0 + $0xb8] sm:$0xf]
  %v65 = vld [vmem:[%s0 + $0xbc] sm:$0xf]
  %v66 = vld [vmem:[%s0 + $0xc0] sm:$0xf]
  %v67 = vld [vmem:[%s0 + $0xc4] sm:$0xf]
  %v68 = vld [vmem:[%s0 + $0xc8] sm:$0xf]
  %v69 = vld [vmem:[%s0 + $0xcc] sm:$0xf]
  %v70 = vld [vmem:[%s0 + $0xd0] sm:$0xf]
  %v71 = vld [vmem:[%s0 + $0xd4] sm:$0xf]
  %v72 = vld [vmem:[%s0 + $0xd8] sm:$0xf]
  %v73 = vld [vmem:[%s0 + $0xdc] sm:$0xf]
  %v74 = vld [vmem:[%s0 + $0xe0] sm:$0xf]
  %v75 = vld [vmem:[%s0 + $0xe4] sm:$0xf]
  %v76 = vld [vmem:[%s0 + $0xe8] sm:$0xf]
  %v77 = vld [vmem:[%s0 + $0xec] sm:$0xf]
  %v78 = vld [vmem:[%s0 + $0xf0] sm:$0xf]
  %v79 = vld [vmem:[%s0 + $0xf4] sm:$0xf]
  %v80 = vld [vmem:[%s0 + $0xf8] sm:$0xf]
  %v81 = vld [vmem:[%s0 + $0xfc] sm:$0xf]
  %v82 = vld [vmem:[%s1] sm:$0xf]
  %v83 = vld [vmem:[%s1 + $0x4] sm:$0xf]
  %v84 = vld [vmem:[%s1 + $0x8] sm:$0xf]
  %v85 = vld [vmem:[%s1 + $0xc] sm:$0xf]
  %v86 = vld [vmem:[%s1 + $0x10] sm:$0xf]
  %v87 = vld [vmem:[%s1 + $0x14] sm:$0xf]
  %v88 = vld [vmem:[%s1 + $0x18] sm:$0xf]
  %v89 = vld [vmem:[%s1 + $0x1c] sm:$0xf]
  %v90 = vld [vmem:[%s1 + $0x20] sm:$0xf]
  %v91 = vld [vmem:[%s1 + $0x24] sm:$0xf]
  %v92 = vld [vmem:[%s1 + $0x28] sm:$0xf]
  %v93 = vld [vmem:[%s1 + $0x2c] sm:$0xf]
  %v94 = vld [vmem:[%s1 + $0x30] sm:$0xf]
  %v95 = vld [vmem:[%s1 + $0x34] sm:$0xf]
  %v96 = vld [vmem:[%s1 + $0x38] sm:$0xf]
  %v97 = vld [vmem:[%s1 + $0x3c] sm:$0xf]
  %v162 = vunpack.c.l.b16 %v18
  %v163 = vunpack.c.l.b16 %v19
  %v164 = vunpack.c.l.b16 %v20
  %v165 = vunpack.c.l.b16 %v21
  %v166 = vunpack.c.l.b16 %v22
  %v167 = vunpack.c.l.b16 %v23
  %v168 = vunpack.c.l.b16 %v24
  %v169 = vunpack.c.l.b16 %v25
  %v170 = vunpack.c.l.b16 %v26
  %v171 = vunpack.c.l.b16 %v27
  %v172 = vunpack.c.l.b16 %v28
  %v173 = vunpack.c.l.b16 %v29
  %v174 = vunpack.c.l.b16 %v30
  %v175 = vunpack.c.l.b16 %v31
  %v176 = vunpack.c.l.b16 %v32
  %v177 = vunpack.c.l.b16 %v33
  %v178 = vunpack.c.l.b16 %v34
  %v179 = vunpack.c.l.b16 %v35
  %v180 = vunpack.c.l.b16 %v36
  %v181 = vunpack.c.l.b16 %v37
  %v182 = vunpack.c.l.b16 %v38
  %v183 = vunpack.c.l.b16 %v39
  %v184 = vunpack.c.l.b16 %v40
  %v185 = vunpack.c.l.b16 %v41
  %v186 = vunpack.c.l.b16 %v42
  %v187 = vunpack.c.l.b16 %v43
  %v188 = vunpack.c.l.b16 %v44
  %v189 = vunpack.c.l.b16 %v45
  %v190 = vunpack.c.l.b16 %v46
  %v191 = vunpack.c.l.b16 %v47
  %v192 = vunpack.c.l.b16 %v48
  %v193 = vunpack.c.l.b16 %v49
  %v194 = vunpack.c.l.b16 %v50
  %v195 = vunpack.c.l.b16 %v51
  %v196 = vunpack.c.l.b16 %v52
  %v197 = vunpack.c.l.b16 %v53
  %v198 = vunpack.c.l.b16 %v54
  %v199 = vunpack.c.l.b16 %v55
  %v200 = vunpack.c.l.b16 %v56
  %v201 = vunpack.c.l.b16 %v57
  %v202 = vunpack.c.l.b16 %v58
  %v203 = vunpack.c.l.b16 %v59
  %v204 = vunpack.c.l.b16 %v60
  %v205 = vunpack.c.l.b16 %v61
  %v206 = vunpack.c.l.b16 %v62
  %v207 = vunpack.c.l.b16 %v63
  %v208 = vunpack.c.l.b16 %v64
  %v209 = vunpack.c.l.b16 %v65
  %v210 = vunpack.c.l.b16 %v66
  %v211 = vunpack.c.l.b16 %v67
  %v212 = vunpack.c.l.b16 %v68
  %v213 = vunpack.c.l.b16 %v69
  %v214 = vunpack.c.l.b16 %v70
  %v215 = vunpack.c.l.b16 %v71
  %v216 = vunpack.c.l.b16 %v72
  %v217 = vunpack.c.l.b16 %v73
  %v218 = vunpack.c.l.b16 %v74
  %v219 = vunpack.c.l.b16 %v75
  %v220 = vunpack.c.l.b16 %v76
  %v221 = vunpack.c.l.b16 %v77
  %v222 = vunpack.c.l.b16 %v78
  %v223 = vunpack.c.l.b16 %v79
  %v224 = vunpack.c.l.b16 %v80
  %v225 = vunpack.c.l.b16 %v81
  %v226 = vpack.c.b16 %v163, %v162
  %v227 = vpack.c.b16 %v165, %v164
  %v228 = vpack.c.b16 %v167, %v166
  %v229 = vpack.c.b16 %v169, %v168
  %v230 = vpack.c.b16 %v171, %v170
  %v231 = vpack.c.b16 %v173, %v172
  %v232 = vpack.c.b16 %v175, %v174
  %v233 = vpack.c.b16 %v177, %v176
  %v234 = vpack.c.b16 %v179, %v178
  %v235 = vpack.c.b16 %v181, %v180
  %v236 = vpack.c.b16 %v183, %v182
  %v237 = vpack.c.b16 %v185, %v184
  %v238 = vpack.c.b16 %v187, %v186
  %v239 = vpack.c.b16 %v189, %v188
  %v240 = vpack.c.b16 %v191, %v190
  %v241 = vpack.c.b16 %v193, %v192
  %v242 = vpack.c.b16 %v195, %v194
  %v243 = vpack.c.b16 %v197, %v196
  %v244 = vpack.c.b16 %v199, %v198
  %v245 = vpack.c.b16 %v201, %v200
  %v246 = vpack.c.b16 %v203, %v202
  %v247 = vpack.c.b16 %v205, %v204
  %v248 = vpack.c.b16 %v207, %v206
  %v249 = vpack.c.b16 %v209, %v208
  %v250 = vpack.c.b16 %v211, %v210
  %v251 = vpack.c.b16 %v213, %v212
  %v252 = vpack.c.b16 %v215, %v214
  %v253 = vpack.c.b16 %v217, %v216
  %v254 = vpack.c.b16 %v219, %v218
  %v255 = vpack.c.b16 %v221, %v220
  %v256 = vpack.c.b16 %v223, %v222
  %v257 = vpack.c.b16 %v225, %v224
  %v306 = vunpack.c.l.b16 %v82
  %v307 = vunpack.c.l.b16 %v83
  %v308 = vunpack.c.l.b16 %v84
  %v309 = vunpack.c.l.b16 %v85
  %v310 = vunpack.c.l.b16 %v86
  %v311 = vunpack.c.l.b16 %v87
  %v312 = vunpack.c.l.b16 %v88
  %v313 = vunpack.c.l.b16 %v89
  %v314 = vunpack.c.l.b16 %v90
  %v315 = vunpack.c.l.b16 %v91
  %v316 = vunpack.c.l.b16 %v92
  %v317 = vunpack.c.l.b16 %v93
  %v318 = vunpack.c.l.b16 %v94
  %v319 = vunpack.c.l.b16 %v95
  %v320 = vunpack.c.l.b16 %v96
  %v321 = vunpack.c.l.b16 %v97
  %v322 = vpack.c.b16 %v307, %v306
  %v323 = vpack.c.b16 %v309, %v308
  %v324 = vpack.c.b16 %v311, %v310
  %v325 = vpack.c.b16 %v313, %v312
  %v326 = vpack.c.b16 %v315, %v314
  %v327 = vpack.c.b16 %v317, %v316
  %v328 = vpack.c.b16 %v319, %v318
  %v329 = vpack.c.b16 %v321, %v320
  %338 = vmatprep.subr.bf16.mxu0 0
  %339 = vmatpush1.bf16.msra.mxu0 %v322
  %340 = vmatprep.subr.bf16.mxu0 0
  %341 = vmatpush1.bf16.msra.mxu0 %v323
  %342 = vmatprep.subr.bf16.mxu0 0
  %343 = vmatpush1.bf16.msra.mxu0 %v324
  %344 = vmatprep.subr.bf16.mxu0 0
  %345 = vmatpush1.bf16.msra.mxu0 %v325
  %346 = vmatprep.subr.bf16.mxu0 0
  %347 = vmatpush1.bf16.msra.mxu0 %v326
  %348 = vmatprep.subr.bf16.mxu0 0
  %349 = vmatpush1.bf16.msra.mxu0 %v327
  %350 = vmatprep.subr.bf16.mxu0 0
  %351 = vmatpush1.bf16.msra.mxu0 %v328
  %352 = vmatprep.subr.bf16.mxu0 0
  %353 = vmatpush1.bf16.msra.mxu0 %v329
  %354 = vmatprep.subr.bf16.mxu0 0
  %355 = vmatpush1.bf16.msra.mxu0 0
  %356 = vmatprep.subr.bf16.mxu0 0
  %357 = vmatpush1.bf16.msra.mxu0 0
  %358 = vmatprep.subr.bf16.mxu0 0
  %359 = vmatpush1.bf16.msra.mxu0 0
  %360 = vmatprep.subr.bf16.mxu0 0
  %361 = vmatpush1.bf16.msra.mxu0 0
  %362 = vmatprep.subr.bf16.mxu0 0
  %363 = vmatpush1.bf16.msra.mxu0 0
  %364 = vmatprep.subr.bf16.mxu0 0
  %365 = vmatpush1.bf16.msra.mxu0 0
  %366 = vmatprep.subr.bf16.mxu0 0
  %367 = vmatpush1.bf16.msra.mxu0 0
  %368 = vmatprep.subr.bf16.mxu0 0
  %369 = vmatpush1.bf16.msra.mxu0 0
  %370 = vmatprep.mubr.bf16.mxu0 0
  %371 = vmatmul.mubr.bf16.gmra.mrb[0].mxu0 %v226
  %v372 = vpop.f32.mrb[0].mxu0
  %v373 = vadd.f32 0.0, %v372
  %v374 = vpop.f32.mrb[0].mxu0
  %v375 = vpop.f32.mrb[0].mxu0
  %v376 = vadd.f32 0.0, %v375
  %v377 = vpop.f32.mrb[0].mxu0
  %378 = vmatprep.mubr.bf16.mxu0 0
  %379 = vmatmul.mubr.bf16.gmra.mrb[0].mxu0 %v227
  %v380 = vpop.f32.mrb[0].mxu0
  %v381 = vadd.f32 0.0, %v380
  %v382 = vpop.f32.mrb[0].mxu0
  %v383 = vpop.f32.mrb[0].mxu0
  %v384 = vadd.f32 0.0, %v383
  %v385 = vpop.f32.mrb[0].mxu0
  %386 = vmatprep.mubr.bf16.mxu0 0
  %387 = vmatmul.mubr.bf16.gmra.mrb[0].mxu0 %v228
  %v388 = vpop.f32.mrb[0].mxu0
  %v389 = vadd.f32 0.0, %v388
  %v390 = vpop.f32.mrb[0].mxu0
  %v391 = vpop.f32.mrb[0].mxu0
  %v392 = vadd.f32 0.0, %v391
  %v393 = vpop.f32.mrb[0].mxu0
  %394 = vmatprep.mubr.bf16.mxu0 0
  %395 = vmatmul.mubr.bf16.gmra.mrb[0].mxu0 %v229
  %v396 = vpop.f32.mrb[0].mxu0
  %v397 = vadd.f32 0.0, %v396
  %v398 = vpop.f32.mrb[0].mxu0
  %v399 = vpop.f32.mrb[0].mxu0
  %v400 = vadd.f32 0.0, %v399
  %v401 = vpop.f32.mrb[0].mxu0
  %402 = vmatprep.mubr.bf16.mxu0 0
  %403 = vmatmul.mubr.bf16.gmra.mrb[0].mxu0 %v230
  %v404 = vpop.f32.mrb[0].mxu0
  %v405 = vadd.f32 0.0, %v404
  %v406 = vpop.f32.mrb[0].mxu0
  %v407 = vpop.f32.mrb[0].mxu0
  %v408 = vadd.f32 0.0, %v407
  %v409 = vpop.f32.mrb[0].mxu0
  %410 = vmatprep.mubr.bf16.mxu0 0
  %411 = vmatmul.mubr.bf16.gmra.mrb[0].mxu0 %v231
  %v412 = vpop.f32.mrb[0].mxu0
  %v413 = vadd.f32 0.0, %v412
  %v414 = vpop.f32.mrb[0].mxu0
  %v415 = vpop.f32.mrb[0].mxu0
  %v416 = vadd.f32 0.0, %v415
  %v417 = vpop.f32.mrb[0].mxu0
  %418 = vmatprep.mubr.bf16.mxu0 0
  %419 = vmatmul.mubr.bf16.gmra.mrb[0].mxu0 %v232
  %v420 = vpop.f32.mrb[0].mxu0
  %v421 = vadd.f32 0.0, %v420
  %v422 = vpop.f32.mrb[0].mxu0
  %v423 = vpop.f32.mrb[0].mxu0
  %v424 = vadd.f32 0.0, %v423
  %v425 = vpop.f32.mrb[0].mxu0
  %426 = vmatprep.mubr.bf16.mxu0 0
  %427 = vmatmul.mubr.bf16.gmra.mrb[0].mxu0 %v233
  %v428 = vpop.f32.mrb[0].mxu0
  %v429 = vadd.f32 0.0, %v428
  %v430 = vpop.f32.mrb[0].mxu0
  %v431 = vpop.f32.mrb[0].mxu0
  %v432 = vadd.f32 0.0, %v431
  %v433 = vpop.f32.mrb[0].mxu0
  %434 = vmatprep.mubr.bf16.mxu0 0
  %435 = vmatmul.mubr.bf16.gmra.mrb[0].mxu0 %v234
  %v436 = vpop.f32.mrb[0].mxu0
  %v437 = vadd.f32 0.0, %v436
  %v438 = vpop.f32.mrb[0].mxu0
  %v439 = vpop.f32.mrb[0].mxu0
  %v440 = vadd.f32 0.0, %v439
  %v441 = vpop.f32.mrb[0].mxu0
  %442 = vmatprep.mubr.bf16.mxu0 0
  %443 = vmatmul.mubr.bf16.gmra.mrb[0].mxu0 %v235
  %v444 = vpop.f32.mrb[0].mxu0
  %v445 = vadd.f32 0.0, %v444
  %v446 = vpop.f32.mrb[0].mxu0
  %v447 = vpop.f32.mrb[0].mxu0
  %v448 = vadd.f32 0.0, %v447
  %v449 = vpop.f32.mrb[0].mxu0
  %450 = vmatprep.mubr.bf16.mxu0 0
  %451 = vmatmul.mubr.bf16.gmra.mrb[0].mxu0 %v236
  %v452 = vpop.f32.mrb[0].mxu0
  %v453 = vadd.f32 0.0, %v452
  %v454 = vpop.f32.mrb[0].mxu0
  %v455 = vpop.f32.mrb[0].mxu0
  %v456 = vadd.f32 0.0, %v455
  %v457 = vpop.f32.mrb[0].mxu0
  %458 = vmatprep.mubr.bf16.mxu0 0
  %459 = vmatmul.mubr.bf16.gmra.mrb[0].mxu0 %v237
  %v460 = vpop.f32.mrb[0].mxu0
  %v461 = vadd.f32 0.0, %v460
  %v462 = vpop.f32.mrb[0].mxu0
  %v463 = vpop.f32.mrb[0].mxu0
  %v464 = vadd.f32 0.0, %v463
  %v465 = vpop.f32.mrb[0].mxu0
  %466 = vmatprep.mubr.bf16.mxu0 0
  %467 = vmatmul.mubr.bf16.gmra.mrb[0].mxu0 %v238
  %v468 = vpop.f32.mrb[0].mxu0
  %v469 = vadd.f32 0.0, %v468
  %v470 = vpop.f32.mrb[0].mxu0
  %v471 = vpop.f32.mrb[0].mxu0
  %v472 = vadd.f32 0.0, %v471
  %v473 = vpop.f32.mrb[0].mxu0
  %474 = vmatprep.mubr.bf16.mxu0 0
  %475 = vmatmul.mubr.bf16.gmra.mrb[0].mxu0 %v239
  %v476 = vpop.f32.mrb[0].mxu0
  %v477 = vadd.f32 0.0, %v476
  %v478 = vpop.f32.mrb[0].mxu0
  %v479 = vpop.f32.mrb[0].mxu0
  %v480 = vadd.f32 0.0, %v479
  %v481 = vpop.f32.mrb[0].mxu0
  %482 = vmatprep.mubr.bf16.mxu0 0
  %483 = vmatmul.mubr.bf16.gmra.mrb[0].mxu0 %v240
  %v484 = vpop.f32.mrb[0].mxu0
  %v485 = vadd.f32 0.0, %v484
  %v486 = vpop.f32.mrb[0].mxu0
  %v487 = vpop.f32.mrb[0].mxu0
  %v488 = vadd.f32 0.0, %v487
  %v489 = vpop.f32.mrb[0].mxu0
  %490 = vmatprep.mubr.bf16.mxu0 0
  %491 = vmatmul.mubr.bf16.gmra.mrb[0].mxu0 %v241
  %v492 = vpop.f32.mrb[0].mxu0
  %v493 = vadd.f32 0.0, %v492
  %v494 = vpop.f32.mrb[0].mxu0
  %v495 = vpop.f32.mrb[0].mxu0
  %v496 = vadd.f32 0.0, %v495
  %v497 = vpop.f32.mrb[0].mxu0
  %498 = vmatprep.mubr.bf16.mxu0 0
  %499 = vmatmul.mubr.bf16.gmra.mrb[0].mxu0 %v242
  %v500 = vpop.f32.mrb[0].mxu0
  %v501 = vadd.f32 0.0, %v500
  %v502 = vpop.f32.mrb[0].mxu0
  %v503 = vpop.f32.mrb[0].mxu0
  %v504 = vadd.f32 0.0, %v503
  %v505 = vpop.f32.mrb[0].mxu0
  %506 = vmatprep.mubr.bf16.mxu0 0
  %507 = vmatmul.mubr.bf16.gmra.mrb[0].mxu0 %v243
  %v508 = vpop.f32.mrb[0].mxu0
  %v509 = vadd.f32 0.0, %v508
  %v510 = vpop.f32.mrb[0].mxu0
  %v511 = vpop.f32.mrb[0].mxu0
  %v512 = vadd.f32 0.0, %v511
  %v513 = vpop.f32.mrb[0].mxu0
  %514 = vmatprep.mubr.bf16.mxu0 0
  %515 = vmatmul.mubr.bf16.gmra.mrb[0].mxu0 %v244
  %v516 = vpop.f32.mrb[0].mxu0
  %v517 = vadd.f32 0.0, %v516
  %v518 = vpop.f32.mrb[0].mxu0
  %v519 = vpop.f32.mrb[0].mxu0
  %v520 = vadd.f32 0.0, %v519
  %v521 = vpop.f32.mrb[0].mxu0
  %522 = vmatprep.mubr.bf16.mxu0 0
  %523 = vmatmul.mubr.bf16.gmra.mrb[0].mxu0 %v245
  %v524 = vpop.f32.mrb[0].mxu0
  %v525 = vadd.f32 0.0, %v524
  %v526 = vpop.f32.mrb[0].mxu0
  %v527 = vpop.f32.mrb[0].mxu0
  %v528 = vadd.f32 0.0, %v527
  %v529 = vpop.f32.mrb[0].mxu0
  %530 = vmatprep.mubr.bf16.mxu0 0
  %531 = vmatmul.mubr.bf16.gmra.mrb[0].mxu0 %v246
  %v532 = vpop.f32.mrb[0].mxu0
  %v533 = vadd.f32 0.0, %v532
  %v534 = vpop.f32.mrb[0].mxu0
  %v535 = vpop.f32.mrb[0].mxu0
  %v536 = vadd.f32 0.0, %v535
  %v537 = vpop.f32.mrb[0].mxu0
  %538 = vmatprep.mubr.bf16.mxu0 0
  %539 = vmatmul.mubr.bf16.gmra.mrb[0].mxu0 %v247
  %v540 = vpop.f32.mrb[0].mxu0
  %v541 = vadd.f32 0.0, %v540
  %v542 = vpop.f32.mrb[0].mxu0
  %v543 = vpop.f32.mrb[0].mxu0
  %v544 = vadd.f32 0.0, %v543
  %v545 = vpop.f32.mrb[0].mxu0
  %546 = vmatprep.mubr.bf16.mxu0 0
  %547 = vmatmul.mubr.bf16.gmra.mrb[0].mxu0 %v248
  %v548 = vpop.f32.mrb[0].mxu0
  %v549 = vadd.f32 0.0, %v548
  %v550 = vpop.f32.mrb[0].mxu0
  %v551 = vpop.f32.mrb[0].mxu0
  %v552 = vadd.f32 0.0, %v551
  %v553 = vpop.f32.mrb[0].mxu0
  %554 = vmatprep.mubr.bf16.mxu0 0
  %555 = vmatmul.mubr.bf16.gmra.mrb[0].mxu0 %v249
  %v556 = vpop.f32.mrb[0].mxu0
  %v557 = vadd.f32 0.0, %v556
  %v558 = vpop.f32.mrb[0].mxu0
  %v559 = vpop.f32.mrb[0].mxu0
  %v560 = vadd.f32 0.0, %v559
  %v561 = vpop.f32.mrb[0].mxu0
  %562 = vmatprep.mubr.bf16.mxu0 0
  %563 = vmatmul.mubr.bf16.gmra.mrb[0].mxu0 %v250
  %v564 = vpop.f32.mrb[0].mxu0
  %v565 = vadd.f32 0.0, %v564
  %v566 = vpop.f32.mrb[0].mxu0
  %v567 = vpop.f32.mrb[0].mxu0
  %v568 = vadd.f32 0.0, %v567
  %v569 = vpop.f32.mrb[0].mxu0
  %570 = vmatprep.mubr.bf16.mxu0 0
  %571 = vmatmul.mubr.bf16.gmra.mrb[0].mxu0 %v251
  %v572 = vpop.f32.mrb[0].mxu0
  %v573 = vadd.f32 0.0, %v572
  %v574 = vpop.f32.mrb[0].mxu0
  %v575 = vpop.f32.mrb[0].mxu0
  %v576 = vadd.f32 0.0, %v575
  %v577 = vpop.f32.mrb[0].mxu0
  %578 = vmatprep.mubr.bf16.mxu0 0
  %579 = vmatmul.mubr.bf16.gmra.mrb[0].mxu0 %v252
  %v580 = vpop.f32.mrb[0].mxu0
  %v581 = vadd.f32 0.0, %v580
  %v582 = vpop.f32.mrb[0].mxu0
  %v583 = vpop.f32.mrb[0].mxu0
  %v584 = vadd.f32 0.0, %v583
  %v585 = vpop.f32.mrb[0].mxu0
  %586 = vmatprep.mubr.bf16.mxu0 0
  %587 = vmatmul.mubr.bf16.gmra.mrb[0].mxu0 %v253
  %v588 = vpop.f32.mrb[0].mxu0
  %v589 = vadd.f32 0.0, %v588
  %v590 = vpop.f32.mrb[0].mxu0
  %v591 = vpop.f32.mrb[0].mxu0
  %v592 = vadd.f32 0.0, %v591
  %v593 = vpop.f32.mrb[0].mxu0
  %594 = vmatprep.mubr.bf16.mxu0 0
  %595 = vmatmul.mubr.bf16.gmra.mrb[0].mxu0 %v254
  %v596 = vpop.f32.mrb[0].mxu0
  %v597 = vadd.f32 0.0, %v596
  %v598 = vpop.f32.mrb[0].mxu0
  %v599 = vpop.f32.mrb[0].mxu0
  %v600 = vadd.f32 0.0, %v599
  %v601 = vpop.f32.mrb[0].mxu0
  %602 = vmatprep.mubr.bf16.mxu0 0
  %603 = vmatmul.mubr.bf16.gmra.mrb[0].mxu0 %v255
  %v604 = vpop.f32.mrb[0].mxu0
  %v605 = vadd.f32 0.0, %v604
  %v606 = vpop.f32.mrb[0].mxu0
  %v607 = vpop.f32.mrb[0].mxu0
  %v608 = vadd.f32 0.0, %v607
  %v609 = vpop.f32.mrb[0].mxu0
  %610 = vmatprep.mubr.bf16.mxu0 0
  %611 = vmatmul.mubr.bf16.gmra.mrb[0].mxu0 %v256
  %v612 = vpop.f32.mrb[0].mxu0
  %v613 = vadd.f32 0.0, %v612
  %v614 = vpop.f32.mrb[0].mxu0
  %v615 = vpop.f32.mrb[0].mxu0
  %v616 = vadd.f32 0.0, %v615
  %v617 = vpop.f32.mrb[0].mxu0
  %618 = vmatprep.mubr.bf16.mxu0 0
  %619 = vmatmul.mubr.bf16.gmra.mrb[0].mxu0 %v257
  %v620 = vpop.f32.mrb[0].mxu0
  %v621 = vadd.f32 0.0, %v620
  %v622 = vpop.f32.mrb[0].mxu0
  %v623 = vpop.f32.mrb[0].mxu0
  %v624 = vadd.f32 0.0, %v623
  %v625 = vpop.f32.mrb[0].mxu0
  %626 = vdwg.mxu0
  %v627 = vlaneseq
  %v628 = vshrl.u32 %v627, 7
  %v629 = vadd.s32 %v628, 8
  %v630 = vadd.s32 %v628, 16
  %v631 = vadd.s32 %v628, 24
  %v632 = vadd.s32 %v628, 32
  %v633 = vadd.s32 %v628, 40
  %v634 = vadd.s32 %v628, 48
  %v635 = vadd.s32 %v628, 56
  %v636 = vadd.s32 %v628, 64
  %v637 = vadd.s32 %v628, 72
  %v638 = vadd.s32 %v628, 80
  %v639 = vadd.s32 %v628, 88
  %v640 = vadd.s32 %v628, 96
  %v641 = vadd.s32 %v628, 104
  %v642 = vadd.s32 %v628, 112
  %v643 = vadd.s32 %v628, 120
  %v644 = vadd.s32 %v628, 128
  %v645 = vadd.s32 %v628, 136
  %v646 = vadd.s32 %v628, 144
  %v647 = vadd.s32 %v628, 152
  %v648 = vadd.s32 %v628, 160
  %v649 = vadd.s32 %v628, 168
  %v650 = vadd.s32 %v628, 176
  %v651 = vadd.s32 %v628, 184
  %v652 = vadd.s32 %v628, 192
  %v653 = vadd.s32 %v628, 200
  %v654 = vadd.s32 %v628, 208
  %v655 = vadd.s32 %v628, 216
  %v656 = vadd.s32 %v628, 224
  %v657 = vadd.s32 %v628, 232
  %v658 = vadd.s32 %v628, 240
  %v659 = vadd.s32 %v628, 248
  %v660 = vadd.s32 %v628, 256
  %v661 = vadd.s32 %v628, 264
  %v662 = vadd.s32 %v628, 272
  %v663 = vadd.s32 %v628, 280
  %v664 = vadd.s32 %v628, 288
  %v665 = vadd.s32 %v628, 296
  %v666 = vadd.s32 %v628, 304
  %v667 = vadd.s32 %v628, 312
  %v668 = vadd.s32 %v628, 320
  %v669 = vadd.s32 %v628, 328
  %v670 = vadd.s32 %v628, 336
  %v671 = vadd.s32 %v628, 344
  %v672 = vadd.s32 %v628, 352
  %v673 = vadd.s32 %v628, 360
  %v674 = vadd.s32 %v628, 368
  %v675 = vadd.s32 %v628, 376
  %v676 = vadd.s32 %v628, 384
  %v677 = vadd.s32 %v628, 392
  %v678 = vadd.s32 %v628, 400
  %v679 = vadd.s32 %v628, 408
  %v680 = vadd.s32 %v628, 416
  %v681 = vadd.s32 %v628, 424
  %v682 = vadd.s32 %v628, 432
  %v683 = vadd.s32 %v628, 440
  %v684 = vadd.s32 %v628, 448
  %v685 = vadd.s32 %v628, 456
  %v686 = vadd.s32 %v628, 464
  %v687 = vadd.s32 %v628, 472
  %v688 = vadd.s32 %v628, 480
  %v689 = vadd.s32 %v628, 488
  %v690 = vadd.s32 %v628, 496
  %v691 = vadd.s32 %v628, 504
  %vm692 = vcmp.lt.s32.totalorder %v628, 512
  %vm693 = vcmp.lt.s32.totalorder %v629, 512
  %vm694 = vcmp.lt.s32.totalorder %v630, 512
  %vm695 = vcmp.lt.s32.totalorder %v631, 512
  %vm696 = vcmp.lt.s32.totalorder %v632, 512
  %vm697 = vcmp.lt.s32.totalorder %v633, 512
  %vm698 = vcmp.lt.s32.totalorder %v634, 512
  %vm699 = vcmp.lt.s32.totalorder %v635, 512
  %vm700 = vcmp.lt.s32.totalorder %v636, 512
  %vm701 = vcmp.lt.s32.totalorder %v637, 512
  %vm702 = vcmp.lt.s32.totalorder %v638, 512
  %vm703 = vcmp.lt.s32.totalorder %v639, 512
  %vm704 = vcmp.lt.s32.totalorder %v640, 512
  %vm705 = vcmp.lt.s32.totalorder %v641, 512
  %vm706 = vcmp.lt.s32.totalorder %v642, 512
  %vm707 = vcmp.lt.s32.totalorder %v643, 512
  %vm708 = vcmp.lt.s32.totalorder %v644, 512
  %vm709 = vcmp.lt.s32.totalorder %v645, 512
  %vm710 = vcmp.lt.s32.totalorder %v646, 512
  %vm711 = vcmp.lt.s32.totalorder %v647, 512
  %vm712 = vcmp.lt.s32.totalorder %v648, 512
  %vm713 = vcmp.lt.s32.totalorder %v649, 512
  %vm714 = vcmp.lt.s32.totalorder %v650, 512
  %vm715 = vcmp.lt.s32.totalorder %v651, 512
  %vm716 = vcmp.lt.s32.totalorder %v652, 512
  %vm717 = vcmp.lt.s32.totalorder %v653, 512
  %vm718 = vcmp.lt.s32.totalorder %v654, 512
  %vm719 = vcmp.lt.s32.totalorder %v655, 512
  %vm720 = vcmp.lt.s32.totalorder %v656, 512
  %vm721 = vcmp.lt.s32.totalorder %v657, 512
  %vm722 = vcmp.lt.s32.totalorder %v658, 512
  %vm723 = vcmp.lt.s32.totalorder %v659, 512
  %vm724 = vcmp.lt.s32.totalorder %v660, 512
  %vm725 = vcmp.lt.s32.totalorder %v661, 512
  %vm726 = vcmp.lt.s32.totalorder %v662, 512
  %vm727 = vcmp.lt.s32.totalorder %v663, 512
  %vm728 = vcmp.lt.s32.totalorder %v664, 512
  %vm729 = vcmp.lt.s32.totalorder %v665, 512
  %vm730 = vcmp.lt.s32.totalorder %v666, 512
  %vm731 = vcmp.lt.s32.totalorder %v667, 512
  %vm732 = vcmp.lt.s32.totalorder %v668, 512
  %vm733 = vcmp.lt.s32.totalorder %v669, 512
  %vm734 = vcmp.lt.s32.totalorder %v670, 512
  %vm735 = vcmp.lt.s32.totalorder %v671, 512
  %vm736 = vcmp.lt.s32.totalorder %v672, 512
  %vm737 = vcmp.lt.s32.totalorder %v673, 512
  %vm738 = vcmp.lt.s32.totalorder %v674, 512
  %vm739 = vcmp.lt.s32.totalorder %v675, 512
  %vm740 = vcmp.lt.s32.totalorder %v676, 512
  %vm741 = vcmp.lt.s32.totalorder %v677, 512
  %vm742 = vcmp.lt.s32.totalorder %v678, 512
  %vm743 = vcmp.lt.s32.totalorder %v679, 512
  %vm744 = vcmp.lt.s32.totalorder %v680, 512
  %vm745 = vcmp.lt.s32.totalorder %v681, 512
  %vm746 = vcmp.lt.s32.totalorder %v682, 512
  %vm747 = vcmp.lt.s32.totalorder %v683, 512
  %vm748 = vcmp.lt.s32.totalorder %v684, 512
  %vm749 = vcmp.lt.s32.totalorder %v685, 512
  %vm750 = vcmp.lt.s32.totalorder %v686, 512
  %vm751 = vcmp.lt.s32.totalorder %v687, 512
  %vm752 = vcmp.lt.s32.totalorder %v688, 512
  %vm753 = vcmp.lt.s32.totalorder %v689, 512
  %vm754 = vcmp.lt.s32.totalorder %v690, 512
  %vm755 = vcmp.lt.s32.totalorder %v691, 512
  %v756 = vsel %vm692, %v373, 0.0
  %v757 = vsel %vm693, %v376, 0.0
  %v758 = vsel %vm694, %v381, 0.0
  %v759 = vsel %vm695, %v384, 0.0
  %v760 = vsel %vm696, %v389, 0.0
  %v761 = vsel %vm697, %v392, 0.0
  %v762 = vsel %vm698, %v397, 0.0
  %v763 = vsel %vm699, %v400, 0.0
  %v764 = vsel %vm700, %v405, 0.0
  %v765 = vsel %vm701, %v408, 0.0
  %v766 = vsel %vm702, %v413, 0.0
  %v767 = vsel %vm703, %v416, 0.0
  %v768 = vsel %vm704, %v421, 0.0
  %v769 = vsel %vm705, %v424, 0.0
  %v770 = vsel %vm706, %v429, 0.0
  %v771 = vsel %vm707, %v432, 0.0
  %v772 = vsel %vm708, %v437, 0.0
  %v773 = vsel %vm709, %v440, 0.0
  %v774 = vsel %vm710, %v445, 0.0
  %v775 = vsel %vm711, %v448, 0.0
  %v776 = vsel %vm712, %v453, 0.0
  %v777 = vsel %vm713, %v456, 0.0
  %v778 = vsel %vm714, %v461, 0.0
  %v779 = vsel %vm715, %v464, 0.0
  %v780 = vsel %vm716, %v469, 0.0
  %v781 = vsel %vm717, %v472, 0.0
  %v782 = vsel %vm718, %v477, 0.0
  %v783 = vsel %vm719, %v480, 0.0
  %v784 = vsel %vm720, %v485, 0.0
  %v785 = vsel %vm721, %v488, 0.0
  %v786 = vsel %vm722, %v493, 0.0
  %v787 = vsel %vm723, %v496, 0.0
  %v788 = vsel %vm724, %v501, 0.0
  %v789 = vsel %vm725, %v504, 0.0
  %v790 = vsel %vm726, %v509, 0.0
  %v791 = vsel %vm727, %v512, 0.0
  %v792 = vsel %vm728, %v517, 0.0
  %v793 = vsel %vm729, %v520, 0.0
  %v794 = vsel %vm730, %v525, 0.0
  %v795 = vsel %vm731, %v528, 0.0
  %v796 = vsel %vm732, %v533, 0.0
  %v797 = vsel %vm733, %v536, 0.0
  %v798 = vsel %vm734, %v541, 0.0
  %v799 = vsel %vm735, %v544, 0.0
  %v800 = vsel %vm736, %v549, 0.0
  %v801 = vsel %vm737, %v552, 0.0
  %v802 = vsel %vm738, %v557, 0.0
  %v803 = vsel %vm739, %v560, 0.0
  %v804 = vsel %vm740, %v565, 0.0
  %v805 = vsel %vm741, %v568, 0.0
  %v806 = vsel %vm742, %v573, 0.0
  %v807 = vsel %vm743, %v576, 0.0
  %v808 = vsel %vm744, %v581, 0.0
  %v809 = vsel %vm745, %v584, 0.0
  %v810 = vsel %vm746, %v589, 0.0
  %v811 = vsel %vm747, %v592, 0.0
  %v812 = vsel %vm748, %v597, 0.0
  %v813 = vsel %vm749, %v600, 0.0
  %v814 = vsel %vm750, %v605, 0.0
  %v815 = vsel %vm751, %v608, 0.0
  %v816 = vsel %vm752, %v613, 0.0
  %v817 = vsel %vm753, %v616, 0.0
  %v818 = vsel %vm754, %v621, 0.0
  %v819 = vsel %vm755, %v624, 0.0
  %v820 = vadd.f32 %v756, %v757
  %v821 = vadd.f32 %v820, %v758
  %v822 = vadd.f32 %v821, %v759
  %v823 = vadd.f32 %v822, %v760
  %v824 = vadd.f32 %v823, %v761
  %v825 = vadd.f32 %v824, %v762
  %v826 = vadd.f32 %v825, %v763
  %v827 = vadd.f32 %v826, %v764
  %v828 = vadd.f32 %v827, %v765
  %v829 = vadd.f32 %v828, %v766
  %v830 = vadd.f32 %v829, %v767
  %v831 = vadd.f32 %v830, %v768
  %v832 = vadd.f32 %v831, %v769
  %v833 = vadd.f32 %v832, %v770
  %v834 = vadd.f32 %v833, %v771
  %v835 = vadd.f32 %v834, %v772
  %v836 = vadd.f32 %v835, %v773
  %v837 = vadd.f32 %v836, %v774
  %v838 = vadd.f32 %v837, %v775
  %v839 = vadd.f32 %v838, %v776
  %v840 = vadd.f32 %v839, %v777
  %v841 = vadd.f32 %v840, %v778
  %v842 = vadd.f32 %v841, %v779
  %v843 = vadd.f32 %v842, %v780
  %v844 = vadd.f32 %v843, %v781
  %v845 = vadd.f32 %v844, %v782
  %v846 = vadd.f32 %v845, %v783
  %v847 = vadd.f32 %v846, %v784
  %v848 = vadd.f32 %v847, %v785
  %v849 = vadd.f32 %v848, %v786
  %v850 = vadd.f32 %v849, %v787
  %v851 = vadd.f32 %v850, %v788
  %v852 = vadd.f32 %v851, %v789
  %v853 = vadd.f32 %v852, %v790
  %v854 = vadd.f32 %v853, %v791
  %v855 = vadd.f32 %v854, %v792
  %v856 = vadd.f32 %v855, %v793
  %v857 = vadd.f32 %v856, %v794
  %v858 = vadd.f32 %v857, %v795
  %v859 = vadd.f32 %v858, %v796
  %v860 = vadd.f32 %v859, %v797
  %v861 = vadd.f32 %v860, %v798
  %v862 = vadd.f32 %v861, %v799
  %v863 = vadd.f32 %v862, %v800
  %v864 = vadd.f32 %v863, %v801
  %v865 = vadd.f32 %v864, %v802
  %v866 = vadd.f32 %v865, %v803
  %v867 = vadd.f32 %v866, %v804
  %v868 = vadd.f32 %v867, %v805
  %v869 = vadd.f32 %v868, %v806
  %v870 = vadd.f32 %v869, %v807
  %v871 = vadd.f32 %v870, %v808
  %v872 = vadd.f32 %v871, %v809
  %v873 = vadd.f32 %v872, %v810
  %v874 = vadd.f32 %v873, %v811
  %v875 = vadd.f32 %v874, %v812
  %v876 = vadd.f32 %v875, %v813
  %v877 = vadd.f32 %v876, %v814
  %v878 = vadd.f32 %v877, %v815
  %v879 = vadd.f32 %v878, %v816
  %v880 = vadd.f32 %v879, %v817
  %v881 = vadd.f32 %v880, %v818
  %v882 = vadd.f32 %v881, %v819
  %v883 = vrot.slane %v882, 4
  %v884 = vadd.f32 %v882, %v883
  %v885 = vrot.slane %v884, 2
  %v886 = vadd.f32 %v884, %v885
  %v887 = vrot.slane %v886, 1
  %v888 = vadd.f32 %v886, %v887
  %v889 = vmul.f32 %v888, 0.001953125
  %v890 = vsub.f32 %v373, %v889
  %v891 = vsub.f32 %v376, %v889
  %v892 = vsub.f32 %v381, %v889
  %v893 = vsub.f32 %v384, %v889
  %v894 = vsub.f32 %v389, %v889
  %v895 = vsub.f32 %v392, %v889
  %v896 = vsub.f32 %v397, %v889
  %v897 = vsub.f32 %v400, %v889
  %v898 = vsub.f32 %v405, %v889
  %v899 = vsub.f32 %v408, %v889
  %v900 = vsub.f32 %v413, %v889
  %v901 = vsub.f32 %v416, %v889
  %v902 = vsub.f32 %v421, %v889
  %v903 = vsub.f32 %v424, %v889
  %v904 = vsub.f32 %v429, %v889
  %v905 = vsub.f32 %v432, %v889
  %v906 = vsub.f32 %v437, %v889
  %v907 = vsub.f32 %v440, %v889
  %v908 = vsub.f32 %v445, %v889
  %v909 = vsub.f32 %v448, %v889
  %v910 = vsub.f32 %v453, %v889
  %v911 = vsub.f32 %v456, %v889
  %v912 = vsub.f32 %v461, %v889
  %v913 = vsub.f32 %v464, %v889
  %v914 = vsub.f32 %v469, %v889
  %v915 = vsub.f32 %v472, %v889
  %v916 = vsub.f32 %v477, %v889
  %v917 = vsub.f32 %v480, %v889
  %v918 = vsub.f32 %v485, %v889
  %v919 = vsub.f32 %v488, %v889
  %v920 = vsub.f32 %v493, %v889
  %v921 = vsub.f32 %v496, %v889
  %v922 = vsub.f32 %v501, %v889
  %v923 = vsub.f32 %v504, %v889
  %v924 = vsub.f32 %v509, %v889
  %v925 = vsub.f32 %v512, %v889
  %v926 = vsub.f32 %v517, %v889
  %v927 = vsub.f32 %v520, %v889
  %v928 = vsub.f32 %v525, %v889
  %v929 = vsub.f32 %v528, %v889
  %v930 = vsub.f32 %v533, %v889
  %v931 = vsub.f32 %v536, %v889
  %v932 = vsub.f32 %v541, %v889
  %v933 = vsub.f32 %v544, %v889
  %v934 = vsub.f32 %v549, %v889
  %v935 = vsub.f32 %v552, %v889
  %v936 = vsub.f32 %v557, %v889
  %v937 = vsub.f32 %v560, %v889
  %v938 = vsub.f32 %v565, %v889
  %v939 = vsub.f32 %v568, %v889
  %v940 = vsub.f32 %v573, %v889
  %v941 = vsub.f32 %v576, %v889
  %v942 = vsub.f32 %v581, %v889
  %v943 = vsub.f32 %v584, %v889
  %v944 = vsub.f32 %v589, %v889
  %v945 = vsub.f32 %v592, %v889
  %v946 = vsub.f32 %v597, %v889
  %v947 = vsub.f32 %v600, %v889
  %v948 = vsub.f32 %v605, %v889
  %v949 = vsub.f32 %v608, %v889
  %v950 = vsub.f32 %v613, %v889
  %v951 = vsub.f32 %v616, %v889
  %v952 = vsub.f32 %v621, %v889
  %v953 = vsub.f32 %v624, %v889
  %v954 = vsel %vm692, %v890, 0.0
  %v955 = vsel %vm693, %v891, 0.0
  %v956 = vsel %vm694, %v892, 0.0
  %v957 = vsel %vm695, %v893, 0.0
  %v958 = vsel %vm696, %v894, 0.0
  %v959 = vsel %vm697, %v895, 0.0
  %v960 = vsel %vm698, %v896, 0.0
  %v961 = vsel %vm699, %v897, 0.0
  %v962 = vsel %vm700, %v898, 0.0
  %v963 = vsel %vm701, %v899, 0.0
  %v964 = vsel %vm702, %v900, 0.0
  %v965 = vsel %vm703, %v901, 0.0
  %v966 = vsel %vm704, %v902, 0.0
  %v967 = vsel %vm705, %v903, 0.0
  %v968 = vsel %vm706, %v904, 0.0
  %v969 = vsel %vm707, %v905, 0.0
  %v970 = vsel %vm708, %v906, 0.0
  %v971 = vsel %vm709, %v907, 0.0
  %v972 = vsel %vm710, %v908, 0.0
  %v973 = vsel %vm711, %v909, 0.0
  %v974 = vsel %vm712, %v910, 0.0
  %v975 = vsel %vm713, %v911, 0.0
  %v976 = vsel %vm714, %v912, 0.0
  %v977 = vsel %vm715, %v913, 0.0
  %v978 = vsel %vm716, %v914, 0.0
  %v979 = vsel %vm717, %v915, 0.0
  %v980 = vsel %vm718, %v916, 0.0
  %v981 = vsel %vm719, %v917, 0.0
  %v982 = vsel %vm720, %v918, 0.0
  %v983 = vsel %vm721, %v919, 0.0
  %v984 = vsel %vm722, %v920, 0.0
  %v985 = vsel %vm723, %v921, 0.0
  %v986 = vsel %vm724, %v922, 0.0
  %v987 = vsel %vm725, %v923, 0.0
  %v988 = vsel %vm726, %v924, 0.0
  %v989 = vsel %vm727, %v925, 0.0
  %v990 = vsel %vm728, %v926, 0.0
  %v991 = vsel %vm729, %v927, 0.0
  %v992 = vsel %vm730, %v928, 0.0
  %v993 = vsel %vm731, %v929, 0.0
  %v994 = vsel %vm732, %v930, 0.0
  %v995 = vsel %vm733, %v931, 0.0
  %v996 = vsel %vm734, %v932, 0.0
  %v997 = vsel %vm735, %v933, 0.0
  %v998 = vsel %vm736, %v934, 0.0
  %v999 = vsel %vm737, %v935, 0.0
  %v1000 = vsel %vm738, %v936, 0.0
  %v1001 = vsel %vm739, %v937, 0.0
  %v1002 = vsel %vm740, %v938, 0.0
  %v1003 = vsel %vm741, %v939, 0.0
  %v1004 = vsel %vm742, %v940, 0.0
  %v1005 = vsel %vm743, %v941, 0.0
  %v1006 = vsel %vm744, %v942, 0.0
  %v1007 = vsel %vm745, %v943, 0.0
  %v1008 = vsel %vm746, %v944, 0.0
  %v1009 = vsel %vm747, %v945, 0.0
  %v1010 = vsel %vm748, %v946, 0.0
  %v1011 = vsel %vm749, %v947, 0.0
  %v1012 = vsel %vm750, %v948, 0.0
  %v1013 = vsel %vm751, %v949, 0.0
  %v1014 = vsel %vm752, %v950, 0.0
  %v1015 = vsel %vm753, %v951, 0.0
  %v1016 = vsel %vm754, %v952, 0.0
  %v1017 = vsel %vm755, %v953, 0.0
  %v1018 = vmul.f32 %v954, %v954
  %v1019 = vmul.f32 %v955, %v955
  %v1020 = vmul.f32 %v956, %v956
  %v1021 = vmul.f32 %v957, %v957
  %v1022 = vmul.f32 %v958, %v958
  %v1023 = vmul.f32 %v959, %v959
  %v1024 = vmul.f32 %v960, %v960
  %v1025 = vmul.f32 %v961, %v961
  %v1026 = vmul.f32 %v962, %v962
  %v1027 = vmul.f32 %v963, %v963
  %v1028 = vmul.f32 %v964, %v964
  %v1029 = vmul.f32 %v965, %v965
  %v1030 = vmul.f32 %v966, %v966
  %v1031 = vmul.f32 %v967, %v967
  %v1032 = vmul.f32 %v968, %v968
  %v1033 = vmul.f32 %v969, %v969
  %v1034 = vmul.f32 %v970, %v970
  %v1035 = vmul.f32 %v971, %v971
  %v1036 = vmul.f32 %v972, %v972
  %v1037 = vmul.f32 %v973, %v973
  %v1038 = vmul.f32 %v974, %v974
  %v1039 = vmul.f32 %v975, %v975
  %v1040 = vmul.f32 %v976, %v976
  %v1041 = vmul.f32 %v977, %v977
  %v1042 = vmul.f32 %v978, %v978
  %v1043 = vmul.f32 %v979, %v979
  %v1044 = vmul.f32 %v980, %v980
  %v1045 = vmul.f32 %v981, %v981
  %v1046 = vmul.f32 %v982, %v982
  %v1047 = vmul.f32 %v983, %v983
  %v1048 = vmul.f32 %v984, %v984
  %v1049 = vmul.f32 %v985, %v985
  %v1050 = vmul.f32 %v986, %v986
  %v1051 = vmul.f32 %v987, %v987
  %v1052 = vmul.f32 %v988, %v988
  %v1053 = vmul.f32 %v989, %v989
  %v1054 = vmul.f32 %v990, %v990
  %v1055 = vmul.f32 %v991, %v991
  %v1056 = vmul.f32 %v992, %v992
  %v1057 = vmul.f32 %v993, %v993
  %v1058 = vmul.f32 %v994, %v994
  %v1059 = vmul.f32 %v995, %v995
  %v1060 = vmul.f32 %v996, %v996
  %v1061 = vmul.f32 %v997, %v997
  %v1062 = vmul.f32 %v998, %v998
  %v1063 = vmul.f32 %v999, %v999
  %v1064 = vmul.f32 %v1000, %v1000
  %v1065 = vmul.f32 %v1001, %v1001
  %v1066 = vmul.f32 %v1002, %v1002
  %v1067 = vmul.f32 %v1003, %v1003
  %v1068 = vmul.f32 %v1004, %v1004
  %v1069 = vmul.f32 %v1005, %v1005
  %v1070 = vmul.f32 %v1006, %v1006
  %v1071 = vmul.f32 %v1007, %v1007
  %v1072 = vmul.f32 %v1008, %v1008
  %v1073 = vmul.f32 %v1009, %v1009
  %v1074 = vmul.f32 %v1010, %v1010
  %v1075 = vmul.f32 %v1011, %v1011
  %v1076 = vmul.f32 %v1012, %v1012
  %v1077 = vmul.f32 %v1013, %v1013
  %v1078 = vmul.f32 %v1014, %v1014
  %v1079 = vmul.f32 %v1015, %v1015
  %v1080 = vmul.f32 %v1016, %v1016
  %v1081 = vmul.f32 %v1017, %v1017
  %v1082 = vadd.f32 %v1018, %v1019
  %v1083 = vadd.f32 %v1082, %v1020
  %v1084 = vadd.f32 %v1083, %v1021
  %v1085 = vadd.f32 %v1084, %v1022
  %v1086 = vadd.f32 %v1085, %v1023
  %v1087 = vadd.f32 %v1086, %v1024
  %v1088 = vadd.f32 %v1087, %v1025
  %v1089 = vadd.f32 %v1088, %v1026
  %v1090 = vadd.f32 %v1089, %v1027
  %v1091 = vadd.f32 %v1090, %v1028
  %v1092 = vadd.f32 %v1091, %v1029
  %v1093 = vadd.f32 %v1092, %v1030
  %v1094 = vadd.f32 %v1093, %v1031
  %v1095 = vadd.f32 %v1094, %v1032
  %v1096 = vadd.f32 %v1095, %v1033
  %v1097 = vadd.f32 %v1096, %v1034
  %v1098 = vadd.f32 %v1097, %v1035
  %v1099 = vadd.f32 %v1098, %v1036
  %v1100 = vadd.f32 %v1099, %v1037
  %v1101 = vadd.f32 %v1100, %v1038
  %v1102 = vadd.f32 %v1101, %v1039
  %v1103 = vadd.f32 %v1102, %v1040
  %v1104 = vadd.f32 %v1103, %v1041
  %v1105 = vadd.f32 %v1104, %v1042
  %v1106 = vadd.f32 %v1105, %v1043
  %v1107 = vadd.f32 %v1106, %v1044
  %v1108 = vadd.f32 %v1107, %v1045
  %v1109 = vadd.f32 %v1108, %v1046
  %v1110 = vadd.f32 %v1109, %v1047
  %v1111 = vadd.f32 %v1110, %v1048
  %v1112 = vadd.f32 %v1111, %v1049
  %v1113 = vadd.f32 %v1112, %v1050
  %v1114 = vadd.f32 %v1113, %v1051
  %v1115 = vadd.f32 %v1114, %v1052
  %v1116 = vadd.f32 %v1115, %v1053
  %v1117 = vadd.f32 %v1116, %v1054
  %v1118 = vadd.f32 %v1117, %v1055
  %v1119 = vadd.f32 %v1118, %v1056
  %v1120 = vadd.f32 %v1119, %v1057
  %v1121 = vadd.f32 %v1120, %v1058
  %v1122 = vadd.f32 %v1121, %v1059
  %v1123 = vadd.f32 %v1122, %v1060
  %v1124 = vadd.f32 %v1123, %v1061
  %v1125 = vadd.f32 %v1124, %v1062
  %v1126 = vadd.f32 %v1125, %v1063
  %v1127 = vadd.f32 %v1126, %v1064
  %v1128 = vadd.f32 %v1127, %v1065
  %v1129 = vadd.f32 %v1128, %v1066
  %v1130 = vadd.f32 %v1129, %v1067
  %v1131 = vadd.f32 %v1130, %v1068
  %v1132 = vadd.f32 %v1131, %v1069
  %v1133 = vadd.f32 %v1132, %v1070
  %v1134 = vadd.f32 %v1133, %v1071
  %v1135 = vadd.f32 %v1134, %v1072
  %v1136 = vadd.f32 %v1135, %v1073
  %v1137 = vadd.f32 %v1136, %v1074
  %v1138 = vadd.f32 %v1137, %v1075
  %v1139 = vadd.f32 %v1138, %v1076
  %v1140 = vadd.f32 %v1139, %v1077
  %v1141 = vadd.f32 %v1140, %v1078
  %v1142 = vadd.f32 %v1141, %v1079
  %v1143 = vadd.f32 %v1142, %v1080
  %v1144 = vadd.f32 %v1143, %v1081
  %v1145 = vrot.slane %v1144, 4
  %v1146 = vadd.f32 %v1144, %v1145
  %v1147 = vrot.slane %v1146, 2
  %v1148 = vadd.f32 %v1146, %v1147
  %v1149 = vrot.slane %v1148, 1
  %v1150 = vadd.f32 %v1148, %v1149
  %v1151 = vmul.f32 %v1150, 0.001953125
  %v1152 = vld [vmem:[%s2] sm:$0x1]
  %v1153 = vadd.f32 %v1151, 1e-05
  %v1154 = vrsqrt.pop %v1153
  %v1155 = vmul.f32 %v1152, %v1154
  %v1157 = vlaneseq
  %v1158 = vshrl.u32 %v1157, 7
  %v1159 = vsub.s32 0, %v1158
  %v1160 = vrot.slane %v1155, %v1159
  %v1162 = vmul.f32 %v890, %v1160
  %v1163 = vmul.f32 %v891, %v1160
  %v1164 = vmul.f32 %v892, %v1160
  %v1165 = vmul.f32 %v893, %v1160
  %v1166 = vmul.f32 %v894, %v1160
  %v1167 = vmul.f32 %v895, %v1160
  %v1168 = vmul.f32 %v896, %v1160
  %v1169 = vmul.f32 %v897, %v1160
  %v1170 = vmul.f32 %v898, %v1160
  %v1171 = vmul.f32 %v899, %v1160
  %v1172 = vmul.f32 %v900, %v1160
  %v1173 = vmul.f32 %v901, %v1160
  %v1174 = vmul.f32 %v902, %v1160
  %v1175 = vmul.f32 %v903, %v1160
  %v1176 = vmul.f32 %v904, %v1160
  %v1177 = vmul.f32 %v905, %v1160
  %v1178 = vmul.f32 %v906, %v1160
  %v1179 = vmul.f32 %v907, %v1160
  %v1180 = vmul.f32 %v908, %v1160
  %v1181 = vmul.f32 %v909, %v1160
  %v1182 = vmul.f32 %v910, %v1160
  %v1183 = vmul.f32 %v911, %v1160
  %v1184 = vmul.f32 %v912, %v1160
  %v1185 = vmul.f32 %v913, %v1160
  %v1186 = vmul.f32 %v914, %v1160
  %v1187 = vmul.f32 %v915, %v1160
  %v1188 = vmul.f32 %v916, %v1160
  %v1189 = vmul.f32 %v917, %v1160
  %v1190 = vmul.f32 %v918, %v1160
  %v1191 = vmul.f32 %v919, %v1160
  %v1192 = vmul.f32 %v920, %v1160
  %v1193 = vmul.f32 %v921, %v1160
  %v1194 = vmul.f32 %v922, %v1160
  %v1195 = vmul.f32 %v923, %v1160
  %v1196 = vmul.f32 %v924, %v1160
  %v1197 = vmul.f32 %v925, %v1160
  %v1198 = vmul.f32 %v926, %v1160
  %v1199 = vmul.f32 %v927, %v1160
  %v1200 = vmul.f32 %v928, %v1160
  %v1201 = vmul.f32 %v929, %v1160
  %v1202 = vmul.f32 %v930, %v1160
  %v1203 = vmul.f32 %v931, %v1160
  %v1204 = vmul.f32 %v932, %v1160
  %v1205 = vmul.f32 %v933, %v1160
  %v1206 = vmul.f32 %v934, %v1160
  %v1207 = vmul.f32 %v935, %v1160
  %v1208 = vmul.f32 %v936, %v1160
  %v1209 = vmul.f32 %v937, %v1160
  %v1210 = vmul.f32 %v938, %v1160
  %v1211 = vmul.f32 %v939, %v1160
  %v1212 = vmul.f32 %v940, %v1160
  %v1213 = vmul.f32 %v941, %v1160
  %v1214 = vmul.f32 %v942, %v1160
  %v1215 = vmul.f32 %v943, %v1160
  %v1216 = vmul.f32 %v944, %v1160
  %v1217 = vmul.f32 %v945, %v1160
  %v1218 = vmul.f32 %v946, %v1160
  %v1219 = vmul.f32 %v947, %v1160
  %v1220 = vmul.f32 %v948, %v1160
  %v1221 = vmul.f32 %v949, %v1160
  %v1222 = vmul.f32 %v950, %v1160
  %v1223 = vmul.f32 %v951, %v1160
  %v1224 = vmul.f32 %v952, %v1160
  %v1225 = vmul.f32 %v953, %v1160
  %v1226 = vld [vmem:[%s3] sm:$0x1]
  %v1228 = vlaneseq
  %v1229 = vshrl.u32 %v1228, 7
  %v1230 = vsub.s32 0, %v1229
  %v1231 = vrot.slane %v1226, %v1230
  %v1233 = vadd.f32 %v1162, %v1231
  %v1234 = vadd.f32 %v1163, %v1231
  %v1235 = vadd.f32 %v1164, %v1231
  %v1236 = vadd.f32 %v1165, %v1231
  %v1237 = vadd.f32 %v1166, %v1231
  %v1238 = vadd.f32 %v1167, %v1231
  %v1239 = vadd.f32 %v1168, %v1231
  %v1240 = vadd.f32 %v1169, %v1231
  %v1241 = vadd.f32 %v1170, %v1231
  %v1242 = vadd.f32 %v1171, %v1231
  %v1243 = vadd.f32 %v1172, %v1231
  %v1244 = vadd.f32 %v1173, %v1231
  %v1245 = vadd.f32 %v1174, %v1231
  %v1246 = vadd.f32 %v1175, %v1231
  %v1247 = vadd.f32 %v1176, %v1231
  %v1248 = vadd.f32 %v1177, %v1231
  %v1249 = vadd.f32 %v1178, %v1231
  %v1250 = vadd.f32 %v1179, %v1231
  %v1251 = vadd.f32 %v1180, %v1231
  %v1252 = vadd.f32 %v1181, %v1231
  %v1253 = vadd.f32 %v1182, %v1231
  %v1254 = vadd.f32 %v1183, %v1231
  %v1255 = vadd.f32 %v1184, %v1231
  %v1256 = vadd.f32 %v1185, %v1231
  %v1257 = vadd.f32 %v1186, %v1231
  %v1258 = vadd.f32 %v1187, %v1231
  %v1259 = vadd.f32 %v1188, %v1231
  %v1260 = vadd.f32 %v1189, %v1231
  %v1261 = vadd.f32 %v1190, %v1231
  %v1262 = vadd.f32 %v1191, %v1231
  %v1263 = vadd.f32 %v1192, %v1231
  %v1264 = vadd.f32 %v1193, %v1231
  %v1265 = vadd.f32 %v1194, %v1231
  %v1266 = vadd.f32 %v1195, %v1231
  %v1267 = vadd.f32 %v1196, %v1231
  %v1268 = vadd.f32 %v1197, %v1231
  %v1269 = vadd.f32 %v1198, %v1231
  %v1270 = vadd.f32 %v1199, %v1231
  %v1271 = vadd.f32 %v1200, %v1231
  %v1272 = vadd.f32 %v1201, %v1231
  %v1273 = vadd.f32 %v1202, %v1231
  %v1274 = vadd.f32 %v1203, %v1231
  %v1275 = vadd.f32 %v1204, %v1231
  %v1276 = vadd.f32 %v1205, %v1231
  %v1277 = vadd.f32 %v1206, %v1231
  %v1278 = vadd.f32 %v1207, %v1231
  %v1279 = vadd.f32 %v1208, %v1231
  %v1280 = vadd.f32 %v1209, %v1231
  %v1281 = vadd.f32 %v1210, %v1231
  %v1282 = vadd.f32 %v1211, %v1231
  %v1283 = vadd.f32 %v1212, %v1231
  %v1284 = vadd.f32 %v1213, %v1231
  %v1285 = vadd.f32 %v1214, %v1231
  %v1286 = vadd.f32 %v1215, %v1231
  %v1287 = vadd.f32 %v1216, %v1231
  %v1288 = vadd.f32 %v1217, %v1231
  %v1289 = vadd.f32 %v1218, %v1231
  %v1290 = vadd.f32 %v1219, %v1231
  %v1291 = vadd.f32 %v1220, %v1231
  %v1292 = vadd.f32 %v1221, %v1231
  %v1293 = vadd.f32 %v1222, %v1231
  %v1294 = vadd.f32 %v1223, %v1231
  %v1295 = vadd.f32 %v1224, %v1231
  %v1296 = vadd.f32 %v1225, %v1231
  %vm1297 = vcmp.ge.f32.partialorder %v1233, 0.0
  %vm1298 = vcmp.ge.f32.partialorder %v1234, 0.0
  %vm1299 = vcmp.ge.f32.partialorder %v1235, 0.0
  %vm1300 = vcmp.ge.f32.partialorder %v1236, 0.0
  %vm1301 = vcmp.ge.f32.partialorder %v1237, 0.0
  %vm1302 = vcmp.ge.f32.partialorder %v1238, 0.0
  %vm1303 = vcmp.ge.f32.partialorder %v1239, 0.0
  %vm1304 = vcmp.ge.f32.partialorder %v1240, 0.0
  %vm1305 = vcmp.ge.f32.partialorder %v1241, 0.0
  %vm1306 = vcmp.ge.f32.partialorder %v1242, 0.0
  %vm1307 = vcmp.ge.f32.partialorder %v1243, 0.0
  %vm1308 = vcmp.ge.f32.partialorder %v1244, 0.0
  %vm1309 = vcmp.ge.f32.partialorder %v1245, 0.0
  %vm1310 = vcmp.ge.f32.partialorder %v1246, 0.0
  %vm1311 = vcmp.ge.f32.partialorder %v1247, 0.0
  %vm1312 = vcmp.ge.f32.partialorder %v1248, 0.0
  %vm1313 = vcmp.ge.f32.partialorder %v1249, 0.0
  %vm1314 = vcmp.ge.f32.partialorder %v1250, 0.0
  %vm1315 = vcmp.ge.f32.partialorder %v1251, 0.0
  %vm1316 = vcmp.ge.f32.partialorder %v1252, 0.0
  %vm1317 = vcmp.ge.f32.partialorder %v1253, 0.0
  %vm1318 = vcmp.ge.f32.partialorder %v1254, 0.0
  %vm1319 = vcmp.ge.f32.partialorder %v1255, 0.0
  %vm1320 = vcmp.ge.f32.partialorder %v1256, 0.0
  %vm1321 = vcmp.ge.f32.partialorder %v1257, 0.0
  %vm1322 = vcmp.ge.f32.partialorder %v1258, 0.0
  %vm1323 = vcmp.ge.f32.partialorder %v1259, 0.0
  %vm1324 = vcmp.ge.f32.partialorder %v1260, 0.0
  %vm1325 = vcmp.ge.f32.partialorder %v1261, 0.0
  %vm1326 = vcmp.ge.f32.partialorder %v1262, 0.0
  %vm1327 = vcmp.ge.f32.partialorder %v1263, 0.0
  %vm1328 = vcmp.ge.f32.partialorder %v1264, 0.0
  %vm1329 = vcmp.ge.f32.partialorder %v1265, 0.0
  %vm1330 = vcmp.ge.f32.partialorder %v1266, 0.0
  %vm1331 = vcmp.ge.f32.partialorder %v1267, 0.0
  %vm1332 = vcmp.ge.f32.partialorder %v1268, 0.0
  %vm1333 = vcmp.ge.f32.partialorder %v1269, 0.0
  %vm1334 = vcmp.ge.f32.partialorder %v1270, 0.0
  %vm1335 = vcmp.ge.f32.partialorder %v1271, 0.0
  %vm1336 = vcmp.ge.f32.partialorder %v1272, 0.0
  %vm1337 = vcmp.ge.f32.partialorder %v1273, 0.0
  %vm1338 = vcmp.ge.f32.partialorder %v1274, 0.0
  %vm1339 = vcmp.ge.f32.partialorder %v1275, 0.0
  %vm1340 = vcmp.ge.f32.partialorder %v1276, 0.0
  %vm1341 = vcmp.ge.f32.partialorder %v1277, 0.0
  %vm1342 = vcmp.ge.f32.partialorder %v1278, 0.0
  %vm1343 = vcmp.ge.f32.partialorder %v1279, 0.0
  %vm1344 = vcmp.ge.f32.partialorder %v1280, 0.0
  %vm1345 = vcmp.ge.f32.partialorder %v1281, 0.0
  %vm1346 = vcmp.ge.f32.partialorder %v1282, 0.0
  %vm1347 = vcmp.ge.f32.partialorder %v1283, 0.0
  %vm1348 = vcmp.ge.f32.partialorder %v1284, 0.0
  %vm1349 = vcmp.ge.f32.partialorder %v1285, 0.0
  %vm1350 = vcmp.ge.f32.partialorder %v1286, 0.0
  %vm1351 = vcmp.ge.f32.partialorder %v1287, 0.0
  %vm1352 = vcmp.ge.f32.partialorder %v1288, 0.0
  %vm1353 = vcmp.ge.f32.partialorder %v1289, 0.0
  %vm1354 = vcmp.ge.f32.partialorder %v1290, 0.0
  %vm1355 = vcmp.ge.f32.partialorder %v1291, 0.0
  %vm1356 = vcmp.ge.f32.partialorder %v1292, 0.0
  %vm1357 = vcmp.ge.f32.partialorder %v1293, 0.0
  %vm1358 = vcmp.ge.f32.partialorder %v1294, 0.0
  %vm1359 = vcmp.ge.f32.partialorder %v1295, 0.0
  %vm1360 = vcmp.ge.f32.partialorder %v1296, 0.0
  %v1361 = vmul.f32 %v1233, 0.2
  %v1362 = vmul.f32 %v1234, 0.2
  %v1363 = vmul.f32 %v1235, 0.2
  %v1364 = vmul.f32 %v1236, 0.2
  %v1365 = vmul.f32 %v1237, 0.2
  %v1366 = vmul.f32 %v1238, 0.2
  %v1367 = vmul.f32 %v1239, 0.2
  %v1368 = vmul.f32 %v1240, 0.2
  %v1369 = vmul.f32 %v1241, 0.2
  %v1370 = vmul.f32 %v1242, 0.2
  %v1371 = vmul.f32 %v1243, 0.2
  %v1372 = vmul.f32 %v1244, 0.2
  %v1373 = vmul.f32 %v1245, 0.2
  %v1374 = vmul.f32 %v1246, 0.2
  %v1375 = vmul.f32 %v1247, 0.2
  %v1376 = vmul.f32 %v1248, 0.2
  %v1377 = vmul.f32 %v1249, 0.2
  %v1378 = vmul.f32 %v1250, 0.2
  %v1379 = vmul.f32 %v1251, 0.2
  %v1380 = vmul.f32 %v1252, 0.2
  %v1381 = vmul.f32 %v1253, 0.2
  %v1382 = vmul.f32 %v1254, 0.2
  %v1383 = vmul.f32 %v1255, 0.2
  %v1384 = vmul.f32 %v1256, 0.2
  %v1385 = vmul.f32 %v1257, 0.2
  %v1386 = vmul.f32 %v1258, 0.2
  %v1387 = vmul.f32 %v1259, 0.2
  %v1388 = vmul.f32 %v1260, 0.2
  %v1389 = vmul.f32 %v1261, 0.2
  %v1390 = vmul.f32 %v1262, 0.2
  %v1391 = vmul.f32 %v1263, 0.2
  %v1392 = vmul.f32 %v1264, 0.2
  %v1393 = vmul.f32 %v1265, 0.2
  %v1394 = vmul.f32 %v1266, 0.2
  %v1395 = vmul.f32 %v1267, 0.2
  %v1396 = vmul.f32 %v1268, 0.2
  %v1397 = vmul.f32 %v1269, 0.2
  %v1398 = vmul.f32 %v1270, 0.2
  %v1399 = vmul.f32 %v1271, 0.2
  %v1400 = vmul.f32 %v1272, 0.2
  %v1401 = vmul.f32 %v1273, 0.2
  %v1402 = vmul.f32 %v1274, 0.2
  %v1403 = vmul.f32 %v1275, 0.2
  %v1404 = vmul.f32 %v1276, 0.2
  %v1405 = vmul.f32 %v1277, 0.2
  %v1406 = vmul.f32 %v1278, 0.2
  %v1407 = vmul.f32 %v1279, 0.2
  %v1408 = vmul.f32 %v1280, 0.2
  %v1409 = vmul.f32 %v1281, 0.2
  %v1410 = vmul.f32 %v1282, 0.2
  %v1411 = vmul.f32 %v1283, 0.2
  %v1412 = vmul.f32 %v1284, 0.2
  %v1413 = vmul.f32 %v1285, 0.2
  %v1414 = vmul.f32 %v1286, 0.2
  %v1415 = vmul.f32 %v1287, 0.2
  %v1416 = vmul.f32 %v1288, 0.2
  %v1417 = vmul.f32 %v1289, 0.2
  %v1418 = vmul.f32 %v1290, 0.2
  %v1419 = vmul.f32 %v1291, 0.2
  %v1420 = vmul.f32 %v1292, 0.2
  %v1421 = vmul.f32 %v1293, 0.2
  %v1422 = vmul.f32 %v1294, 0.2
  %v1423 = vmul.f32 %v1295, 0.2
  %v1424 = vmul.f32 %v1296, 0.2
  %v1425 = vsel %vm1297, %v1233, %v1361
  %v1426 = vsel %vm1298, %v1234, %v1362
  %v1427 = vsel %vm1299, %v1235, %v1363
  %v1428 = vsel %vm1300, %v1236, %v1364
  %v1429 = vsel %vm1301, %v1237, %v1365
  %v1430 = vsel %vm1302, %v1238, %v1366
  %v1431 = vsel %vm1303, %v1239, %v1367
  %v1432 = vsel %vm1304, %v1240, %v1368
  %v1433 = vsel %vm1305, %v1241, %v1369
  %v1434 = vsel %vm1306, %v1242, %v1370
  %v1435 = vsel %vm1307, %v1243, %v1371
  %v1436 = vsel %vm1308, %v1244, %v1372
  %v1437 = vsel %vm1309, %v1245, %v1373
  %v1438 = vsel %vm1310, %v1246, %v1374
  %v1439 = vsel %vm1311, %v1247, %v1375
  %v1440 = vsel %vm1312, %v1248, %v1376
  %v1441 = vsel %vm1313, %v1249, %v1377
  %v1442 = vsel %vm1314, %v1250, %v1378
  %v1443 = vsel %vm1315, %v1251, %v1379
  %v1444 = vsel %vm1316, %v1252, %v1380
  %v1445 = vsel %vm1317, %v1253, %v1381
  %v1446 = vsel %vm1318, %v1254, %v1382
  %v1447 = vsel %vm1319, %v1255, %v1383
  %v1448 = vsel %vm1320, %v1256, %v1384
  %v1449 = vsel %vm1321, %v1257, %v1385
  %v1450 = vsel %vm1322, %v1258, %v1386
  %v1451 = vsel %vm1323, %v1259, %v1387
  %v1452 = vsel %vm1324, %v1260, %v1388
  %v1453 = vsel %vm1325, %v1261, %v1389
  %v1454 = vsel %vm1326, %v1262, %v1390
  %v1455 = vsel %vm1327, %v1263, %v1391
  %v1456 = vsel %vm1328, %v1264, %v1392
  %v1457 = vsel %vm1329, %v1265, %v1393
  %v1458 = vsel %vm1330, %v1266, %v1394
  %v1459 = vsel %vm1331, %v1267, %v1395
  %v1460 = vsel %vm1332, %v1268, %v1396
  %v1461 = vsel %vm1333, %v1269, %v1397
  %v1462 = vsel %vm1334, %v1270, %v1398
  %v1463 = vsel %vm1335, %v1271, %v1399
  %v1464 = vsel %vm1336, %v1272, %v1400
  %v1465 = vsel %vm1337, %v1273, %v1401
  %v1466 = vsel %vm1338, %v1274, %v1402
  %v1467 = vsel %vm1339, %v1275, %v1403
  %v1468 = vsel %vm1340, %v1276, %v1404
  %v1469 = vsel %vm1341, %v1277, %v1405
  %v1470 = vsel %vm1342, %v1278, %v1406
  %v1471 = vsel %vm1343, %v1279, %v1407
  %v1472 = vsel %vm1344, %v1280, %v1408
  %v1473 = vsel %vm1345, %v1281, %v1409
  %v1474 = vsel %vm1346, %v1282, %v1410
  %v1475 = vsel %vm1347, %v1283, %v1411
  %v1476 = vsel %vm1348, %v1284, %v1412
  %v1477 = vsel %vm1349, %v1285, %v1413
  %v1478 = vsel %vm1350, %v1286, %v1414
  %v1479 = vsel %vm1351, %v1287, %v1415
  %v1480 = vsel %vm1352, %v1288, %v1416
  %v1481 = vsel %vm1353, %v1289, %v1417
  %v1482 = vsel %vm1354, %v1290, %v1418
  %v1483 = vsel %vm1355, %v1291, %v1419
  %v1484 = vsel %vm1356, %v1292, %v1420
  %v1485 = vsel %vm1357, %v1293, %v1421
  %v1486 = vsel %vm1358, %v1294, %v1422
  %v1487 = vsel %vm1359, %v1295, %v1423
  %v1488 = vsel %vm1360, %v1296, %v1424
  %v1489 = vpack.c.bf16 %v1426, %v1425
  %v1490 = vpack.c.bf16 %v1428, %v1427
  %v1491 = vpack.c.bf16 %v1430, %v1429
  %v1492 = vpack.c.bf16 %v1432, %v1431
  %v1493 = vpack.c.bf16 %v1434, %v1433
  %v1494 = vpack.c.bf16 %v1436, %v1435
  %v1495 = vpack.c.bf16 %v1438, %v1437
  %v1496 = vpack.c.bf16 %v1440, %v1439
  %v1497 = vpack.c.bf16 %v1442, %v1441
  %v1498 = vpack.c.bf16 %v1444, %v1443
  %v1499 = vpack.c.bf16 %v1446, %v1445
  %v1500 = vpack.c.bf16 %v1448, %v1447
  %v1501 = vpack.c.bf16 %v1450, %v1449
  %v1502 = vpack.c.bf16 %v1452, %v1451
  %v1503 = vpack.c.bf16 %v1454, %v1453
  %v1504 = vpack.c.bf16 %v1456, %v1455
  %v1505 = vpack.c.bf16 %v1458, %v1457
  %v1506 = vpack.c.bf16 %v1460, %v1459
  %v1507 = vpack.c.bf16 %v1462, %v1461
  %v1508 = vpack.c.bf16 %v1464, %v1463
  %v1509 = vpack.c.bf16 %v1466, %v1465
  %v1510 = vpack.c.bf16 %v1468, %v1467
  %v1511 = vpack.c.bf16 %v1470, %v1469
  %v1512 = vpack.c.bf16 %v1472, %v1471
  %v1513 = vpack.c.bf16 %v1474, %v1473
  %v1514 = vpack.c.bf16 %v1476, %v1475
  %v1515 = vpack.c.bf16 %v1478, %v1477
  %v1516 = vpack.c.bf16 %v1480, %v1479
  %v1517 = vpack.c.bf16 %v1482, %v1481
  %v1518 = vpack.c.bf16 %v1484, %v1483
  %v1519 = vpack.c.bf16 %v1486, %v1485
  %v1520 = vpack.c.bf16 %v1488, %v1487
  %v1553 = vunpack.c.l.b16 %v1489
  %v1554 = vunpack.c.h.b16 %v1489
  %v1555 = vunpack.c.l.b16 %v1490
  %v1556 = vunpack.c.h.b16 %v1490
  %v1557 = vunpack.c.l.b16 %v1491
  %v1558 = vunpack.c.h.b16 %v1491
  %v1559 = vunpack.c.l.b16 %v1492
  %v1560 = vunpack.c.h.b16 %v1492
  %v1561 = vunpack.c.l.b16 %v1493
  %v1562 = vunpack.c.h.b16 %v1493
  %v1563 = vunpack.c.l.b16 %v1494
  %v1564 = vunpack.c.h.b16 %v1494
  %v1565 = vunpack.c.l.b16 %v1495
  %v1566 = vunpack.c.h.b16 %v1495
  %v1567 = vunpack.c.l.b16 %v1496
  %v1568 = vunpack.c.h.b16 %v1496
  %v1569 = vunpack.c.l.b16 %v1497
  %v1570 = vunpack.c.h.b16 %v1497
  %v1571 = vunpack.c.l.b16 %v1498
  %v1572 = vunpack.c.h.b16 %v1498
  %v1573 = vunpack.c.l.b16 %v1499
  %v1574 = vunpack.c.h.b16 %v1499
  %v1575 = vunpack.c.l.b16 %v1500
  %v1576 = vunpack.c.h.b16 %v1500
  %v1577 = vunpack.c.l.b16 %v1501
  %v1578 = vunpack.c.h.b16 %v1501
  %v1579 = vunpack.c.l.b16 %v1502
  %v1580 = vunpack.c.h.b16 %v1502
  %v1581 = vunpack.c.l.b16 %v1503
  %v1582 = vunpack.c.h.b16 %v1503
  %v1583 = vunpack.c.l.b16 %v1504
  %v1584 = vunpack.c.h.b16 %v1504
  %v1585 = vunpack.c.l.b16 %v1505
  %v1586 = vunpack.c.h.b16 %v1505
  %v1587 = vunpack.c.l.b16 %v1506
  %v1588 = vunpack.c.h.b16 %v1506
  %v1589 = vunpack.c.l.b16 %v1507
  %v1590 = vunpack.c.h.b16 %v1507
  %v1591 = vunpack.c.l.b16 %v1508
  %v1592 = vunpack.c.h.b16 %v1508
  %v1593 = vunpack.c.l.b16 %v1509
  %v1594 = vunpack.c.h.b16 %v1509
  %v1595 = vunpack.c.l.b16 %v1510
  %v1596 = vunpack.c.h.b16 %v1510
  %v1597 = vunpack.c.l.b16 %v1511
  %v1598 = vunpack.c.h.b16 %v1511
  %v1599 = vunpack.c.l.b16 %v1512
  %v1600 = vunpack.c.h.b16 %v1512
  %v1601 = vunpack.c.l.b16 %v1513
  %v1602 = vunpack.c.h.b16 %v1513
  %v1603 = vunpack.c.l.b16 %v1514
  %v1604 = vunpack.c.h.b16 %v1514
  %v1605 = vunpack.c.l.b16 %v1515
  %v1606 = vunpack.c.h.b16 %v1515
  %v1607 = vunpack.c.l.b16 %v1516
  %v1608 = vunpack.c.h.b16 %v1516
  %v1609 = vunpack.c.l.b16 %v1517
  %v1610 = vunpack.c.h.b16 %v1517
  %v1611 = vunpack.c.l.b16 %v1518
  %v1612 = vunpack.c.h.b16 %v1518
  %v1613 = vunpack.c.l.b16 %v1519
  %v1614 = vunpack.c.h.b16 %v1519
  %v1615 = vunpack.c.l.b16 %v1520
  %v1616 = vunpack.c.h.b16 %v1520
  %v1617 = vpack.c.b16 %v1553, %v1553
  %v1618 = vpack.c.b16 %v1554, %v1554
  %v1619 = vpack.c.b16 %v1555, %v1555
  %v1620 = vpack.c.b16 %v1556, %v1556
  %v1621 = vpack.c.b16 %v1557, %v1557
  %v1622 = vpack.c.b16 %v1558, %v1558
  %v1623 = vpack.c.b16 %v1559, %v1559
  %v1624 = vpack.c.b16 %v1560, %v1560
  %v1625 = vpack.c.b16 %v1561, %v1561
  %v1626 = vpack.c.b16 %v1562, %v1562
  %v1627 = vpack.c.b16 %v1563, %v1563
  %v1628 = vpack.c.b16 %v1564, %v1564
  %v1629 = vpack.c.b16 %v1565, %v1565
  %v1630 = vpack.c.b16 %v1566, %v1566
  %v1631 = vpack.c.b16 %v1567, %v1567
  %v1632 = vpack.c.b16 %v1568, %v1568
  %v1633 = vpack.c.b16 %v1569, %v1569
  %v1634 = vpack.c.b16 %v1570, %v1570
  %v1635 = vpack.c.b16 %v1571, %v1571
  %v1636 = vpack.c.b16 %v1572, %v1572
  %v1637 = vpack.c.b16 %v1573, %v1573
  %v1638 = vpack.c.b16 %v1574, %v1574
  %v1639 = vpack.c.b16 %v1575, %v1575
  %v1640 = vpack.c.b16 %v1576, %v1576
  %v1641 = vpack.c.b16 %v1577, %v1577
  %v1642 = vpack.c.b16 %v1578, %v1578
  %v1643 = vpack.c.b16 %v1579, %v1579
  %v1644 = vpack.c.b16 %v1580, %v1580
  %v1645 = vpack.c.b16 %v1581, %v1581
  %v1646 = vpack.c.b16 %v1582, %v1582
  %v1647 = vpack.c.b16 %v1583, %v1583
  %v1648 = vpack.c.b16 %v1584, %v1584
  %v1649 = vpack.c.b16 %v1585, %v1585
  %v1650 = vpack.c.b16 %v1586, %v1586
  %v1651 = vpack.c.b16 %v1587, %v1587
  %v1652 = vpack.c.b16 %v1588, %v1588
  %v1653 = vpack.c.b16 %v1589, %v1589
  %v1654 = vpack.c.b16 %v1590, %v1590
  %v1655 = vpack.c.b16 %v1591, %v1591
  %v1656 = vpack.c.b16 %v1592, %v1592
  %v1657 = vpack.c.b16 %v1593, %v1593
  %v1658 = vpack.c.b16 %v1594, %v1594
  %v1659 = vpack.c.b16 %v1595, %v1595
  %v1660 = vpack.c.b16 %v1596, %v1596
  %v1661 = vpack.c.b16 %v1597, %v1597
  %v1662 = vpack.c.b16 %v1598, %v1598
  %v1663 = vpack.c.b16 %v1599, %v1599
  %v1664 = vpack.c.b16 %v1600, %v1600
  %v1665 = vpack.c.b16 %v1601, %v1601
  %v1666 = vpack.c.b16 %v1602, %v1602
  %v1667 = vpack.c.b16 %v1603, %v1603
  %v1668 = vpack.c.b16 %v1604, %v1604
  %v1669 = vpack.c.b16 %v1605, %v1605
  %v1670 = vpack.c.b16 %v1606, %v1606
  %v1671 = vpack.c.b16 %v1607, %v1607
  %v1672 = vpack.c.b16 %v1608, %v1608
  %v1673 = vpack.c.b16 %v1609, %v1609
  %v1674 = vpack.c.b16 %v1610, %v1610
  %v1675 = vpack.c.b16 %v1611, %v1611
  %v1676 = vpack.c.b16 %v1612, %v1612
  %v1677 = vpack.c.b16 %v1613, %v1613
  %v1678 = vpack.c.b16 %v1614, %v1614
  %v1679 = vpack.c.b16 %v1615, %v1615
  %v1680 = vpack.c.b16 %v1616, %v1616
  %1745 = vst [vmem:[%s4] sm:$0xf] %v1617
  %1746 = vst [vmem:[%s4 + $0x4] sm:$0xf] %v1618
  %1747 = vst [vmem:[%s4 + $0x8] sm:$0xf] %v1619
  %1748 = vst [vmem:[%s4 + $0xc] sm:$0xf] %v1620
  %1749 = vst [vmem:[%s4 + $0x10] sm:$0xf] %v1621
  %1750 = vst [vmem:[%s4 + $0x14] sm:$0xf] %v1622
  %1751 = vst [vmem:[%s4 + $0x18] sm:$0xf] %v1623
  %1752 = vst [vmem:[%s4 + $0x1c] sm:$0xf] %v1624
  %1753 = vst [vmem:[%s4 + $0x20] sm:$0xf] %v1625
  %1754 = vst [vmem:[%s4 + $0x24] sm:$0xf] %v1626
  %1755 = vst [vmem:[%s4 + $0x28] sm:$0xf] %v1627
  %1756 = vst [vmem:[%s4 + $0x2c] sm:$0xf] %v1628
  %1757 = vst [vmem:[%s4 + $0x30] sm:$0xf] %v1629
  %1758 = vst [vmem:[%s4 + $0x34] sm:$0xf] %v1630
  %1759 = vst [vmem:[%s4 + $0x38] sm:$0xf] %v1631
  %1760 = vst [vmem:[%s4 + $0x3c] sm:$0xf] %v1632
  %1761 = vst [vmem:[%s4 + $0x40] sm:$0xf] %v1633
  %1762 = vst [vmem:[%s4 + $0x44] sm:$0xf] %v1634
  %1763 = vst [vmem:[%s4 + $0x48] sm:$0xf] %v1635
  %1764 = vst [vmem:[%s4 + $0x4c] sm:$0xf] %v1636
  %1765 = vst [vmem:[%s4 + $0x50] sm:$0xf] %v1637
  %1766 = vst [vmem:[%s4 + $0x54] sm:$0xf] %v1638
  %1767 = vst [vmem:[%s4 + $0x58] sm:$0xf] %v1639
  %1768 = vst [vmem:[%s4 + $0x5c] sm:$0xf] %v1640
  %1769 = vst [vmem:[%s4 + $0x60] sm:$0xf] %v1641
  %1770 = vst [vmem:[%s4 + $0x64] sm:$0xf] %v1642
  %1771 = vst [vmem:[%s4 + $0x68] sm:$0xf] %v1643
  %1772 = vst [vmem:[%s4 + $0x6c] sm:$0xf] %v1644
  %1773 = vst [vmem:[%s4 + $0x70] sm:$0xf] %v1645
  %1774 = vst [vmem:[%s4 + $0x74] sm:$0xf] %v1646
  %1775 = vst [vmem:[%s4 + $0x78] sm:$0xf] %v1647
  %1776 = vst [vmem:[%s4 + $0x7c] sm:$0xf] %v1648
  %1777 = vst [vmem:[%s4 + $0x80] sm:$0xf] %v1649
  %1778 = vst [vmem:[%s4 + $0x84] sm:$0xf] %v1650
  %1779 = vst [vmem:[%s4 + $0x88] sm:$0xf] %v1651
  %1780 = vst [vmem:[%s4 + $0x8c] sm:$0xf] %v1652
  %1781 = vst [vmem:[%s4 + $0x90] sm:$0xf] %v1653
  %1782 = vst [vmem:[%s4 + $0x94] sm:$0xf] %v1654
  %1783 = vst [vmem:[%s4 + $0x98] sm:$0xf] %v1655
  %1784 = vst [vmem:[%s4 + $0x9c] sm:$0xf] %v1656
  %1785 = vst [vmem:[%s4 + $0xa0] sm:$0xf] %v1657
  %1786 = vst [vmem:[%s4 + $0xa4] sm:$0xf] %v1658
  %1787 = vst [vmem:[%s4 + $0xa8] sm:$0xf] %v1659
  %1788 = vst [vmem:[%s4 + $0xac] sm:$0xf] %v1660
  %1789 = vst [vmem:[%s4 + $0xb0] sm:$0xf] %v1661
  %1790 = vst [vmem:[%s4 + $0xb4] sm:$0xf] %v1662
  %1791 = vst [vmem:[%s4 + $0xb8] sm:$0xf] %v1663
  %1792 = vst [vmem:[%s4 + $0xbc] sm:$0xf] %v1664
  %1793 = vst [vmem:[%s4 + $0xc0] sm:$0xf] %v1665
  %1794 = vst [vmem:[%s4 + $0xc4] sm:$0xf] %v1666
  %1795 = vst [vmem:[%s4 + $0xc8] sm:$0xf] %v1667
  %1796 = vst [vmem:[%s4 + $0xcc] sm:$0xf] %v1668
  %1797 = vst [vmem:[%s4 + $0xd0] sm:$0xf] %v1669
  %1798 = vst [vmem:[%s4 + $0xd4] sm:$0xf] %v1670
  %1799 = vst [vmem:[%s4 + $0xd8] sm:$0xf] %v1671
  %1800 = vst [vmem:[%s4 + $0xdc] sm:$0xf] %v1672
  %1801 = vst [vmem:[%s4 + $0xe0] sm:$0xf] %v1673
  %1802 = vst [vmem:[%s4 + $0xe4] sm:$0xf] %v1674
  %1803 = vst [vmem:[%s4 + $0xe8] sm:$0xf] %v1675
  %1804 = vst [vmem:[%s4 + $0xec] sm:$0xf] %v1676
  %1805 = vst [vmem:[%s4 + $0xf0] sm:$0xf] %v1677
  %1806 = vst [vmem:[%s4 + $0xf4] sm:$0xf] %v1678
  %1807 = vst [vmem:[%s4 + $0xf8] sm:$0xf] %v1679
  %1808 = vst [vmem:[%s4 + $0xfc] sm:$0xf] %v1680
  // Predicated region
  $region18: #{discriminator_forward.5} parent=0 // pred_check
    _
  $region19: #{discriminator_forward.5} parent=0 // pred_check_branch
    %1810 = sbr.rel (0) target = $region21
  $region20: #{discriminator_forward.5} parent=0 // pred_region
    _
  $region21: #{discriminator_forward.5} parent=0 // pred_fallthru
    _
  // Predicated region
  $region22: #{discriminator_forward.5} parent=0 // pred_check
    _
  $region23: #{discriminator_forward.5} parent=0 // pred_check_branch
    %1812 = sbr.rel (0) target = $region25
  $region24: #{discriminator_forward.5} parent=0 // pred_region
    _
  $region25: #{discriminator_forward.5} parent=0 // pred_fallthru
    _

// kernel: discriminator_forward.6
$region0: #{discriminator_forward.6}
  #allocation0 [shape = 'u32[]', space=smem, size = 0x4, offset = 0x4, fixed_abs, tag = 'smem constant byte address 0x4 - core index']
  #allocation1 [shape = 'u32[144,128]{1,0:T(1,128)}', space=vmem, size = 0x12000, scoped, tag = 'internal scratch']
  %s0 = inlined_call_operand.vmem [shape: bf16[128,256], index: 0, kind: input, shape index: {}]
  %s1 = inlined_call_operand.vmem [shape: bf16[256,128], index: 1, kind: input, shape index: {}]
  %s2 = inlined_call_operand.vmem [shape: f32[1,128], index: 2, kind: input, shape index: {}]
  %s3 = inlined_call_operand.vmem [shape: f32[1,128], index: 3, kind: input, shape index: {}]
  %s4 = inlined_call_operand.vmem [shape: bf16[128,128], index: 4, kind: output, shape index: {}]
  %s5 = sld [smem:[#allocation0]]
  $region26: #{discriminator_forward.6} parent=0
    _
  %s7 = ssub.s32 1, %s5
  %s8 = scalar_select 0, %s7, %s5
  // Predicated region
  $region2: #{discriminator_forward.6} parent=0 // pred_check
    _
  $region3: #{discriminator_forward.6} parent=0 // pred_check_branch
    %10 = sbr.rel (0) target = $region5
  $region4: #{discriminator_forward.6} parent=0 // pred_region
    _
  $region5: #{discriminator_forward.6} parent=0 // pred_fallthru
    _
  // Predicated region
  $region6: #{discriminator_forward.6} parent=0 // pred_check
    _
  $region7: #{discriminator_forward.6} parent=0 // pred_check_branch
    %12 = sbr.rel (0) target = $region9
  $region8: #{discriminator_forward.6} parent=0 // pred_region
    _
  $region9: #{discriminator_forward.6} parent=0 // pred_fallthru
    _
  // Predicated region
  $region10: #{discriminator_forward.6} parent=0 // pred_check
    _
  $region11: #{discriminator_forward.6} parent=0 // pred_check_branch
    %14 = sbr.rel (0) target = $region13
  $region12: #{discriminator_forward.6} parent=0 // pred_region
    _
  $region13: #{discriminator_forward.6} parent=0 // pred_fallthru
    _
  // Predicated region
  $region14: #{discriminator_forward.6} parent=0 // pred_check
    _
  $region15: #{discriminator_forward.6} parent=0 // pred_check_branch
    %16 = sbr.rel (0) target = $region17
  $region16: #{discriminator_forward.6} parent=0 // pred_region
    _
  $region17: #{discriminator_forward.6} parent=0 // pred_fallthru
    _
  %v18 = vld [vmem:[%s0] sm:$0xff]
  %v19 = vld [vmem:[%s0 + $0x8] sm:$0xff]
  %v20 = vld [vmem:[%s0 + $0x10] sm:$0xff]
  %v21 = vld [vmem:[%s0 + $0x18] sm:$0xff]
  %v22 = vld [vmem:[%s0 + $0x20] sm:$0xff]
  %v23 = vld [vmem:[%s0 + $0x28] sm:$0xff]
  %v24 = vld [vmem:[%s0 + $0x30] sm:$0xff]
  %v25 = vld [vmem:[%s0 + $0x38] sm:$0xff]
  %v26 = vld [vmem:[%s0 + $0x40] sm:$0xff]
  %v27 = vld [vmem:[%s0 + $0x48] sm:$0xff]
  %v28 = vld [vmem:[%s0 + $0x50] sm:$0xff]
  %v29 = vld [vmem:[%s0 + $0x58] sm:$0xff]
  %v30 = vld [vmem:[%s0 + $0x60] sm:$0xff]
  %v31 = vld [vmem:[%s0 + $0x68] sm:$0xff]
  %v32 = vld [vmem:[%s0 + $0x70] sm:$0xff]
  %v33 = vld [vmem:[%s0 + $0x78] sm:$0xff]
  %v34 = vld [vmem:[%s1] sm:$0xf]
  %v35 = vld [vmem:[%s1 + $0x4] sm:$0xf]
  %v36 = vld [vmem:[%s1 + $0x8] sm:$0xf]
  %v37 = vld [vmem:[%s1 + $0xc] sm:$0xf]
  %v38 = vld [vmem:[%s1 + $0x10] sm:$0xf]
  %v39 = vld [vmem:[%s1 + $0x14] sm:$0xf]
  %v40 = vld [vmem:[%s1 + $0x18] sm:$0xf]
  %v41 = vld [vmem:[%s1 + $0x1c] sm:$0xf]
  %v42 = vld [vmem:[%s1 + $0x20] sm:$0xf]
  %v43 = vld [vmem:[%s1 + $0x24] sm:$0xf]
  %v44 = vld [vmem:[%s1 + $0x28] sm:$0xf]
  %v45 = vld [vmem:[%s1 + $0x2c] sm:$0xf]
  %v46 = vld [vmem:[%s1 + $0x30] sm:$0xf]
  %v47 = vld [vmem:[%s1 + $0x34] sm:$0xf]
  %v48 = vld [vmem:[%s1 + $0x38] sm:$0xf]
  %v49 = vld [vmem:[%s1 + $0x3c] sm:$0xf]
  %v50 = vld [vmem:[%s1 + $0x40] sm:$0xf]
  %v51 = vld [vmem:[%s1 + $0x44] sm:$0xf]
  %v52 = vld [vmem:[%s1 + $0x48] sm:$0xf]
  %v53 = vld [vmem:[%s1 + $0x4c] sm:$0xf]
  %v54 = vld [vmem:[%s1 + $0x50] sm:$0xf]
  %v55 = vld [vmem:[%s1 + $0x54] sm:$0xf]
  %v56 = vld [vmem:[%s1 + $0x58] sm:$0xf]
  %v57 = vld [vmem:[%s1 + $0x5c] sm:$0xf]
  %v58 = vld [vmem:[%s1 + $0x60] sm:$0xf]
  %v59 = vld [vmem:[%s1 + $0x64] sm:$0xf]
  %v60 = vld [vmem:[%s1 + $0x68] sm:$0xf]
  %v61 = vld [vmem:[%s1 + $0x6c] sm:$0xf]
  %v62 = vld [vmem:[%s1 + $0x70] sm:$0xf]
  %v63 = vld [vmem:[%s1 + $0x74] sm:$0xf]
  %v64 = vld [vmem:[%s1 + $0x78] sm:$0xf]
  %v65 = vld [vmem:[%s1 + $0x7c] sm:$0xf]
  %v82 = vunpack.c.l.b16 %v18
  %v83 = vunpack.c.h.b16 %v18
  %v84 = vunpack.c.l.b16 %v19
  %v85 = vunpack.c.h.b16 %v19
  %v86 = vunpack.c.l.b16 %v20
  %v87 = vunpack.c.h.b16 %v20
  %v88 = vunpack.c.l.b16 %v21
  %v89 = vunpack.c.h.b16 %v21
  %v90 = vunpack.c.l.b16 %v22
  %v91 = vunpack.c.h.b16 %v22
  %v92 = vunpack.c.l.b16 %v23
  %v93 = vunpack.c.h.b16 %v23
  %v94 = vunpack.c.l.b16 %v24
  %v95 = vunpack.c.h.b16 %v24
  %v96 = vunpack.c.l.b16 %v25
  %v97 = vunpack.c.h.b16 %v25
  %v98 = vunpack.c.l.b16 %v26
  %v99 = vunpack.c.h.b16 %v26
  %v100 = vunpack.c.l.b16 %v27
  %v101 = vunpack.c.h.b16 %v27
  %v102 = vunpack.c.l.b16 %v28
  %v103 = vunpack.c.h.b16 %v28
  %v104 = vunpack.c.l.b16 %v29
  %v105 = vunpack.c.h.b16 %v29
  %v106 = vunpack.c.l.b16 %v30
  %v107 = vunpack.c.h.b16 %v30
  %v108 = vunpack.c.l.b16 %v31
  %v109 = vunpack.c.h.b16 %v31
  %v110 = vunpack.c.l.b16 %v32
  %v111 = vunpack.c.h.b16 %v32
  %v112 = vunpack.c.l.b16 %v33
  %v113 = vunpack.c.h.b16 %v33
  %v114 = vpack.c.b16 %v84, %v82
  %v115 = vpack.c.b16 %v85, %v83
  %v116 = vpack.c.b16 %v88, %v86
  %v117 = vpack.c.b16 %v89, %v87
  %v118 = vpack.c.b16 %v92, %v90
  %v119 = vpack.c.b16 %v93, %v91
  %v120 = vpack.c.b16 %v96, %v94
  %v121 = vpack.c.b16 %v97, %v95
  %v122 = vpack.c.b16 %v100, %v98
  %v123 = vpack.c.b16 %v101, %v99
  %v124 = vpack.c.b16 %v104, %v102
  %v125 = vpack.c.b16 %v105, %v103
  %v126 = vpack.c.b16 %v108, %v106
  %v127 = vpack.c.b16 %v109, %v107
  %v128 = vpack.c.b16 %v112, %v110
  %v129 = vpack.c.b16 %v113, %v111
  %v178 = vunpack.c.l.b16 %v34
  %v179 = vunpack.c.l.b16 %v35
  %v180 = vunpack.c.l.b16 %v36
  %v181 = vunpack.c.l.b16 %v37
  %v182 = vunpack.c.l.b16 %v38
  %v183 = vunpack.c.l.b16 %v39
  %v184 = vunpack.c.l.b16 %v40
  %v185 = vunpack.c.l.b16 %v41
  %v186 = vunpack.c.l.b16 %v42
  %v187 = vunpack.c.l.b16 %v43
  %v188 = vunpack.c.l.b16 %v44
  %v189 = vunpack.c.l.b16 %v45
  %v190 = vunpack.c.l.b16 %v46
  %v191 = vunpack.c.l.b16 %v47
  %v192 = vunpack.c.l.b16 %v48
  %v193 = vunpack.c.l.b16 %v49
  %v194 = vunpack.c.l.b16 %v50
  %v195 = vunpack.c.l.b16 %v51
  %v196 = vunpack.c.l.b16 %v52
  %v197 = vunpack.c.l.b16 %v53
  %v198 = vunpack.c.l.b16 %v54
  %v199 = vunpack.c.l.b16 %v55
  %v200 = vunpack.c.l.b16 %v56
  %v201 = vunpack.c.l.b16 %v57
  %v202 = vunpack.c.l.b16 %v58
  %v203 = vunpack.c.l.b16 %v59
  %v204 = vunpack.c.l.b16 %v60
  %v205 = vunpack.c.l.b16 %v61
  %v206 = vunpack.c.l.b16 %v62
  %v207 = vunpack.c.l.b16 %v63
  %v208 = vunpack.c.l.b16 %v64
  %v209 = vunpack.c.l.b16 %v65
  %v210 = vpack.c.b16 %v179, %v178
  %v211 = vpack.c.b16 %v181, %v180
  %v212 = vpack.c.b16 %v183, %v182
  %v213 = vpack.c.b16 %v185, %v184
  %v214 = vpack.c.b16 %v187, %v186
  %v215 = vpack.c.b16 %v189, %v188
  %v216 = vpack.c.b16 %v191, %v190
  %v217 = vpack.c.b16 %v193, %v192
  %v218 = vpack.c.b16 %v195, %v194
  %v219 = vpack.c.b16 %v197, %v196
  %v220 = vpack.c.b16 %v199, %v198
  %v221 = vpack.c.b16 %v201, %v200
  %v222 = vpack.c.b16 %v203, %v202
  %v223 = vpack.c.b16 %v205, %v204
  %v224 = vpack.c.b16 %v207, %v206
  %v225 = vpack.c.b16 %v209, %v208
  %242 = vmatprep.subr.bf16.mxu0 0
  %243 = vmatpush1.bf16.msra.mxu0 %v210
  %244 = vmatprep.subr.bf16.mxu0 0
  %245 = vmatpush1.bf16.msra.mxu0 %v211
  %246 = vmatprep.subr.bf16.mxu0 0
  %247 = vmatpush1.bf16.msra.mxu0 %v212
  %248 = vmatprep.subr.bf16.mxu0 0
  %249 = vmatpush1.bf16.msra.mxu0 %v213
  %250 = vmatprep.subr.bf16.mxu0 0
  %251 = vmatpush1.bf16.msra.mxu0 %v214
  %252 = vmatprep.subr.bf16.mxu0 0
  %253 = vmatpush1.bf16.msra.mxu0 %v215
  %254 = vmatprep.subr.bf16.mxu0 0
  %255 = vmatpush1.bf16.msra.mxu0 %v216
  %256 = vmatprep.subr.bf16.mxu0 0
  %257 = vmatpush1.bf16.msra.mxu0 %v217
  %258 = vmatprep.subr.bf16.mxu0 0
  %259 = vmatpush1.bf16.msra.mxu0 %v218
  %260 = vmatprep.subr.bf16.mxu0 0
  %261 = vmatpush1.bf16.msra.mxu0 %v219
  %262 = vmatprep.subr.bf16.mxu0 0
  %263 = vmatpush1.bf16.msra.mxu0 %v220
  %264 = vmatprep.subr.bf16.mxu0 0
  %265 = vmatpush1.bf16.msra.mxu0 %v221
  %266 = vmatprep.subr.bf16.mxu0 0
  %267 = vmatpush1.bf16.msra.mxu0 %v222
  %268 = vmatprep.subr.bf16.mxu0 0
  %269 = vmatpush1.bf16.msra.mxu0 %v223
  %270 = vmatprep.subr.bf16.mxu0 0
  %271 = vmatpush1.bf16.msra.mxu0 %v224
  %272 = vmatprep.subr.bf16.mxu0 0
  %273 = vmatpush1.bf16.msra.mxu0 %v225
  %274 = vmatprep.mubr.bf16.mxu0 %v115
  %275 = vmatmul.mubr.bf16.gmra.mrb[0].mxu0 %v114
  %v276 = vpop.f32.mrb[0].mxu0
  %v277 = vadd.f32 0.0, %v276
  %v278 = vpop.f32.mrb[0].mxu0
  %v279 = vpop.f32.mrb[0].mxu0
  %v280 = vadd.f32 0.0, %v279
  %v281 = vpop.f32.mrb[0].mxu0
  %282 = vmatprep.mubr.bf16.mxu0 %v117
  %283 = vmatmul.mubr.bf16.gmra.mrb[0].mxu0 %v116
  %v284 = vpop.f32.mrb[0].mxu0
  %v285 = vadd.f32 0.0, %v284
  %v286 = vpop.f32.mrb[0].mxu0
  %v287 = vpop.f32.mrb[0].mxu0
  %v288 = vadd.f32 0.0, %v287
  %v289 = vpop.f32.mrb[0].mxu0
  %290 = vmatprep.mubr.bf16.mxu0 %v119
  %291 = vmatmul.mubr.bf16.gmra.mrb[0].mxu0 %v118
  %v292 = vpop.f32.mrb[0].mxu0
  %v293 = vadd.f32 0.0, %v292
  %v294 = vpop.f32.mrb[0].mxu0
  %v295 = vpop.f32.mrb[0].mxu0
  %v296 = vadd.f32 0.0, %v295
  %v297 = vpop.f32.mrb[0].mxu0
  %298 = vmatprep.mubr.bf16.mxu0 %v121
  %299 = vmatmul.mubr.bf16.gmra.mrb[0].mxu0 %v120
  %v300 = vpop.f32.mrb[0].mxu0
  %v301 = vadd.f32 0.0, %v300
  %v302 = vpop.f32.mrb[0].mxu0
  %v303 = vpop.f32.mrb[0].mxu0
  %v304 = vadd.f32 0.0, %v303
  %v305 = vpop.f32.mrb[0].mxu0
  %306 = vmatprep.mubr.bf16.mxu0 %v123
  %307 = vmatmul.mubr.bf16.gmra.mrb[0].mxu0 %v122
  %v308 = vpop.f32.mrb[0].mxu0
  %v309 = vadd.f32 0.0, %v308
  %v310 = vpop.f32.mrb[0].mxu0
  %v311 = vpop.f32.mrb[0].mxu0
  %v312 = vadd.f32 0.0, %v311
  %v313 = vpop.f32.mrb[0].mxu0
  %314 = vmatprep.mubr.bf16.mxu0 %v125
  %315 = vmatmul.mubr.bf16.gmra.mrb[0].mxu0 %v124
  %v316 = vpop.f32.mrb[0].mxu0
  %v317 = vadd.f32 0.0, %v316
  %v318 = vpop.f32.mrb[0].mxu0
  %v319 = vpop.f32.mrb[0].mxu0
  %v320 = vadd.f32 0.0, %v319
  %v321 = vpop.f32.mrb[0].mxu0
  %322 = vmatprep.mubr.bf16.mxu0 %v127
  %323 = vmatmul.mubr.bf16.gmra.mrb[0].mxu0 %v126
  %v324 = vpop.f32.mrb[0].mxu0
  %v325 = vadd.f32 0.0, %v324
  %v326 = vpop.f32.mrb[0].mxu0
  %v327 = vpop.f32.mrb[0].mxu0
  %v328 = vadd.f32 0.0, %v327
  %v329 = vpop.f32.mrb[0].mxu0
  %330 = vmatprep.mubr.bf16.mxu0 %v129
  %331 = vmatmul.mubr.bf16.gmra.mrb[0].mxu0 %v128
  %v332 = vpop.f32.mrb[0].mxu0
  %v333 = vadd.f32 0.0, %v332
  %v334 = vpop.f32.mrb[0].mxu0
  %v335 = vpop.f32.mrb[0].mxu0
  %v336 = vadd.f32 0.0, %v335
  %v337 = vpop.f32.mrb[0].mxu0
  %338 = vdwg.mxu0
  %v339 = vlaneseq
  %v340 = vshrl.u32 %v339, 7
  %v341 = vadd.s32 %v340, 8
  %v342 = vadd.s32 %v340, 16
  %v343 = vadd.s32 %v340, 24
  %v344 = vadd.s32 %v340, 32
  %v345 = vadd.s32 %v340, 40
  %v346 = vadd.s32 %v340, 48
  %v347 = vadd.s32 %v340, 56
  %v348 = vadd.s32 %v340, 64
  %v349 = vadd.s32 %v340, 72
  %v350 = vadd.s32 %v340, 80
  %v351 = vadd.s32 %v340, 88
  %v352 = vadd.s32 %v340, 96
  %v353 = vadd.s32 %v340, 104
  %v354 = vadd.s32 %v340, 112
  %v355 = vadd.s32 %v340, 120
  %vm356 = vcmp.lt.s32.totalorder %v340, 128
  %vm357 = vcmp.lt.s32.totalorder %v341, 128
  %vm358 = vcmp.lt.s32.totalorder %v342, 128
  %vm359 = vcmp.lt.s32.totalorder %v343, 128
  %vm360 = vcmp.lt.s32.totalorder %v344, 128
  %vm361 = vcmp.lt.s32.totalorder %v345, 128
  %vm362 = vcmp.lt.s32.totalorder %v346, 128
  %vm363 = vcmp.lt.s32.totalorder %v347, 128
  %vm364 = vcmp.lt.s32.totalorder %v348, 128
  %vm365 = vcmp.lt.s32.totalorder %v349, 128
  %vm366 = vcmp.lt.s32.totalorder %v350, 128
  %vm367 = vcmp.lt.s32.totalorder %v351, 128
  %vm368 = vcmp.lt.s32.totalorder %v352, 128
  %vm369 = vcmp.lt.s32.totalorder %v353, 128
  %vm370 = vcmp.lt.s32.totalorder %v354, 128
  %vm371 = vcmp.lt.s32.totalorder %v355, 128
  %v372 = vsel %vm356, %v277, 0.0
  %v373 = vsel %vm357, %v280, 0.0
  %v374 = vsel %vm358, %v285, 0.0
  %v375 = vsel %vm359, %v288, 0.0
  %v376 = vsel %vm360, %v293, 0.0
  %v377 = vsel %vm361, %v296, 0.0
  %v378 = vsel %vm362, %v301, 0.0
  %v379 = vsel %vm363, %v304, 0.0
  %v380 = vsel %vm364, %v309, 0.0
  %v381 = vsel %vm365, %v312, 0.0
  %v382 = vsel %vm366, %v317, 0.0
  %v383 = vsel %vm367, %v320, 0.0
  %v384 = vsel %vm368, %v325, 0.0
  %v385 = vsel %vm369, %v328, 0.0
  %v386 = vsel %vm370, %v333, 0.0
  %v387 = vsel %vm371, %v336, 0.0
  %v388 = vadd.f32 %v372, %v373
  %v389 = vadd.f32 %v388, %v374
  %v390 = vadd.f32 %v389, %v375
  %v391 = vadd.f32 %v390, %v376
  %v392 = vadd.f32 %v391, %v377
  %v393 = vadd.f32 %v392, %v378
  %v394 = vadd.f32 %v393, %v379
  %v395 = vadd.f32 %v394, %v380
  %v396 = vadd.f32 %v395, %v381
  %v397 = vadd.f32 %v396, %v382
  %v398 = vadd.f32 %v397, %v383
  %v399 = vadd.f32 %v398, %v384
  %v400 = vadd.f32 %v399, %v385
  %v401 = vadd.f32 %v400, %v386
  %v402 = vadd.f32 %v401, %v387
  %v403 = vrot.slane %v402, 4
  %v404 = vadd.f32 %v402, %v403
  %v405 = vrot.slane %v404, 2
  %v406 = vadd.f32 %v404, %v405
  %v407 = vrot.slane %v406, 1
  %v408 = vadd.f32 %v406, %v407
  %v409 = vmul.f32 %v408, 0.0078125
  %v410 = vsub.f32 %v277, %v409
  %v411 = vsub.f32 %v280, %v409
  %v412 = vsub.f32 %v285, %v409
  %v413 = vsub.f32 %v288, %v409
  %v414 = vsub.f32 %v293, %v409
  %v415 = vsub.f32 %v296, %v409
  %v416 = vsub.f32 %v301, %v409
  %v417 = vsub.f32 %v304, %v409
  %v418 = vsub.f32 %v309, %v409
  %v419 = vsub.f32 %v312, %v409
  %v420 = vsub.f32 %v317, %v409
  %v421 = vsub.f32 %v320, %v409
  %v422 = vsub.f32 %v325, %v409
  %v423 = vsub.f32 %v328, %v409
  %v424 = vsub.f32 %v333, %v409
  %v425 = vsub.f32 %v336, %v409
  %v426 = vsel %vm356, %v410, 0.0
  %v427 = vsel %vm357, %v411, 0.0
  %v428 = vsel %vm358, %v412, 0.0
  %v429 = vsel %vm359, %v413, 0.0
  %v430 = vsel %vm360, %v414, 0.0
  %v431 = vsel %vm361, %v415, 0.0
  %v432 = vsel %vm362, %v416, 0.0
  %v433 = vsel %vm363, %v417, 0.0
  %v434 = vsel %vm364, %v418, 0.0
  %v435 = vsel %vm365, %v419, 0.0
  %v436 = vsel %vm366, %v420, 0.0
  %v437 = vsel %vm367, %v421, 0.0
  %v438 = vsel %vm368, %v422, 0.0
  %v439 = vsel %vm369, %v423, 0.0
  %v440 = vsel %vm370, %v424, 0.0
  %v441 = vsel %vm371, %v425, 0.0
  %v442 = vmul.f32 %v426, %v426
  %v443 = vmul.f32 %v427, %v427
  %v444 = vmul.f32 %v428, %v428
  %v445 = vmul.f32 %v429, %v429
  %v446 = vmul.f32 %v430, %v430
  %v447 = vmul.f32 %v431, %v431
  %v448 = vmul.f32 %v432, %v432
  %v449 = vmul.f32 %v433, %v433
  %v450 = vmul.f32 %v434, %v434
  %v451 = vmul.f32 %v435, %v435
  %v452 = vmul.f32 %v436, %v436
  %v453 = vmul.f32 %v437, %v437
  %v454 = vmul.f32 %v438, %v438
  %v455 = vmul.f32 %v439, %v439
  %v456 = vmul.f32 %v440, %v440
  %v457 = vmul.f32 %v441, %v441
  %v458 = vadd.f32 %v442, %v443
  %v459 = vadd.f32 %v458, %v444
  %v460 = vadd.f32 %v459, %v445
  %v461 = vadd.f32 %v460, %v446
  %v462 = vadd.f32 %v461, %v447
  %v463 = vadd.f32 %v462, %v448
  %v464 = vadd.f32 %v463, %v449
  %v465 = vadd.f32 %v464, %v450
  %v466 = vadd.f32 %v465, %v451
  %v467 = vadd.f32 %v466, %v452
  %v468 = vadd.f32 %v467, %v453
  %v469 = vadd.f32 %v468, %v454
  %v470 = vadd.f32 %v469, %v455
  %v471 = vadd.f32 %v470, %v456
  %v472 = vadd.f32 %v471, %v457
  %v473 = vrot.slane %v472, 4
  %v474 = vadd.f32 %v472, %v473
  %v475 = vrot.slane %v474, 2
  %v476 = vadd.f32 %v474, %v475
  %v477 = vrot.slane %v476, 1
  %v478 = vadd.f32 %v476, %v477
  %v479 = vmul.f32 %v478, 0.0078125
  %v480 = vld [vmem:[%s2] sm:$0x1]
  %v481 = vadd.f32 %v479, 1e-05
  %v482 = vrsqrt.pop %v481
  %v483 = vmul.f32 %v480, %v482
  %v485 = vlaneseq
  %v486 = vshrl.u32 %v485, 7
  %v487 = vsub.s32 0, %v486
  %v488 = vrot.slane %v483, %v487
  %v490 = vmul.f32 %v410, %v488
  %v491 = vmul.f32 %v411, %v488
  %v492 = vmul.f32 %v412, %v488
  %v493 = vmul.f32 %v413, %v488
  %v494 = vmul.f32 %v414, %v488
  %v495 = vmul.f32 %v415, %v488
  %v496 = vmul.f32 %v416, %v488
  %v497 = vmul.f32 %v417, %v488
  %v498 = vmul.f32 %v418, %v488
  %v499 = vmul.f32 %v419, %v488
  %v500 = vmul.f32 %v420, %v488
  %v501 = vmul.f32 %v421, %v488
  %v502 = vmul.f32 %v422, %v488
  %v503 = vmul.f32 %v423, %v488
  %v504 = vmul.f32 %v424, %v488
  %v505 = vmul.f32 %v425, %v488
  %v506 = vld [vmem:[%s3] sm:$0x1]
  %v508 = vlaneseq
  %v509 = vshrl.u32 %v508, 7
  %v510 = vsub.s32 0, %v509
  %v511 = vrot.slane %v506, %v510
  %v513 = vadd.f32 %v490, %v511
  %v514 = vadd.f32 %v491, %v511
  %v515 = vadd.f32 %v492, %v511
  %v516 = vadd.f32 %v493, %v511
  %v517 = vadd.f32 %v494, %v511
  %v518 = vadd.f32 %v495, %v511
  %v519 = vadd.f32 %v496, %v511
  %v520 = vadd.f32 %v497, %v511
  %v521 = vadd.f32 %v498, %v511
  %v522 = vadd.f32 %v499, %v511
  %v523 = vadd.f32 %v500, %v511
  %v524 = vadd.f32 %v501, %v511
  %v525 = vadd.f32 %v502, %v511
  %v526 = vadd.f32 %v503, %v511
  %v527 = vadd.f32 %v504, %v511
  %v528 = vadd.f32 %v505, %v511
  %vm529 = vcmp.ge.f32.partialorder %v513, 0.0
  %vm530 = vcmp.ge.f32.partialorder %v514, 0.0
  %vm531 = vcmp.ge.f32.partialorder %v515, 0.0
  %vm532 = vcmp.ge.f32.partialorder %v516, 0.0
  %vm533 = vcmp.ge.f32.partialorder %v517, 0.0
  %vm534 = vcmp.ge.f32.partialorder %v518, 0.0
  %vm535 = vcmp.ge.f32.partialorder %v519, 0.0
  %vm536 = vcmp.ge.f32.partialorder %v520, 0.0
  %vm537 = vcmp.ge.f32.partialorder %v521, 0.0
  %vm538 = vcmp.ge.f32.partialorder %v522, 0.0
  %vm539 = vcmp.ge.f32.partialorder %v523, 0.0
  %vm540 = vcmp.ge.f32.partialorder %v524, 0.0
  %vm541 = vcmp.ge.f32.partialorder %v525, 0.0
  %vm542 = vcmp.ge.f32.partialorder %v526, 0.0
  %vm543 = vcmp.ge.f32.partialorder %v527, 0.0
  %vm544 = vcmp.ge.f32.partialorder %v528, 0.0
  %v545 = vmul.f32 %v513, 0.2
  %v546 = vmul.f32 %v514, 0.2
  %v547 = vmul.f32 %v515, 0.2
  %v548 = vmul.f32 %v516, 0.2
  %v549 = vmul.f32 %v517, 0.2
  %v550 = vmul.f32 %v518, 0.2
  %v551 = vmul.f32 %v519, 0.2
  %v552 = vmul.f32 %v520, 0.2
  %v553 = vmul.f32 %v521, 0.2
  %v554 = vmul.f32 %v522, 0.2
  %v555 = vmul.f32 %v523, 0.2
  %v556 = vmul.f32 %v524, 0.2
  %v557 = vmul.f32 %v525, 0.2
  %v558 = vmul.f32 %v526, 0.2
  %v559 = vmul.f32 %v527, 0.2
  %v560 = vmul.f32 %v528, 0.2
  %v561 = vsel %vm529, %v513, %v545
  %v562 = vsel %vm530, %v514, %v546
  %v563 = vsel %vm531, %v515, %v547
  %v564 = vsel %vm532, %v516, %v548
  %v565 = vsel %vm533, %v517, %v549
  %v566 = vsel %vm534, %v518, %v550
  %v567 = vsel %vm535, %v519, %v551
  %v568 = vsel %vm536, %v520, %v552
  %v569 = vsel %vm537, %v521, %v553
  %v570 = vsel %vm538, %v522, %v554
  %v571 = vsel %vm539, %v523, %v555
  %v572 = vsel %vm540, %v524, %v556
  %v573 = vsel %vm541, %v525, %v557
  %v574 = vsel %vm542, %v526, %v558
  %v575 = vsel %vm543, %v527, %v559
  %v576 = vsel %vm544, %v528, %v560
  %v577 = vpack.c.bf16 %v562, %v561
  %v578 = vpack.c.bf16 %v564, %v563
  %v579 = vpack.c.bf16 %v566, %v565
  %v580 = vpack.c.bf16 %v568, %v567
  %v581 = vpack.c.bf16 %v570, %v569
  %v582 = vpack.c.bf16 %v572, %v571
  %v583 = vpack.c.bf16 %v574, %v573
  %v584 = vpack.c.bf16 %v576, %v575
  %v593 = vunpack.c.l.b16 %v577
  %v594 = vunpack.c.h.b16 %v577
  %v595 = vunpack.c.l.b16 %v578
  %v596 = vunpack.c.h.b16 %v578
  %v597 = vunpack.c.l.b16 %v579
  %v598 = vunpack.c.h.b16 %v579
  %v599 = vunpack.c.l.b16 %v580
  %v600 = vunpack.c.h.b16 %v580
  %v601 = vunpack.c.l.b16 %v581
  %v602 = vunpack.c.h.b16 %v581
  %v603 = vunpack.c.l.b16 %v582
  %v604 = vunpack.c.h.b16 %v582
  %v605 = vunpack.c.l.b16 %v583
  %v606 = vunpack.c.h.b16 %v583
  %v607 = vunpack.c.l.b16 %v584
  %v608 = vunpack.c.h.b16 %v584
  %v609 = vpack.c.b16 %v593, %v593
  %v610 = vpack.c.b16 %v594, %v594
  %v611 = vpack.c.b16 %v595, %v595
  %v612 = vpack.c.b16 %v596, %v596
  %v613 = vpack.c.b16 %v597, %v597
  %v614 = vpack.c.b16 %v598, %v598
  %v615 = vpack.c.b16 %v599, %v599
  %v616 = vpack.c.b16 %v600, %v600
  %v617 = vpack.c.b16 %v601, %v601
  %v618 = vpack.c.b16 %v602, %v602
  %v619 = vpack.c.b16 %v603, %v603
  %v620 = vpack.c.b16 %v604, %v604
  %v621 = vpack.c.b16 %v605, %v605
  %v622 = vpack.c.b16 %v606, %v606
  %v623 = vpack.c.b16 %v607, %v607
  %v624 = vpack.c.b16 %v608, %v608
  %641 = vst [vmem:[%s4] sm:$0xf] %v609
  %642 = vst [vmem:[%s4 + $0x4] sm:$0xf] %v610
  %643 = vst [vmem:[%s4 + $0x8] sm:$0xf] %v611
  %644 = vst [vmem:[%s4 + $0xc] sm:$0xf] %v612
  %645 = vst [vmem:[%s4 + $0x10] sm:$0xf] %v613
  %646 = vst [vmem:[%s4 + $0x14] sm:$0xf] %v614
  %647 = vst [vmem:[%s4 + $0x18] sm:$0xf] %v615
  %648 = vst [vmem:[%s4 + $0x1c] sm:$0xf] %v616
  %649 = vst [vmem:[%s4 + $0x20] sm:$0xf] %v617
  %650 = vst [vmem:[%s4 + $0x24] sm:$0xf] %v618
  %651 = vst [vmem:[%s4 + $0x28] sm:$0xf] %v619
  %652 = vst [vmem:[%s4 + $0x2c] sm:$0xf] %v620
  %653 = vst [vmem:[%s4 + $0x30] sm:$0xf] %v621
  %654 = vst [vmem:[%s4 + $0x34] sm:$0xf] %v622
  %655 = vst [vmem:[%s4 + $0x38] sm:$0xf] %v623
  %656 = vst [vmem:[%s4 + $0x3c] sm:$0xf] %v624
  // Predicated region
  $region18: #{discriminator_forward.6} parent=0 // pred_check
    _
  $region19: #{discriminator_forward.6} parent=0 // pred_check_branch
    %658 = sbr.rel (0) target = $region21
  $region20: #{discriminator_forward.6} parent=0 // pred_region
    _
  $region21: #{discriminator_forward.6} parent=0 // pred_fallthru
    _
  // Predicated region
  $region22: #{discriminator_forward.6} parent=0 // pred_check
    _
  $region23: #{discriminator_forward.6} parent=0 // pred_check_branch
    %660 = sbr.rel (0) target = $region25
  $region24: #{discriminator_forward.6} parent=0 // pred_region
    _
  $region25: #{discriminator_forward.6} parent=0 // pred_fallthru
    _

// kernel: discriminator_forward.7
$region0: #{discriminator_forward.7}
  #allocation0 [shape = 'u32[]', space=smem, size = 0x4, offset = 0x4, fixed_abs, tag = 'smem constant byte address 0x4 - core index']
  #allocation1 [shape = 'u32[144,128]{1,0:T(1,128)}', space=vmem, size = 0x12000, scoped, tag = 'internal scratch']
  #allocation2 [shape = 'f32[1]{0:T(128)S(6)}', space=smem, size = 0x200, scoped, tag = 'scoped memory for discriminator_forward.7']
  %s0 = inlined_call_operand.vmem [shape: bf16[32,512], index: 0, kind: input, shape index: {}]
  %s1 = inlined_call_operand.vmem [shape: bf16[512,128], index: 1, kind: input, shape index: {}]
  %s2 = inlined_call_operand.vmem [shape: f32[1,128], index: 2, kind: input, shape index: {}]
  %s3 = inlined_call_operand.vmem [shape: f32[1,128], index: 3, kind: input, shape index: {}]
  %s4 = inlined_call_operand.vmem [shape: f32[32,128], index: 4, kind: input, shape index: {}]
  %s5 = inlined_call_operand.vmem [shape: f32[8,32], index: 5, kind: input, shape index: {}]
  %s6 = inlined_call_operand.<no memory space> [shape: f32[1], index: 6, kind: input, shape index: {}]
  %s7 = inlined_call_operand.vmem [shape: f32[8,128], index: 7, kind: output, shape index: {}]
  %s8 = sld [smem:[#allocation0]]
  $region38: #{discriminator_forward.7} parent=0
    _
  %s10 = ssub.s32 1, %s8
  %s11 = scalar_select 0, %s10, %s8
  %12 = sst [smem:[#allocation2]] %s6
  // Predicated region
  $region2: #{discriminator_forward.7} parent=0 // pred_check
    _
  $region3: #{discriminator_forward.7} parent=0 // pred_check_branch
    %14 = sbr.rel (0) target = $region5
  $region4: #{discriminator_forward.7} parent=0 // pred_region
    _
  $region5: #{discriminator_forward.7} parent=0 // pred_fallthru
    _
  // Predicated region
  $region6: #{discriminator_forward.7} parent=0 // pred_check
    _
  $region7: #{discriminator_forward.7} parent=0 // pred_check_branch
    %16 = sbr.rel (0) target = $region9
  $region8: #{discriminator_forward.7} parent=0 // pred_region
    _
  $region9: #{discriminator_forward.7} parent=0 // pred_fallthru
    _
  // Predicated region
  $region10: #{discriminator_forward.7} parent=0 // pred_check
    _
  $region11: #{discriminator_forward.7} parent=0 // pred_check_branch
    %18 = sbr.rel (0) target = $region13
  $region12: #{discriminator_forward.7} parent=0 // pred_region
    _
  $region13: #{discriminator_forward.7} parent=0 // pred_fallthru
    _
  // Predicated region
  $region14: #{discriminator_forward.7} parent=0 // pred_check
    _
  $region15: #{discriminator_forward.7} parent=0 // pred_check_branch
    %20 = sbr.rel (0) target = $region17
  $region16: #{discriminator_forward.7} parent=0 // pred_region
    _
  $region17: #{discriminator_forward.7} parent=0 // pred_fallthru
    _
  // Predicated region
  $region18: #{discriminator_forward.7} parent=0 // pred_check
    _
  $region19: #{discriminator_forward.7} parent=0 // pred_check_branch
    %22 = sbr.rel (0) target = $region21
  $region20: #{discriminator_forward.7} parent=0 // pred_region
    _
  $region21: #{discriminator_forward.7} parent=0 // pred_fallthru
    _
  // Predicated region
  $region22: #{discriminator_forward.7} parent=0 // pred_check
    _
  $region23: #{discriminator_forward.7} parent=0 // pred_check_branch
    %24 = sbr.rel (0) target = $region25
  $region24: #{discriminator_forward.7} parent=0 // pred_region
    _
  $region25: #{discriminator_forward.7} parent=0 // pred_fallthru
    _
  // Predicated region
  $region26: #{discriminator_forward.7} parent=0 // pred_check
    _
  $region27: #{discriminator_forward.7} parent=0 // pred_check_branch
    %26 = sbr.rel (0) target = $region29
  $region28: #{discriminator_forward.7} parent=0 // pred_region
    _
  $region29: #{discriminator_forward.7} parent=0 // pred_fallthru
    _
  %v28 = vld [vmem:[%s0] sm:$0xff]
  %v29 = vld [vmem:[%s0 + $0x8] sm:$0xff]
  %v30 = vld [vmem:[%s0 + $0x10] sm:$0xff]
  %v31 = vld [vmem:[%s0 + $0x18] sm:$0xff]
  %v32 = vld [vmem:[%s0 + $0x20] sm:$0xff]
  %v33 = vld [vmem:[%s0 + $0x28] sm:$0xff]
  %v34 = vld [vmem:[%s0 + $0x30] sm:$0xff]
  %v35 = vld [vmem:[%s0 + $0x38] sm:$0xff]
  %v36 = vld [vmem:[%s1] sm:$0xf]
  %v37 = vld [vmem:[%s1 + $0x4] sm:$0xf]
  %v38 = vld [vmem:[%s1 + $0x8] sm:$0xf]
  %v39 = vld [vmem:[%s1 + $0xc] sm:$0xf]
  %v40 = vld [vmem:[%s1 + $0x10] sm:$0xf]
  %v41 = vld [vmem:[%s1 + $0x14] sm:$0xf]
  %v42 = vld [vmem:[%s1 + $0x18] sm:$0xf]
  %v43 = vld [vmem:[%s1 + $0x1c] sm:$0xf]
  %v44 = vld [vmem:[%s1 + $0x20] sm:$0xf]
  %v45 = vld [vmem:[%s1 + $0x24] sm:$0xf]
  %v46 = vld [vmem:[%s1 + $0x28] sm:$0xf]
  %v47 = vld [vmem:[%s1 + $0x2c] sm:$0xf]
  %v48 = vld [vmem:[%s1 + $0x30] sm:$0xf]
  %v49 = vld [vmem:[%s1 + $0x34] sm:$0xf]
  %v50 = vld [vmem:[%s1 + $0x38] sm:$0xf]
  %v51 = vld [vmem:[%s1 + $0x3c] sm:$0xf]
  %v52 = vld [vmem:[%s1 + $0x40] sm:$0xf]
  %v53 = vld [vmem:[%s1 + $0x44] sm:$0xf]
  %v54 = vld [vmem:[%s1 + $0x48] sm:$0xf]
  %v55 = vld [vmem:[%s1 + $0x4c] sm:$0xf]
  %v56 = vld [vmem:[%s1 + $0x50] sm:$0xf]
  %v57 = vld [vmem:[%s1 + $0x54] sm:$0xf]
  %v58 = vld [vmem:[%s1 + $0x58] sm:$0xf]
  %v59 = vld [vmem:[%s1 + $0x5c] sm:$0xf]
  %v60 = vld [vmem:[%s1 + $0x60] sm:$0xf]
  %v61 = vld [vmem:[%s1 + $0x64] sm:$0xf]
  %v62 = vld [vmem:[%s1 + $0x68] sm:$0xf]
  %v63 = vld [vmem:[%s1 + $0x6c] sm:$0xf]
  %v64 = vld [vmem:[%s1 + $0x70] sm:$0xf]
  %v65 = vld [vmem:[%s1 + $0x74] sm:$0xf]
  %v66 = vld [vmem:[%s1 + $0x78] sm:$0xf]
  %v67 = vld [vmem:[%s1 + $0x7c] sm:$0xf]
  %v68 = vld [vmem:[%s1 + $0x80] sm:$0xf]
  %v69 = vld [vmem:[%s1 + $0x84] sm:$0xf]
  %v70 = vld [vmem:[%s1 + $0x88] sm:$0xf]
  %v71 = vld [vmem:[%s1 + $0x8c] sm:$0xf]
  %v72 = vld [vmem:[%s1 + $0x90] sm:$0xf]
  %v73 = vld [vmem:[%s1 + $0x94] sm:$0xf]
  %v74 = vld [vmem:[%s1 + $0x98] sm:$0xf]
  %v75 = vld [vmem:[%s1 + $0x9c] sm:$0xf]
  %v76 = vld [vmem:[%s1 + $0xa0] sm:$0xf]
  %v77 = vld [vmem:[%s1 + $0xa4] sm:$0xf]
  %v78 = vld [vmem:[%s1 + $0xa8] sm:$0xf]
  %v79 = vld [vmem:[%s1 + $0xac] sm:$0xf]
  %v80 = vld [vmem:[%s1 + $0xb0] sm:$0xf]
  %v81 = vld [vmem:[%s1 + $0xb4] sm:$0xf]
  %v82 = vld [vmem:[%s1 + $0xb8] sm:$0xf]
  %v83 = vld [vmem:[%s1 + $0xbc] sm:$0xf]
  %v84 = vld [vmem:[%s1 + $0xc0] sm:$0xf]
  %v85 = vld [vmem:[%s1 + $0xc4] sm:$0xf]
  %v86 = vld [vmem:[%s1 + $0xc8] sm:$0xf]
  %v87 = vld [vmem:[%s1 + $0xcc] sm:$0xf]
  %v88 = vld [vmem:[%s1 + $0xd0] sm:$0xf]
  %v89 = vld [vmem:[%s1 + $0xd4] sm:$0xf]
  %v90 = vld [vmem:[%s1 + $0xd8] sm:$0xf]
  %v91 = vld [vmem:[%s1 + $0xdc] sm:$0xf]
  %v92 = vld [vmem:[%s1 + $0xe0] sm:$0xf]
  %v93 = vld [vmem:[%s1 + $0xe4] sm:$0xf]
  %v94 = vld [vmem:[%s1 + $0xe8] sm:$0xf]
  %v95 = vld [vmem:[%s1 + $0xec] sm:$0xf]
  %v96 = vld [vmem:[%s1 + $0xf0] sm:$0xf]
  %v97 = vld [vmem:[%s1 + $0xf4] sm:$0xf]
  %v98 = vld [vmem:[%s1 + $0xf8] sm:$0xf]
  %v99 = vld [vmem:[%s1 + $0xfc] sm:$0xf]
  %v108 = vunpack.c.l.b16 %v28
  %v109 = vunpack.c.h.b16 %v28
  %v110 = vunpack.c.l.b16 %v29
  %v111 = vunpack.c.h.b16 %v29
  %v112 = vunpack.c.l.b16 %v30
  %v113 = vunpack.c.h.b16 %v30
  %v114 = vunpack.c.l.b16 %v31
  %v115 = vunpack.c.h.b16 %v31
  %v116 = vunpack.c.l.b16 %v32
  %v117 = vunpack.c.h.b16 %v32
  %v118 = vunpack.c.l.b16 %v33
  %v119 = vunpack.c.h.b16 %v33
  %v120 = vunpack.c.l.b16 %v34
  %v121 = vunpack.c.h.b16 %v34
  %v122 = vunpack.c.l.b16 %v35
  %v123 = vunpack.c.h.b16 %v35
  %v124 = vpack.c.b16 %v112, %v108
  %v125 = vpack.c.b16 %v113, %v109
  %v126 = vpack.c.b16 %v114, %v110
  %v127 = vpack.c.b16 %v115, %v111
  %v128 = vpack.c.b16 %v120, %v116
  %v129 = vpack.c.b16 %v121, %v117
  %v130 = vpack.c.b16 %v122, %v118
  %v131 = vpack.c.b16 %v123, %v119
  %v204 = vunpack.c.l.b16 %v36
  %v205 = vunpack.c.l.b16 %v37
  %v206 = vunpack.c.l.b16 %v38
  %v207 = vunpack.c.l.b16 %v39
  %v208 = vunpack.c.l.b16 %v40
  %v209 = vunpack.c.l.b16 %v41
  %v210 = vunpack.c.l.b16 %v42
  %v211 = vunpack.c.l.b16 %v43
  %v212 = vunpack.c.l.b16 %v44
  %v213 = vunpack.c.l.b16 %v45
  %v214 = vunpack.c.l.b16 %v46
  %v215 = vunpack.c.l.b16 %v47
  %v216 = vunpack.c.l.b16 %v48
  %v217 = vunpack.c.l.b16 %v49
  %v218 = vunpack.c.l.b16 %v50
  %v219 = vunpack.c.l.b16 %v51
  %v220 = vunpack.c.l.b16 %v52
  %v221 = vunpack.c.l.b16 %v53
  %v222 = vunpack.c.l.b16 %v54
  %v223 = vunpack.c.l.b16 %v55
  %v224 = vunpack.c.l.b16 %v56
  %v225 = vunpack.c.l.b16 %v57
  %v226 = vunpack.c.l.b16 %v58
  %v227 = vunpack.c.l.b16 %v59
  %v228 = vunpack.c.l.b16 %v60
  %v229 = vunpack.c.l.b16 %v61
  %v230 = vunpack.c.l.b16 %v62
  %v231 = vunpack.c.l.b16 %v63
  %v232 = vunpack.c.l.b16 %v64
  %v233 = vunpack.c.l.b16 %v65
  %v234 = vunpack.c.l.b16 %v66
  %v235 = vunpack.c.l.b16 %v67
  %v236 = vunpack.c.l.b16 %v68
  %v237 = vunpack.c.l.b16 %v69
  %v238 = vunpack.c.l.b16 %v70
  %v239 = vunpack.c.l.b16 %v71
  %v240 = vunpack.c.l.b16 %v72
  %v241 = vunpack.c.l.b16 %v73
  %v242 = vunpack.c.l.b16 %v74
  %v243 = vunpack.c.l.b16 %v75
  %v244 = vunpack.c.l.b16 %v76
  %v245 = vunpack.c.l.b16 %v77
  %v246 = vunpack.c.l.b16 %v78
  %v247 = vunpack.c.l.b16 %v79
  %v248 = vunpack.c.l.b16 %v80
  %v249 = vunpack.c.l.b16 %v81
  %v250 = vunpack.c.l.b16 %v82
  %v251 = vunpack.c.l.b16 %v83
  %v252 = vunpack.c.l.b16 %v84
  %v253 = vunpack.c.l.b16 %v85
  %v254 = vunpack.c.l.b16 %v86
  %v255 = vunpack.c.l.b16 %v87
  %v256 = vunpack.c.l.b16 %v88
  %v257 = vunpack.c.l.b16 %v89
  %v258 = vunpack.c.l.b16 %v90
  %v259 = vunpack.c.l.b16 %v91
  %v260 = vunpack.c.l.b16 %v92
  %v261 = vunpack.c.l.b16 %v93
  %v262 = vunpack.c.l.b16 %v94
  %v263 = vunpack.c.l.b16 %v95
  %v264 = vunpack.c.l.b16 %v96
  %v265 = vunpack.c.l.b16 %v97
  %v266 = vunpack.c.l.b16 %v98
  %v267 = vunpack.c.l.b16 %v99
  %v268 = vpack.c.b16 %v205, %v204
  %v269 = vpack.c.b16 %v207, %v206
  %v270 = vpack.c.b16 %v209, %v208
  %v271 = vpack.c.b16 %v211, %v210
  %v272 = vpack.c.b16 %v213, %v212
  %v273 = vpack.c.b16 %v215, %v214
  %v274 = vpack.c.b16 %v217, %v216
  %v275 = vpack.c.b16 %v219, %v218
  %v276 = vpack.c.b16 %v221, %v220
  %v277 = vpack.c.b16 %v223, %v222
  %v278 = vpack.c.b16 %v225, %v224
  %v279 = vpack.c.b16 %v227, %v226
  %v280 = vpack.c.b16 %v229, %v228
  %v281 = vpack.c.b16 %v231, %v230
  %v282 = vpack.c.b16 %v233, %v232
  %v283 = vpack.c.b16 %v235, %v234
  %v284 = vpack.c.b16 %v237, %v236
  %v285 = vpack.c.b16 %v239, %v238
  %v286 = vpack.c.b16 %v241, %v240
  %v287 = vpack.c.b16 %v243, %v242
  %v288 = vpack.c.b16 %v245, %v244
  %v289 = vpack.c.b16 %v247, %v246
  %v290 = vpack.c.b16 %v249, %v248
  %v291 = vpack.c.b16 %v251, %v250
  %v292 = vpack.c.b16 %v253, %v252
  %v293 = vpack.c.b16 %v255, %v254
  %v294 = vpack.c.b16 %v257, %v256
  %v295 = vpack.c.b16 %v259, %v258
  %v296 = vpack.c.b16 %v261, %v260
  %v297 = vpack.c.b16 %v263, %v262
  %v298 = vpack.c.b16 %v265, %v264
  %v299 = vpack.c.b16 %v267, %v266
  %332 = vmatprep.subr.bf16.mxu0 0
  %333 = vmatpush1.bf16.msra.mxu0 %v268
  %334 = vmatprep.subr.bf16.mxu0 0
  %335 = vmatpush1.bf16.msra.mxu0 %v269
  %336 = vmatprep.subr.bf16.mxu0 0
  %337 = vmatpush1.bf16.msra.mxu0 %v270
  %338 = vmatprep.subr.bf16.mxu0 0
  %339 = vmatpush1.bf16.msra.mxu0 %v271
  %340 = vmatprep.subr.bf16.mxu0 0
  %341 = vmatpush1.bf16.msra.mxu0 %v272
  %342 = vmatprep.subr.bf16.mxu0 0
  %343 = vmatpush1.bf16.msra.mxu0 %v273
  %344 = vmatprep.subr.bf16.mxu0 0
  %345 = vmatpush1.bf16.msra.mxu0 %v274
  %346 = vmatprep.subr.bf16.mxu0 0
  %347 = vmatpush1.bf16.msra.mxu0 %v275
  %348 = vmatprep.subr.bf16.mxu0 0
  %349 = vmatpush1.bf16.msra.mxu0 %v276
  %350 = vmatprep.subr.bf16.mxu0 0
  %351 = vmatpush1.bf16.msra.mxu0 %v277
  %352 = vmatprep.subr.bf16.mxu0 0
  %353 = vmatpush1.bf16.msra.mxu0 %v278
  %354 = vmatprep.subr.bf16.mxu0 0
  %355 = vmatpush1.bf16.msra.mxu0 %v279
  %356 = vmatprep.subr.bf16.mxu0 0
  %357 = vmatpush1.bf16.msra.mxu0 %v280
  %358 = vmatprep.subr.bf16.mxu0 0
  %359 = vmatpush1.bf16.msra.mxu0 %v281
  %360 = vmatprep.subr.bf16.mxu0 0
  %361 = vmatpush1.bf16.msra.mxu0 %v282
  %362 = vmatprep.subr.bf16.mxu0 0
  %363 = vmatpush1.bf16.msra.mxu0 %v283
  %364 = vmatprep.mubr.bf16.mxu0 %v125
  %365 = vmatmul.mubr.bf16.gmra.mrb[0].mxu0 %v124
  %v366 = vpop.f32.mrb[0].mxu0
  %v367 = vadd.f32 0.0, %v366
  %v368 = vpop.f32.mrb[0].mxu0
  %v369 = vpop.f32.mrb[0].mxu0
  %v370 = vadd.f32 0.0, %v369
  %v371 = vpop.f32.mrb[0].mxu0
  %372 = vmatprep.mubr.bf16.mxu0 %v129
  %373 = vmatmul.mubr.bf16.gmra.mrb[0].mxu0 %v128
  %v374 = vpop.f32.mrb[0].mxu0
  %v375 = vadd.f32 0.0, %v374
  %v376 = vpop.f32.mrb[0].mxu0
  %v377 = vpop.f32.mrb[0].mxu0
  %v378 = vadd.f32 0.0, %v377
  %v379 = vpop.f32.mrb[0].mxu0
  %380 = vdwg.mxu0
  %381 = vmatprep.subr.bf16.mxu0 0
  %382 = vmatpush1.bf16.msra.mxu0 %v284
  %383 = vmatprep.subr.bf16.mxu0 0
  %384 = vmatpush1.bf16.msra.mxu0 %v285
  %385 = vmatprep.subr.bf16.mxu0 0
  %386 = vmatpush1.bf16.msra.mxu0 %v286
  %387 = vmatprep.subr.bf16.mxu0 0
  %388 = vmatpush1.bf16.msra.mxu0 %v287
  %389 = vmatprep.subr.bf16.mxu0 0
  %390 = vmatpush1.bf16.msra.mxu0 %v288
  %391 = vmatprep.subr.bf16.mxu0 0
  %392 = vmatpush1.bf16.msra.mxu0 %v289
  %393 = vmatprep.subr.bf16.mxu0 0
  %394 = vmatpush1.bf16.msra.mxu0 %v290
  %395 = vmatprep.subr.bf16.mxu0 0
  %396 = vmatpush1.bf16.msra.mxu0 %v291
  %397 = vmatprep.subr.bf16.mxu0 0
  %398 = vmatpush1.bf16.msra.mxu0 %v292
  %399 = vmatprep.subr.bf16.mxu0 0
  %400 = vmatpush1.bf16.msra.mxu0 %v293
  %401 = vmatprep.subr.bf16.mxu0 0
  %402 = vmatpush1.bf16.msra.mxu0 %v294
  %403 = vmatprep.subr.bf16.mxu0 0
  %404 = vmatpush1.bf16.msra.mxu0 %v295
  %405 = vmatprep.subr.bf16.mxu0 0
  %406 = vmatpush1.bf16.msra.mxu0 %v296
  %407 = vmatprep.subr.bf16.mxu0 0
  %408 = vmatpush1.bf16.msra.mxu0 %v297
  %409 = vmatprep.subr.bf16.mxu0 0
  %410 = vmatpush1.bf16.msra.mxu0 %v298
  %411 = vmatprep.subr.bf16.mxu0 0
  %412 = vmatpush1.bf16.msra.mxu0 %v299
  %413 = vmatprep.mubr.bf16.mxu0 %v127
  %414 = vmatmul.mubr.bf16.gmra.mrb[0].mxu0 %v126
  %v415 = vpop.f32.mrb[0].mxu0
  %v416 = vadd.f32 %v367, %v415
  %v417 = vpop.f32.mrb[0].mxu0
  %v418 = vpop.f32.mrb[0].mxu0
  %v419 = vadd.f32 %v370, %v418
  %v420 = vpop.f32.mrb[0].mxu0
  %421 = vmatprep.mubr.bf16.mxu0 %v131
  %422 = vmatmul.mubr.bf16.gmra.mrb[0].mxu0 %v130
  %v423 = vpop.f32.mrb[0].mxu0
  %v424 = vadd.f32 %v375, %v423
  %v425 = vpop.f32.mrb[0].mxu0
  %v426 = vpop.f32.mrb[0].mxu0
  %v427 = vadd.f32 %v378, %v426
  %v428 = vpop.f32.mrb[0].mxu0
  %429 = vdwg.mxu0
  %v430 = vlaneseq
  %v431 = vshrl.u32 %v430, 7
  %v432 = vadd.s32 %v431, 8
  %v433 = vadd.s32 %v431, 16
  %v434 = vadd.s32 %v431, 24
  %vm435 = vcmp.lt.s32.totalorder %v431, 32
  %vm436 = vcmp.lt.s32.totalorder %v432, 32
  %vm437 = vcmp.lt.s32.totalorder %v433, 32
  %vm438 = vcmp.lt.s32.totalorder %v434, 32
  %v439 = vsel %vm435, %v416, 0.0
  %v440 = vsel %vm436, %v419, 0.0
  %v441 = vsel %vm437, %v424, 0.0
  %v442 = vsel %vm438, %v427, 0.0
  %v443 = vadd.f32 %v439, %v440
  %v444 = vadd.f32 %v443, %v441
  %v445 = vadd.f32 %v444, %v442
  %v446 = vrot.slane %v445, 4
  %v447 = vadd.f32 %v445, %v446
  %v448 = vrot.slane %v447, 2
  %v449 = vadd.f32 %v447, %v448
  %v450 = vrot.slane %v449, 1
  %v451 = vadd.f32 %v449, %v450
  %v452 = vmul.f32 %v451, 0.03125
  %v453 = vsub.f32 %v416, %v452
  %v454 = vsub.f32 %v419, %v452
  %v455 = vsub.f32 %v424, %v452
  %v456 = vsub.f32 %v427, %v452
  %v457 = vsel %vm435, %v453, 0.0
  %v458 = vsel %vm436, %v454, 0.0
  %v459 = vsel %vm437, %v455, 0.0
  %v460 = vsel %vm438, %v456, 0.0
  %v461 = vmul.f32 %v457, %v457
  %v462 = vmul.f32 %v458, %v458
  %v463 = vmul.f32 %v459, %v459
  %v464 = vmul.f32 %v460, %v460
  %v465 = vadd.f32 %v461, %v462
  %v466 = vadd.f32 %v465, %v463
  %v467 = vadd.f32 %v466, %v464
  %v468 = vrot.slane %v467, 4
  %v469 = vadd.f32 %v467, %v468
  %v470 = vrot.slane %v469, 2
  %v471 = vadd.f32 %v469, %v470
  %v472 = vrot.slane %v471, 1
  %v473 = vadd.f32 %v471, %v472
  %v474 = vmul.f32 %v473, 0.03125
  %v475 = vld [vmem:[%s2] sm:$0x1]
  %v476 = vadd.f32 %v474, 1e-05
  %v477 = vrsqrt.pop %v476
  %v478 = vmul.f32 %v475, %v477
  %v480 = vlaneseq
  %v481 = vshrl.u32 %v480, 7
  %v482 = vsub.s32 0, %v481
  %v483 = vrot.slane %v478, %v482
  %v485 = vmul.f32 %v453, %v483
  %v486 = vmul.f32 %v454, %v483
  %v487 = vmul.f32 %v455, %v483
  %v488 = vmul.f32 %v456, %v483
  %v489 = vld [vmem:[%s3] sm:$0x1]
  %v491 = vlaneseq
  %v492 = vshrl.u32 %v491, 7
  %v493 = vsub.s32 0, %v492
  %v494 = vrot.slane %v489, %v493
  %v496 = vadd.f32 %v485, %v494
  %v497 = vadd.f32 %v486, %v494
  %v498 = vadd.f32 %v487, %v494
  %v499 = vadd.f32 %v488, %v494
  %vm500 = vcmp.ge.f32.partialorder %v496, 0.0
  %vm501 = vcmp.ge.f32.partialorder %v497, 0.0
  %vm502 = vcmp.ge.f32.partialorder %v498, 0.0
  %vm503 = vcmp.ge.f32.partialorder %v499, 0.0
  %v504 = vmul.f32 %v496, 0.2
  %v505 = vmul.f32 %v497, 0.2
  %v506 = vmul.f32 %v498, 0.2
  %v507 = vmul.f32 %v499, 0.2
  %v508 = vsel %vm500, %v496, %v504
  %v509 = vsel %vm501, %v497, %v505
  %v510 = vsel %vm502, %v498, %v506
  %v511 = vsel %vm503, %v499, %v507
  %v512 = vld [vmem:[%s4] sm:$0xff]
  %v513 = vld [vmem:[%s4 + $0x8] sm:$0xff]
  %v514 = vld [vmem:[%s4 + $0x10] sm:$0xff]
  %v515 = vld [vmem:[%s4 + $0x18] sm:$0xff]
  %v516 = vmul.f32 %v508, %v512
  %v517 = vmul.f32 %v509, %v513
  %v518 = vmul.f32 %v510, %v514
  %v519 = vmul.f32 %v511, %v515
  %v520 = vld [vmem:[%s5] sm:$0xff]
  %vm521 = vcmask 261120
  %v523 = vsel %vm521, %v520, 0
  %525 = vmatprep.subr.mxu0 0.0
  %526 = vmatpush1.msra.mxu0 %v516
  %527 = vmatprep.subr.mxu0 0.0
  %528 = vmatpush1.msra.mxu0 %v517
  %529 = vmatprep.subr.mxu0 0.0
  %530 = vmatpush1.msra.mxu0 %v518
  %531 = vmatprep.subr.mxu0 0.0
  %532 = vmatpush1.msra.mxu0 %v519
  %533 = vmatprep.subr.mxu0 0.0
  %534 = vmatpush1.msra.mxu0 0.0
  %535 = vmatprep.subr.mxu0 0.0
  %536 = vmatpush1.msra.mxu0 0.0
  %537 = vmatprep.subr.mxu0 0.0
  %538 = vmatpush1.msra.mxu0 0.0
  %539 = vmatprep.subr.mxu0 0.0
  %540 = vmatpush1.msra.mxu0 0.0
  %541 = vmatprep.subr.mxu0 0.0
  %542 = vmatpush1.msra.mxu0 0.0
  %543 = vmatprep.subr.mxu0 0.0
  %544 = vmatpush1.msra.mxu0 0.0
  %545 = vmatprep.subr.mxu0 0.0
  %546 = vmatpush1.msra.mxu0 0.0
  %547 = vmatprep.subr.mxu0 0.0
  %548 = vmatpush1.msra.mxu0 0.0
  %549 = vmatprep.subr.mxu0 0.0
  %550 = vmatpush1.msra.mxu0 0.0
  %551 = vmatprep.subr.mxu0 0.0
  %552 = vmatpush1.msra.mxu0 0.0
  %553 = vmatprep.subr.mxu0 0.0
  %554 = vmatpush1.msra.mxu0 0.0
  %555 = vmatprep.subr.mxu0 0.0
  %556 = vmatpush1.msra.mxu0 0.0
  %557 = vmatprep.subr.mxu0 0.0
  %558 = vmatpush1.msra.mxu0 0.0
  %559 = vmatprep.subr.mxu0 0.0
  %560 = vmatpush1.msra.mxu0 0.0
  %561 = vmatprep.subr.mxu0 0.0
  %562 = vmatpush1.msra.mxu0 0.0
  %563 = vmatprep.subr.mxu0 0.0
  %564 = vmatpush1.msra.mxu0 0.0
  %565 = vmatprep.subr.mxu0 0.0
  %566 = vmatpush1.msra.mxu0 0.0
  %567 = vmatprep.subr.mxu0 0.0
  %568 = vmatpush1.msra.mxu0 0.0
  %569 = vmatprep.subr.mxu0 0.0
  %570 = vmatpush1.msra.mxu0 0.0
  %571 = vmatprep.subr.mxu0 0.0
  %572 = vmatpush1.msra.mxu0 0.0
  %573 = vmatprep.subr.mxu0 0.0
  %574 = vmatpush1.msra.mxu0 0.0
  %575 = vmatprep.subr.mxu0 0.0
  %576 = vmatpush1.msra.mxu0 0.0
  %577 = vmatprep.subr.mxu0 0.0
  %578 = vmatpush1.msra.mxu0 0.0
  %579 = vmatprep.subr.mxu0 0.0
  %580 = vmatpush1.msra.mxu0 0.0
  %581 = vmatprep.subr.mxu0 0.0
  %582 = vmatpush1.msra.mxu0 0.0
  %583 = vmatprep.subr.mxu0 0.0
  %584 = vmatpush1.msra.mxu0 0.0
  %585 = vmatprep.subr.mxu0 0.0
  %586 = vmatpush1.msra.mxu0 0.0
  %587 = vmatprep.subr.mxu0 0.0
  %588 = vmatpush1.msra.mxu0 0.0
  %589 = vmatprep.mubr.f32.mxu0 0.0
  %590 = vmatmul.mubr.f32.gmra.mrb[0].mxu0 %v523
  %v591 = vpop.f32.mrb[0].mxu0
  %v592 = vadd.f32 0.0, %v591
  %v593 = vpop.f32.mrb[0].mxu0
  %594 = vdwg.mxu0
  %595 = vadd.xlane.f32.xlu0 %v592
  %v596 = vpop.xlane.xlu0 %595
  %s597 = sld [smem:[#allocation2]]
  %v598 = vstv %s597
  %v599 = vadd.f32 %v596, %v598
  %v600 = vlaneseq
  %v601 = vand.u32 %v600, 127
  %vm602 = vcmp.eq.s32.totalorder %v601, 0
  %v603 = vsel %vm602, %v599, 0.0
  %604 = vst [vmem:[%s7] sm:$0xff] %v603
  // Predicated region
  $region30: #{discriminator_forward.7} parent=0 // pred_check
    _
  $region31: #{discriminator_forward.7} parent=0 // pred_check_branch
    %606 = sbr.rel (0) target = $region33
  $region32: #{discriminator_forward.7} parent=0 // pred_region
    _
  $region33: #{discriminator_forward.7} parent=0 // pred_fallthru
    _
  // Predicated region
  $region34: #{discriminator_forward.7} parent=0 // pred_check
    _
  $region35: #{discriminator_forward.7} parent=0 // pred_check_branch
    %608 = sbr.rel (0) target = $region37
  $region36: #{discriminator_forward.7} parent=0 // pred_region
    _
  $region37: #{discriminator_forward.7} parent=0 // pred_fallthru
    _

</llo_original>
